<compile_context>
chip_gen: v5e
topology: v5e:2x2
jax: 0.10.0
libtpu: 0.0.40
codegen_flags: <defaults>
</compile_context>

<pallas_src>
import numpy as np
import jax
import jax.numpy as jnp
from jax.experimental import pallas as pl
from jax.experimental.pallas import tpu as pltpu


def _round_up(x, m):
    return ((x + m - 1) // m) * m


# ----------------------------------------------------------------------------
# Fully fused forward kernel (one grid step = one batch element)
# ----------------------------------------------------------------------------
def _make_fused_forward_kernel(num_layer, rethink_iter, L, HP, HL):
    """layer-0 conv + rethink x layer conv stack + multiscale sum + hidden2tag."""
    n_res = max(num_layer - 2, 0)
    f32 = jnp.float32
    bf16 = jnp.bfloat16

    def kernel(*refs):
        idx = 0
        x_ref = refs[idx]; idx += 1           # (L, DP)   bf16
        w0_ref = refs[idx]; idx += 1          # (DP, HP)  bf16
        b0_ref = refs[idx]; idx += 1          # (1, HP)   f32
        wf_refs, bf_refs, wb_refs, bb_refs = [], [], [], []
        for _ in range(num_layer - 1):
            wf_refs.append(refs[idx]); idx += 1   # (2*HP, HP) bf16
            bf_refs.append(refs[idx]); idx += 1   # (1, HP)    f32
            wb_refs.append(refs[idx]); idx += 1
            bb_refs.append(refs[idx]); idx += 1
        wr_refs, br_refs, wrb_refs, brb_refs = [], [], [], []
        for _ in range(n_res):
            wr_refs.append(refs[idx]); idx += 1   # (K, HP, HP) bf16
            br_refs.append(refs[idx]); idx += 1
            wrb_refs.append(refs[idx]); idx += 1
            brb_refs.append(refs[idx]); idx += 1
        h2t_w_ref = refs[idx]; idx += 1       # (HP, TP) bf16, 1/S folded in
        h2t_b_ref = refs[idx]; idx += 1       # (1, TP)  f32
        out_ref = refs[idx]; idx += 1         # (L, TP)  f32
        xpre_ref = refs[idx]; idx += 1        # scratch (HL+L+HR, HP) bf16, halo'd X_pre
        prev_ref = refs[idx]; idx += 1        # scratch (HL+L+HR, HP) bf16, halo'd prev
        msum_ref = refs[idx]; idx += 1        # scratch (L, HP) f32, multiscale sum

        def win(ref, delta):
            # shifted length-L view; halo rows are zero => zero-fill outside [0, L)
            return ref[pl.ds(HL + delta, L), :]

        # ---- layer 0: pointwise conv + tanh ----
        acc0 = jnp.dot(x_ref[...], w0_ref[...], preferred_element_type=f32)
        xpre_f32 = jnp.tanh(acc0 + b0_ref[...])
        xpre_bf = xpre_f32.astype(bf16)

        # zero the halo buffers once; halo rows are never rewritten afterwards.
        xpre_ref[...] = jnp.zeros_like(xpre_ref)
        prev_ref[...] = jnp.zeros_like(prev_ref)
        xpre_ref[pl.ds(HL, L), :] = xpre_bf
        msum_ref[...] = xpre_f32               # X_list starts with X_pre

        # TODO(synk): GlobalGate is not defined in the reference source; omitted.

        # ---- rethink x layer conv stack (unrolled: per-layer weights differ) ----
        for iteration in range(rethink_iter):
            for layer in range(num_layer - 1):
                s = layer + 1
                # at layer 0 the fwd/back convs restart from X_pre (each iteration)
                src = xpre_ref if layer == 0 else prev_ref

                # forward k=2 conv: fused 2*HP-deep contraction from halo'd views
                lhs_f = jnp.concatenate([win(src, 0), win(src, 1)], axis=1)
                xf = jnp.tanh(jnp.dot(lhs_f, wf_refs[layer][...],
                                      preferred_element_type=f32)
                              + bf_refs[layer][...])
                # backward k=2 conv (right shift by s)
                lhs_b = jnp.concatenate([win(src, -s), win(src, 1 - s)], axis=1)
                xb = jnp.tanh(jnp.dot(lhs_b, wb_refs[layer][...],
                                      preferred_element_type=f32)
                              + bb_refs[layer][...])
                x = xf + xb

                if layer > 0:
                    # residual k=layer+2 convs on X_pre: per-tap accumulation
                    kr = layer + 2
                    wr = wr_refs[layer - 1]
                    wrb = wrb_refs[layer - 1]
                    acc_r = jnp.dot(win(xpre_ref, 0), wr[0],
                                    preferred_element_type=f32)
                    acc_rb = jnp.dot(win(xpre_ref, -s), wrb[0],
                                     preferred_element_type=f32)
                    for k in range(1, kr):
                        acc_r = acc_r + jnp.dot(win(xpre_ref, k), wr[k],
                                                preferred_element_type=f32)
                        acc_rb = acc_rb + jnp.dot(win(xpre_ref, k - s), wrb[k],
                                                  preferred_element_type=f32)
                    # TODO(synk): LayerGate (undefined in reference) would gate the
                    # branches here; the post-gate combination (sum) is applied directly.
                    x = (x + jnp.tanh(acc_r + br_refs[layer - 1][...])
                           + jnp.tanh(acc_rb + brb_refs[layer - 1][...]))

                if iteration == rethink_iter - 1:
                    # TODO(synk): MultiscaleAttention undefined in reference; uniform
                    # mean over scales (1/num_layer folded into h2t_w), summed in-kernel.
                    msum_ref[...] = msum_ref[...] + x

                prev_ref[pl.ds(HL, L), :] = x.astype(bf16)

        # ---- multiscale mean + hidden2tag (scale folded into weight) ----
        out_ref[...] = (jnp.dot(msum_ref[...].astype(bf16), h2t_w_ref[...],
                                preferred_element_type=f32)
                        + h2t_b_ref[...])

    return kernel


def fused_cnn_stack(x_in_p, params):
    """x_in_p: (B, L, DP) bf16 padded inputs -> (B, L, TP) f32 tag scores."""
    B, L, DP = x_in_p.shape
    HP = params["cnn0_w"].shape[1]
    TP = params["h2t_w"].shape[1]
    num_layer = params["num_layer"]
    rethink = params["rethink_iter"]

    halo = max(num_layer - 1, 1)
    HL = _round_up(halo, 8)     # left halo rounded up so the hot (L, HP) store is aligned
    HR = halo

    inputs = [x_in_p, params["cnn0_w"], params["cnn0_b"]]
    for l in range(num_layer - 1):
        inputs += [params["cnn_w"][l], params["cnn_b"][l],
                   params["cnn_back_w"][l], params["cnn_back_b"][l]]
    for l in range(num_layer - 2):
        inputs += [params["res_w"][l], params["res_b"][l],
                   params["res_back_w"][l], params["res_back_b"][l]]
    inputs += [params["h2t_w"], params["h2t_b"]]

    in_specs = [pl.BlockSpec((None, L, DP), lambda bi: (bi, 0, 0))]
    for a in inputs[1:]:
        if a.ndim == 2:
            in_specs.append(pl.BlockSpec(a.shape, lambda bi: (0, 0)))          # resident
        else:
            in_specs.append(pl.BlockSpec(a.shape, lambda bi: (0, 0, 0)))        # resident

    kernel = _make_fused_forward_kernel(num_layer, rethink, L, HP, HL)

    return pl.pallas_call(
        kernel,
        out_shape=jax.ShapeDtypeStruct((B, L, TP), jnp.float32),
        grid=(B,),
        in_specs=in_specs,
        out_specs=pl.BlockSpec((None, L, TP), lambda bi: (bi, 0, 0)),
        scratch_shapes=[
            pltpu.VMEM((HL + L + HR, HP), jnp.bfloat16),   # halo'd X_pre
            pltpu.VMEM((HL + L + HR, HP), jnp.bfloat16),   # halo'd prev
            pltpu.VMEM((L, HP), jnp.float32),              # multiscale running sum
        ],
        compiler_params=pltpu.CompilerParams(
            dimension_semantics=("parallel",),
            vmem_limit_bytes=32 * 1024 * 1024,
        ),
    )(*inputs)


# ----------------------------------------------------------------------------
# Sinusoid position table (exactly as the reference helper)
# ----------------------------------------------------------------------------
def get_sinusoid_encoding_table(n_position, d_hid, padding_idx=None):
    def cal_angle(position, hid_idx):
        return position / np.power(10000, 2 * (hid_idx // 2) / d_hid)

    def get_posi_angle_vec(position):
        return [cal_angle(position, hid_j) for hid_j in range(d_hid)]

    table = np.array([get_posi_angle_vec(p) for p in range(n_position)])
    table[:, 0::2] = np.sin(table[:, 0::2])
    table[:, 1::2] = np.cos(table[:, 1::2])
    if padding_idx is not None:
        table[padding_idx] = 0.0
    return jnp.asarray(table, dtype=jnp.float32)


# ----------------------------------------------------------------------------
# Parameter construction (synthetic; mirrors __init__ shapes, lane-padded)
# ----------------------------------------------------------------------------
def _pack_conv_weight_2d(w_kcc, cinp, coutp):
    """(K, Cin, Cout) -> (K*CinP, CoutP) bf16; rows k*CinP.. hold tap k."""
    K, cin, cout = w_kcc.shape
    w = jnp.zeros((K, cinp, coutp), jnp.float32).at[:, :cin, :cout].set(w_kcc)
    return w.reshape(K * cinp, coutp).astype(jnp.bfloat16)


def _pack_conv_weight_3d(w_kcc, cinp, coutp):
    """(K, Cin, Cout) -> (K, CinP, CoutP) bf16 (per-tap slabs for accumulation)."""
    K, cin, cout = w_kcc.shape
    w = jnp.zeros((K, cinp, coutp), jnp.float32).at[:, :cin, :cout].set(w_kcc)
    return w.astype(jnp.bfloat16)


def _pack_bias(b, coutp):
    cout = b.shape[-1]
    return jnp.zeros((1, coutp), jnp.float32).at[:, :cout].set(b.reshape(1, cout))


def init_params(key, *, char_vocab, gaz_vocab, word_emb_dim, gaz_emb_dim,
                posi_emb_dim, hidden_dim, num_layer, rethink_iter,
                label_alphabet_size, seq_len):
    keys = jax.random.split(key, 16)
    u = lambda k, shape, s=0.1: jax.random.uniform(k, shape, jnp.float32, -s, s)

    H = hidden_dim
    HP = _round_up(H, 128)                      # lane-dense hidden
    T = label_alphabet_size + 2
    TP = _round_up(T, 128)                      # lane-dense tag output (sliced later)
    D = word_emb_dim + posi_emb_dim             # use_biword=False, use_posi=True
    DP = _round_up(D, 128)                      # lane-dense layer-0 input

    params = {
        "hidden_dim": H,
        "num_layer": num_layer,
        "rethink_iter": rethink_iter,
        "tag_dim": T,
        "input_dim": D,
        "word_emb": u(keys[0], (char_vocab, word_emb_dim)),
        # TODO(synk): gaz embeddings would feed LayerGate (class undefined in reference).
        "gaz_emb": u(keys[1], (gaz_vocab, gaz_emb_dim)),
        "posi_emb": get_sinusoid_encoding_table(seq_len + 2, posi_emb_dim),
        # cnn_layer0: Conv1d(input_dim, hidden, k=1), input dim padded to 128 lanes
        "cnn0_w": (jnp.zeros((DP, HP), jnp.float32)
                   .at[:D, :H].set(u(keys[2], (D, H)))).astype(jnp.bfloat16),
        "cnn0_b": _pack_bias(u(keys[3], (H,)), HP),
        # cnn_layers / cnn_layers_back: Conv1d(hidden, hidden, k=2) (taps fused)
        "cnn_w": [_pack_conv_weight_2d(u(jax.random.fold_in(keys[4], i), (2, H, H)), HP, HP)
                  for i in range(num_layer - 1)],
        "cnn_b": [_pack_bias(u(jax.random.fold_in(keys[5], i), (H,)), HP)
                  for i in range(num_layer - 1)],
        "cnn_back_w": [_pack_conv_weight_2d(u(jax.random.fold_in(keys[6], i), (2, H, H)), HP, HP)
                       for i in range(num_layer - 1)],
        "cnn_back_b": [_pack_bias(u(jax.random.fold_in(keys[7], i), (H,)), HP)
                       for i in range(num_layer - 1)],
        # res_cnn_layers[i-1]: Conv1d(hidden, hidden, k=i+2), i in [1, num_layer-2]
        "res_w": [_pack_conv_weight_3d(u(jax.random.fold_in(keys[8], i), (i + 2, H, H)), HP, HP)
                  for i in range(1, num_layer - 1)],
        "res_b": [_pack_bias(u(jax.random.fold_in(keys[9], i), (H,)), HP)
                  for i in range(1, num_layer - 1)],
        "res_back_w": [_pack_conv_weight_3d(u(jax.random.fold_in(keys[10], i), (i + 2, H, H)), HP, HP)
                       for i in range(1, num_layer - 1)],
        "res_back_b": [_pack_bias(u(jax.random.fold_in(keys[11], i), (H,)), HP)
                       for i in range(1, num_layer - 1)],
        # hidden2tag: Linear(hidden, T); 1/num_layer multiscale-mean scale folded in.
        "h2t_w": ((jnp.zeros((HP, TP), jnp.float32)
                   .at[:H, :T].set(u(keys[12], (H, T)))) * (1.0 / num_layer)
                  ).astype(jnp.bfloat16),
        "h2t_b": _pack_bias(u(keys[13], (T,)), TP),
    }
    return params


# ----------------------------------------------------------------------------
# Forward pass (CNNmodel.get_tags + forward), inference mode (dropout = identity)
# ----------------------------------------------------------------------------
def cnnmodel_forward(params, word_inputs, layer_gaz, mask):
    del layer_gaz  # TODO(synk): gaz lookups would feed LayerGate (undefined); dead branch removed.
    B, L = word_inputs.shape
    T = params["tag_dim"]
    DP = params["cnn0_w"].shape[0]

    # --- embeddings (glue) ---
    word_embs = jnp.take(params["word_emb"], word_inputs, axis=0)              # (B, L, Dw)
    posi_ids = jnp.broadcast_to(jnp.arange(1, L + 1, dtype=jnp.int32), (B, L))
    posi_embs = jnp.take(params["posi_emb"], posi_ids, axis=0)                 # (B, L, Dp)
    x_in = jnp.concatenate([word_embs, posi_embs], axis=-1)                    # (B, L, D)
    D = x_in.shape[-1]
    # pad feature dim to lane-dense width, cast to bf16 for HBM/MXU traffic
    x_in_p = jnp.zeros((B, L, DP), jnp.bfloat16).at[:, :, :D].set(
        x_in.astype(jnp.bfloat16))

    # --- whole conv stack + multiscale + hidden2tag in ONE fused kernel ---
    tags_padded = fused_cnn_stack(x_in_p, params)                              # (B, L, TP) f32
    tags = tags_padded[:, :, :T]

    # TODO(synk): CRF._viterbi_decode is not defined in the reference source; per-token argmax.
    tag_seq = jnp.argmax(tags, axis=-1).astype(jnp.int32) * mask.astype(jnp.int32)
    return tags, tag_seq


# ----------------------------------------------------------------------------
if __name__ == "__main__":
    B, L = 2, 8
    CHAR_VOCAB, GAZ_VOCAB = 50, 30
    WORD_EMB, GAZ_EMB, POSI_EMB = 32, 16, 16
    HIDDEN, NUM_LAYER, RETHINK = 32, 3, 2
    LABELS = 6

    key = jax.random.PRNGKey(0)
    k_param, k_word, k_gaz = jax.random.split(key, 3)

    params = init_params(
        k_param, char_vocab=CHAR_VOCAB, gaz_vocab=GAZ_VOCAB,
        word_emb_dim=WORD_EMB, gaz_emb_dim=GAZ_EMB, posi_emb_dim=POSI_EMB,
        hidden_dim=HIDDEN, num_layer=NUM_LAYER, rethink_iter=RETHINK,
        label_alphabet_size=LABELS, seq_len=L)

    word_inputs = jax.random.randint(k_word, (B, L), 1, CHAR_VOCAB, dtype=jnp.int32)
    layer_gaz = jax.random.randint(k_gaz, (B, L, NUM_LAYER - 1), 0, GAZ_VOCAB, dtype=jnp.int32)
    mask = jnp.ones((B, L), dtype=jnp.int32).at[1, L - 1].set(0)

    tags, tag_seq = cnnmodel_forward(params, word_inputs, layer_gaz, mask)
    jax.block_until_ready((tags, tag_seq))
    assert tags.shape == (B, L, LABELS + 2) and tag_seq.shape == (B, L)
    assert bool(jnp.all(jnp.isfinite(tags)))
    print("KERNEL_OK")
</pallas_src>

<mosaic_0001>
module attributes {stable_mosaic.version = 11 : i64} {
  func.func @kernel(%arg0: i32, %arg1: memref<1x8x128xbf16, #tpu.memory_space<vmem>>, %arg2: memref<128x128xbf16, #tpu.memory_space<vmem>>, %arg3: memref<1x128xf32, #tpu.memory_space<vmem>>, %arg4: memref<256x128xbf16, #tpu.memory_space<vmem>>, %arg5: memref<1x128xf32, #tpu.memory_space<vmem>>, %arg6: memref<256x128xbf16, #tpu.memory_space<vmem>>, %arg7: memref<1x128xf32, #tpu.memory_space<vmem>>, %arg8: memref<256x128xbf16, #tpu.memory_space<vmem>>, %arg9: memref<1x128xf32, #tpu.memory_space<vmem>>, %arg10: memref<256x128xbf16, #tpu.memory_space<vmem>>, %arg11: memref<1x128xf32, #tpu.memory_space<vmem>>, %arg12: memref<3x128x128xbf16, #tpu.memory_space<vmem>>, %arg13: memref<1x128xf32, #tpu.memory_space<vmem>>, %arg14: memref<3x128x128xbf16, #tpu.memory_space<vmem>>, %arg15: memref<1x128xf32, #tpu.memory_space<vmem>>, %arg16: memref<128x128xbf16, #tpu.memory_space<vmem>>, %arg17: memref<1x128xf32, #tpu.memory_space<vmem>>, %arg18: memref<1x8x128xf32, #tpu.memory_space<vmem>>, %arg19: memref<18x128xbf16, #tpu.memory_space<vmem>>, %arg20: memref<18x128xbf16, #tpu.memory_space<vmem>>, %arg21: memref<8x128xf32, #tpu.memory_space<vmem>>) attributes {dimension_semantics = [#tpu.dimension_semantics<parallel>], iteration_bounds = array<i64: 2>, scalar_prefetch = 0 : i64, scratch_operands = 3 : i64, tpu.core_type = #tpu.core_type<tc>, window_params = [{transform_indices = @transform_0, window_bounds = array<i64: 1, 8, 128>}, {pipeline_mode = #tpu.pipeline_mode<synchronous>, transform_indices = @transform_1, window_bounds = array<i64: 128, 128>}, {pipeline_mode = #tpu.pipeline_mode<synchronous>, transform_indices = @transform_2, window_bounds = array<i64: 1, 128>}, {pipeline_mode = #tpu.pipeline_mode<synchronous>, transform_indices = @transform_3, window_bounds = array<i64: 256, 128>}, {pipeline_mode = #tpu.pipeline_mode<synchronous>, transform_indices = @transform_4, window_bounds = array<i64: 1, 128>}, {pipeline_mode = #tpu.pipeline_mode<synchronous>, transform_indices = @transform_5, window_bounds = array<i64: 256, 128>}, {pipeline_mode = #tpu.pipeline_mode<synchronous>, transform_indices = @transform_6, window_bounds = array<i64: 1, 128>}, {pipeline_mode = #tpu.pipeline_mode<synchronous>, transform_indices = @transform_7, window_bounds = array<i64: 256, 128>}, {pipeline_mode = #tpu.pipeline_mode<synchronous>, transform_indices = @transform_8, window_bounds = array<i64: 1, 128>}, {pipeline_mode = #tpu.pipeline_mode<synchronous>, transform_indices = @transform_9, window_bounds = array<i64: 256, 128>}, {pipeline_mode = #tpu.pipeline_mode<synchronous>, transform_indices = @transform_10, window_bounds = array<i64: 1, 128>}, {pipeline_mode = #tpu.pipeline_mode<synchronous>, transform_indices = @transform_11, window_bounds = array<i64: 3, 128, 128>}, {pipeline_mode = #tpu.pipeline_mode<synchronous>, transform_indices = @transform_12, window_bounds = array<i64: 1, 128>}, {pipeline_mode = #tpu.pipeline_mode<synchronous>, transform_indices = @transform_13, window_bounds = array<i64: 3, 128, 128>}, {pipeline_mode = #tpu.pipeline_mode<synchronous>, transform_indices = @transform_14, window_bounds = array<i64: 1, 128>}, {pipeline_mode = #tpu.pipeline_mode<synchronous>, transform_indices = @transform_15, window_bounds = array<i64: 128, 128>}, {pipeline_mode = #tpu.pipeline_mode<synchronous>, transform_indices = @transform_16, window_bounds = array<i64: 1, 128>}, {transform_indices = @transform_17, window_bounds = array<i64: 1, 8, 128>}]} {
    %c0 = arith.constant 0 : index
    %c0_0 = arith.constant 0 : index
    %c0_1 = arith.constant 0 : index
    %0 = vector.load %arg1[%c0, %c0_0, %c0_1] : memref<1x8x128xbf16, #tpu.memory_space<vmem>>, vector<1x8x128xbf16>
    %1 = vector.shape_cast %0 : vector<1x8x128xbf16> to vector<8x128xbf16>
    %c0_2 = arith.constant 0 : index
    %c0_3 = arith.constant 0 : index
    %2 = vector.load %arg2[%c0_2, %c0_3] : memref<128x128xbf16, #tpu.memory_space<vmem>>, vector<128x128xbf16>
    %cst = arith.constant dense<0.000000e+00> : vector<8x128xf32>
    %3 = tpu.matmul %1, %2, %cst {dimension_numbers = #tpu.dot_dimension_numbers<[1], [0], [0], [1], [0, 0, 1, 1], [], []>} : vector<8x128xbf16>, vector<128x128xbf16>, vector<8x128xf32> -> vector<8x128xf32>
    %c0_4 = arith.constant 0 : index
    %c0_5 = arith.constant 0 : index
    %4 = vector.load %arg3[%c0_4, %c0_5] : memref<1x128xf32, #tpu.memory_space<vmem>>, vector<1x128xf32>
    %5 = vector.broadcast %4 : vector<1x128xf32> to vector<8x128xf32>
    %6 = arith.addf %3, %5 : vector<8x128xf32>
    %7 = math.tanh %6 : vector<8x128xf32>
    %8 = arith.truncf %7 : vector<8x128xf32> to vector<8x128xbf16>
    %cst_6 = arith.constant 0.000000e+00 : bf16
    %9 = vector.broadcast %cst_6 : bf16 to vector<18x128xbf16>
    %c0_7 = arith.constant 0 : index
    %c0_8 = arith.constant 0 : index
    %10 = vector.load %arg19[%c0_7, %c0_8] : memref<18x128xbf16, #tpu.memory_space<vmem>>, vector<18x128xbf16>
    tpu.vector_store %arg19[%c0_7, %c0_8], %9 {strides = array<i32>} : memref<18x128xbf16, #tpu.memory_space<vmem>>, vector<18x128xbf16>,
    %cst_9 = arith.constant 0.000000e+00 : bf16
    %11 = vector.broadcast %cst_9 : bf16 to vector<18x128xbf16>
    %c0_10 = arith.constant 0 : index
    %c0_11 = arith.constant 0 : index
    %12 = vector.load %arg20[%c0_10, %c0_11] : memref<18x128xbf16, #tpu.memory_space<vmem>>, vector<18x128xbf16>
    tpu.vector_store %arg20[%c0_10, %c0_11], %11 {strides = array<i32>} : memref<18x128xbf16, #tpu.memory_space<vmem>>, vector<18x128xbf16>,
    %c8 = arith.constant 8 : index
    %c0_12 = arith.constant 0 : index
    %13 = vector.load %arg19[%c8, %c0_12] : memref<18x128xbf16, #tpu.memory_space<vmem>>, vector<8x128xbf16>
    tpu.vector_store %arg19[%c8, %c0_12], %8 {strides = array<i32>} : memref<18x128xbf16, #tpu.memory_space<vmem>>, vector<8x128xbf16>,
    %c0_13 = arith.constant 0 : index
    %c0_14 = arith.constant 0 : index
    %14 = vector.load %arg21[%c0_13, %c0_14] : memref<8x128xf32, #tpu.memory_space<vmem>>, vector<8x128xf32>
    tpu.vector_store %arg21[%c0_13, %c0_14], %7 {strides = array<i32>} : memref<8x128xf32, #tpu.memory_space<vmem>>, vector<8x128xf32>,
    %c8_15 = arith.constant 8 : index
    %c0_16 = arith.constant 0 : index
    %15 = vector.load %arg19[%c8_15, %c0_16] : memref<18x128xbf16, #tpu.memory_space<vmem>>, vector<8x128xbf16>
    %c9 = arith.constant 9 : index
    %c0_17 = arith.constant 0 : index
    %16 = vector.load %arg19[%c9, %c0_17] : memref<18x128xbf16, #tpu.memory_space<vmem>>, vector<8x128xbf16>
    %17 = tpu.concatenate %15, %16 in 1 : vector<8x128xbf16>, vector<8x128xbf16> -> vector<8x256xbf16>
    %c0_18 = arith.constant 0 : index
    %c0_19 = arith.constant 0 : index
    %18 = vector.load %arg4[%c0_18, %c0_19] : memref<256x128xbf16, #tpu.memory_space<vmem>>, vector<256x128xbf16>
    %cst_20 = arith.constant dense<0.000000e+00> : vector<8x128xf32>
    %19 = tpu.matmul %17, %18, %cst_20 {dimension_numbers = #tpu.dot_dimension_numbers<[1], [0], [0], [1], [0, 0, 1, 1], [], []>} : vector<8x256xbf16>, vector<256x128xbf16>, vector<8x128xf32> -> vector<8x128xf32>
    %c0_21 = arith.constant 0 : index
    %c0_22 = arith.constant 0 : index
    %20 = vector.load %arg5[%c0_21, %c0_22] : memref<1x128xf32, #tpu.memory_space<vmem>>, vector<1x128xf32>
    %21 = vector.broadcast %20 : vector<1x128xf32> to vector<8x128xf32>
    %22 = arith.addf %19, %21 : vector<8x128xf32>
    %23 = math.tanh %22 : vector<8x128xf32>
    %c7 = arith.constant 7 : index
    %c0_23 = arith.constant 0 : index
    %24 = vector.load %arg19[%c7, %c0_23] : memref<18x128xbf16, #tpu.memory_space<vmem>>, vector<8x128xbf16>
    %c8_24 = arith.constant 8 : index
    %c0_25 = arith.constant 0 : index
    %25 = vector.load %arg19[%c8_24, %c0_25] : memref<18x128xbf16, #tpu.memory_space<vmem>>, vector<8x128xbf16>
    %26 = tpu.concatenate %24, %25 in 1 : vector<8x128xbf16>, vector<8x128xbf16> -> vector<8x256xbf16>
    %c0_26 = arith.constant 0 : index
    %c0_27 = arith.constant 0 : index
    %27 = vector.load %arg6[%c0_26, %c0_27] : memref<256x128xbf16, #tpu.memory_space<vmem>>, vector<256x128xbf16>
    %cst_28 = arith.constant dense<0.000000e+00> : vector<8x128xf32>
    %28 = tpu.matmul %26, %27, %cst_28 {dimension_numbers = #tpu.dot_dimension_numbers<[1], [0], [0], [1], [0, 0, 1, 1], [], []>} : vector<8x256xbf16>, vector<256x128xbf16>, vector<8x128xf32> -> vector<8x128xf32>
    %c0_29 = arith.constant 0 : index
    %c0_30 = arith.constant 0 : index
    %29 = vector.load %arg7[%c0_29, %c0_30] : memref<1x128xf32, #tpu.memory_space<vmem>>, vector<1x128xf32>
    %30 = vector.broadcast %29 : vector<1x128xf32> to vector<8x128xf32>
    %31 = arith.addf %28, %30 : vector<8x128xf32>
    %32 = math.tanh %31 : vector<8x128xf32>
    %33 = arith.addf %23, %32 : vector<8x128xf32>
    %34 = arith.truncf %33 : vector<8x128xf32> to vector<8x128xbf16>
    %c8_31 = arith.constant 8 : index
    %c0_32 = arith.constant 0 : index
    %35 = vector.load %arg20[%c8_31, %c0_32] : memref<18x128xbf16, #tpu.memory_space<vmem>>, vector<8x128xbf16>
    tpu.vector_store %arg20[%c8_31, %c0_32], %34 {strides = array<i32>} : memref<18x128xbf16, #tpu.memory_space<vmem>>, vector<8x128xbf16>,
    %c8_33 = arith.constant 8 : index
    %c0_34 = arith.constant 0 : index
    %36 = vector.load %arg20[%c8_33, %c0_34] : memref<18x128xbf16, #tpu.memory_space<vmem>>, vector<8x128xbf16>
    %c9_35 = arith.constant 9 : index
    %c0_36 = arith.constant 0 : index
    %37 = vector.load %arg20[%c9_35, %c0_36] : memref<18x128xbf16, #tpu.memory_space<vmem>>, vector<8x128xbf16>
    %38 = tpu.concatenate %36, %37 in 1 : vector<8x128xbf16>, vector<8x128xbf16> -> vector<8x256xbf16>
    %c0_37 = arith.constant 0 : index
    %c0_38 = arith.constant 0 : index
    %39 = vector.load %arg8[%c0_37, %c0_38] : memref<256x128xbf16, #tpu.memory_space<vmem>>, vector<256x128xbf16>
    %cst_39 = arith.constant dense<0.000000e+00> : vector<8x128xf32>
    %40 = tpu.matmul %38, %39, %cst_39 {dimension_numbers = #tpu.dot_dimension_numbers<[1], [0], [0], [1], [0, 0, 1, 1], [], []>} : vector<8x256xbf16>, vector<256x128xbf16>, vector<8x128xf32> -> vector<8x128xf32>
    %c0_40 = arith.constant 0 : index
    %c0_41 = arith.constant 0 : index
    %41 = vector.load %arg9[%c0_40, %c0_41] : memref<1x128xf32, #tpu.memory_space<vmem>>, vector<1x128xf32>
    %42 = vector.broadcast %41 : vector<1x128xf32> to vector<8x128xf32>
    %43 = arith.addf %40, %42 : vector<8x128xf32>
    %44 = math.tanh %43 : vector<8x128xf32>
    %c6 = arith.constant 6 : index
    %c0_42 = arith.constant 0 : index
    %45 = vector.load %arg20[%c6, %c0_42] : memref<18x128xbf16, #tpu.memory_space<vmem>>, vector<8x128xbf16>
    %c7_43 = arith.constant 7 : index
    %c0_44 = arith.constant 0 : index
    %46 = vector.load %arg20[%c7_43, %c0_44] : memref<18x128xbf16, #tpu.memory_space<vmem>>, vector<8x128xbf16>
    %47 = tpu.concatenate %45, %46 in 1 : vector<8x128xbf16>, vector<8x128xbf16> -> vector<8x256xbf16>
    %c0_45 = arith.constant 0 : index
    %c0_46 = arith.constant 0 : index
    %48 = vector.load %arg10[%c0_45, %c0_46] : memref<256x128xbf16, #tpu.memory_space<vmem>>, vector<256x128xbf16>
    %cst_47 = arith.constant dense<0.000000e+00> : vector<8x128xf32>
    %49 = tpu.matmul %47, %48, %cst_47 {dimension_numbers = #tpu.dot_dimension_numbers<[1], [0], [0], [1], [0, 0, 1, 1], [], []>} : vector<8x256xbf16>, vector<256x128xbf16>, vector<8x128xf32> -> vector<8x128xf32>
    %c0_48 = arith.constant 0 : index
    %c0_49 = arith.constant 0 : index
    %50 = vector.load %arg11[%c0_48, %c0_49] : memref<1x128xf32, #tpu.memory_space<vmem>>, vector<1x128xf32>
    %51 = vector.broadcast %50 : vector<1x128xf32> to vector<8x128xf32>
    %52 = arith.addf %49, %51 : vector<8x128xf32>
    %53 = math.tanh %52 : vector<8x128xf32>
    %54 = arith.addf %44, %53 : vector<8x128xf32>
    %c8_50 = arith.constant 8 : index
    %c0_51 = arith.constant 0 : index
    %55 = vector.load %arg19[%c8_50, %c0_51] : memref<18x128xbf16, #tpu.memory_space<vmem>>, vector<8x128xbf16>
    %c0_52 = arith.constant 0 : index
    %c0_53 = arith.constant 0 : index
    %c0_54 = arith.constant 0 : index
    %56 = vector.load %arg12[%c0_52, %c0_53, %c0_54] : memref<3x128x128xbf16, #tpu.memory_space<vmem>>, vector<1x128x128xbf16>
    %57 = vector.shape_cast %56 : vector<1x128x128xbf16> to vector<128x128xbf16>
    %cst_55 = arith.constant dense<0.000000e+00> : vector<8x128xf32>
    %58 = tpu.matmul %55, %57, %cst_55 {dimension_numbers = #tpu.dot_dimension_numbers<[1], [0], [0], [1], [0, 0, 1, 1], [], []>} : vector<8x128xbf16>, vector<128x128xbf16>, vector<8x128xf32> -> vector<8x128xf32>
    %c6_56 = arith.constant 6 : index
    %c0_57 = arith.constant 0 : index
    %59 = vector.load %arg19[%c6_56, %c0_57] : memref<18x128xbf16, #tpu.memory_space<vmem>>, vector<8x128xbf16>
    %c0_58 = arith.constant 0 : index
    %c0_59 = arith.constant 0 : index
    %c0_60 = arith.constant 0 : index
    %60 = vector.load %arg14[%c0_58, %c0_59, %c0_60] : memref<3x128x128xbf16, #tpu.memory_space<vmem>>, vector<1x128x128xbf16>
    %61 = vector.shape_cast %60 : vector<1x128x128xbf16> to vector<128x128xbf16>
    %cst_61 = arith.constant dense<0.000000e+00> : vector<8x128xf32>
    %62 = tpu.matmul %59, %61, %cst_61 {dimension_numbers = #tpu.dot_dimension_numbers<[1], [0], [0], [1], [0, 0, 1, 1], [], []>} : vector<8x128xbf16>, vector<128x128xbf16>, vector<8x128xf32> -> vector<8x128xf32>
    %c9_62 = arith.constant 9 : index
    %c0_63 = arith.constant 0 : index
    %63 = vector.load %arg19[%c9_62, %c0_63] : memref<18x128xbf16, #tpu.memory_space<vmem>>, vector<8x128xbf16>
    %c1 = arith.constant 1 : index
    %c0_64 = arith.constant 0 : index
    %c0_65 = arith.constant 0 : index
    %64 = vector.load %arg12[%c1, %c0_64, %c0_65] : memref<3x128x128xbf16, #tpu.memory_space<vmem>>, vector<1x128x128xbf16>
    %65 = vector.shape_cast %64 : vector<1x128x128xbf16> to vector<128x128xbf16>
    %cst_66 = arith.constant dense<0.000000e+00> : vector<8x128xf32>
    %66 = tpu.matmul %63, %65, %cst_66 {dimension_numbers = #tpu.dot_dimension_numbers<[1], [0], [0], [1], [0, 0, 1, 1], [], []>} : vector<8x128xbf16>, vector<128x128xbf16>, vector<8x128xf32> -> vector<8x128xf32>
    %67 = arith.addf %58, %66 : vector<8x128xf32>
    %c7_67 = arith.constant 7 : index
    %c0_68 = arith.constant 0 : index
    %68 = vector.load %arg19[%c7_67, %c0_68] : memref<18x128xbf16, #tpu.memory_space<vmem>>, vector<8x128xbf16>
    %c1_69 = arith.constant 1 : index
    %c0_70 = arith.constant 0 : index
    %c0_71 = arith.constant 0 : index
    %69 = vector.load %arg14[%c1_69, %c0_70, %c0_71] : memref<3x128x128xbf16, #tpu.memory_space<vmem>>, vector<1x128x128xbf16>
    %70 = vector.shape_cast %69 : vector<1x128x128xbf16> to vector<128x128xbf16>
    %cst_72 = arith.constant dense<0.000000e+00> : vector<8x128xf32>
    %71 = tpu.matmul %68, %70, %cst_72 {dimension_numbers = #tpu.dot_dimension_numbers<[1], [0], [0], [1], [0, 0, 1, 1], [], []>} : vector<8x128xbf16>, vector<128x128xbf16>, vector<8x128xf32> -> vector<8x128xf32>
    %72 = arith.addf %62, %71 : vector<8x128xf32>
    %c10 = arith.constant 10 : index
    %c0_73 = arith.constant 0 : index
    %73 = vector.load %arg19[%c10, %c0_73] : memref<18x128xbf16, #tpu.memory_space<vmem>>, vector<8x128xbf16>
    %c2 = arith.constant 2 : index
    %c0_74 = arith.constant 0 : index
    %c0_75 = arith.constant 0 : index
    %74 = vector.load %arg12[%c2, %c0_74, %c0_75] : memref<3x128x128xbf16, #tpu.memory_space<vmem>>, vector<1x128x128xbf16>
    %75 = vector.shape_cast %74 : vector<1x128x128xbf16> to vector<128x128xbf16>
    %cst_76 = arith.constant dense<0.000000e+00> : vector<8x128xf32>
    %76 = tpu.matmul %73, %75, %cst_76 {dimension_numbers = #tpu.dot_dimension_numbers<[1], [0], [0], [1], [0, 0, 1, 1], [], []>} : vector<8x128xbf16>, vector<128x128xbf16>, vector<8x128xf32> -> vector<8x128xf32>
    %77 = arith.addf %67, %76 : vector<8x128xf32>
    %c8_77 = arith.constant 8 : index
    %c0_78 = arith.constant 0 : index
    %78 = vector.load %arg19[%c8_77, %c0_78] : memref<18x128xbf16, #tpu.memory_space<vmem>>, vector<8x128xbf16>
    %c2_79 = arith.constant 2 : index
    %c0_80 = arith.constant 0 : index
    %c0_81 = arith.constant 0 : index
    %79 = vector.load %arg14[%c2_79, %c0_80, %c0_81] : memref<3x128x128xbf16, #tpu.memory_space<vmem>>, vector<1x128x128xbf16>
    %80 = vector.shape_cast %79 : vector<1x128x128xbf16> to vector<128x128xbf16>
    %cst_82 = arith.constant dense<0.000000e+00> : vector<8x128xf32>
    %81 = tpu.matmul %78, %80, %cst_82 {dimension_numbers = #tpu.dot_dimension_numbers<[1], [0], [0], [1], [0, 0, 1, 1], [], []>} : vector<8x128xbf16>, vector<128x128xbf16>, vector<8x128xf32> -> vector<8x128xf32>
    %82 = arith.addf %72, %81 : vector<8x128xf32>
    %c0_83 = arith.constant 0 : index
    %c0_84 = arith.constant 0 : index
    %83 = vector.load %arg13[%c0_83, %c0_84] : memref<1x128xf32, #tpu.memory_space<vmem>>, vector<1x128xf32>
    %84 = vector.broadcast %83 : vector<1x128xf32> to vector<8x128xf32>
    %85 = arith.addf %77, %84 : vector<8x128xf32>
    %86 = math.tanh %85 : vector<8x128xf32>
    %87 = arith.addf %54, %86 : vector<8x128xf32>
    %c0_85 = arith.constant 0 : index
    %c0_86 = arith.constant 0 : index
    %88 = vector.load %arg15[%c0_85, %c0_86] : memref<1x128xf32, #tpu.memory_space<vmem>>, vector<1x128xf32>
    %89 = vector.broadcast %88 : vector<1x128xf32> to vector<8x128xf32>
    %90 = arith.addf %82, %89 : vector<8x128xf32>
    %91 = math.tanh %90 : vector<8x128xf32>
    %92 = arith.addf %87, %91 : vector<8x128xf32>
    %93 = arith.truncf %92 : vector<8x128xf32> to vector<8x128xbf16>
    %c8_87 = arith.constant 8 : index
    %c0_88 = arith.constant 0 : index
    %94 = vector.load %arg20[%c8_87, %c0_88] : memref<18x128xbf16, #tpu.memory_space<vmem>>, vector<8x128xbf16>
    tpu.vector_store %arg20[%c8_87, %c0_88], %93 {strides = array<i32>} : memref<18x128xbf16, #tpu.memory_space<vmem>>, vector<8x128xbf16>,
    %c8_89 = arith.constant 8 : index
    %c0_90 = arith.constant 0 : index
    %95 = vector.load %arg19[%c8_89, %c0_90] : memref<18x128xbf16, #tpu.memory_space<vmem>>, vector<8x128xbf16>
    %c9_91 = arith.constant 9 : index
    %c0_92 = arith.constant 0 : index
    %96 = vector.load %arg19[%c9_91, %c0_92] : memref<18x128xbf16, #tpu.memory_space<vmem>>, vector<8x128xbf16>
    %97 = tpu.concatenate %95, %96 in 1 : vector<8x128xbf16>, vector<8x128xbf16> -> vector<8x256xbf16>
    %c0_93 = arith.constant 0 : index
    %c0_94 = arith.constant 0 : index
    %98 = vector.load %arg4[%c0_93, %c0_94] : memref<256x128xbf16, #tpu.memory_space<vmem>>, vector<256x128xbf16>
    %cst_95 = arith.constant dense<0.000000e+00> : vector<8x128xf32>
    %99 = tpu.matmul %97, %98, %cst_95 {dimension_numbers = #tpu.dot_dimension_numbers<[1], [0], [0], [1], [0, 0, 1, 1], [], []>} : vector<8x256xbf16>, vector<256x128xbf16>, vector<8x128xf32> -> vector<8x128xf32>
    %c0_96 = arith.constant 0 : index
    %c0_97 = arith.constant 0 : index
    %100 = vector.load %arg5[%c0_96, %c0_97] : memref<1x128xf32, #tpu.memory_space<vmem>>, vector<1x128xf32>
    %101 = vector.broadcast %100 : vector<1x128xf32> to vector<8x128xf32>
    %102 = arith.addf %99, %101 : vector<8x128xf32>
    %103 = math.tanh %102 : vector<8x128xf32>
    %c7_98 = arith.constant 7 : index
    %c0_99 = arith.constant 0 : index
    %104 = vector.load %arg19[%c7_98, %c0_99] : memref<18x128xbf16, #tpu.memory_space<vmem>>, vector<8x128xbf16>
    %c8_100 = arith.constant 8 : index
    %c0_101 = arith.constant 0 : index
    %105 = vector.load %arg19[%c8_100, %c0_101] : memref<18x128xbf16, #tpu.memory_space<vmem>>, vector<8x128xbf16>
    %106 = tpu.concatenate %104, %105 in 1 : vector<8x128xbf16>, vector<8x128xbf16> -> vector<8x256xbf16>
    %c0_102 = arith.constant 0 : index
    %c0_103 = arith.constant 0 : index
    %107 = vector.load %arg6[%c0_102, %c0_103] : memref<256x128xbf16, #tpu.memory_space<vmem>>, vector<256x128xbf16>
    %cst_104 = arith.constant dense<0.000000e+00> : vector<8x128xf32>
    %108 = tpu.matmul %106, %107, %cst_104 {dimension_numbers = #tpu.dot_dimension_numbers<[1], [0], [0], [1], [0, 0, 1, 1], [], []>} : vector<8x256xbf16>, vector<256x128xbf16>, vector<8x128xf32> -> vector<8x128xf32>
    %c0_105 = arith.constant 0 : index
    %c0_106 = arith.constant 0 : index
    %109 = vector.load %arg7[%c0_105, %c0_106] : memref<1x128xf32, #tpu.memory_space<vmem>>, vector<1x128xf32>
    %110 = vector.broadcast %109 : vector<1x128xf32> to vector<8x128xf32>
    %111 = arith.addf %108, %110 : vector<8x128xf32>
    %112 = math.tanh %111 : vector<8x128xf32>
    %113 = arith.addf %103, %112 : vector<8x128xf32>
    %c0_107 = arith.constant 0 : index
    %c0_108 = arith.constant 0 : index
    %114 = vector.load %arg21[%c0_107, %c0_108] : memref<8x128xf32, #tpu.memory_space<vmem>>, vector<8x128xf32>
    %115 = arith.addf %114, %113 : vector<8x128xf32>
    %c0_109 = arith.constant 0 : index
    %c0_110 = arith.constant 0 : index
    %116 = vector.load %arg21[%c0_109, %c0_110] : memref<8x128xf32, #tpu.memory_space<vmem>>, vector<8x128xf32>
    tpu.vector_store %arg21[%c0_109, %c0_110], %115 {strides = array<i32>} : memref<8x128xf32, #tpu.memory_space<vmem>>, vector<8x128xf32>,
    %117 = arith.truncf %113 : vector<8x128xf32> to vector<8x128xbf16>
    %c8_111 = arith.constant 8 : index
    %c0_112 = arith.constant 0 : index
    %118 = vector.load %arg20[%c8_111, %c0_112] : memref<18x128xbf16, #tpu.memory_space<vmem>>, vector<8x128xbf16>
    tpu.vector_store %arg20[%c8_111, %c0_112], %117 {strides = array<i32>} : memref<18x128xbf16, #tpu.memory_space<vmem>>, vector<8x128xbf16>,
    %c8_113 = arith.constant 8 : index
    %c0_114 = arith.constant 0 : index
    %119 = vector.load %arg20[%c8_113, %c0_114] : memref<18x128xbf16, #tpu.memory_space<vmem>>, vector<8x128xbf16>
    %c9_115 = arith.constant 9 : index
    %c0_116 = arith.constant 0 : index
    %120 = vector.load %arg20[%c9_115, %c0_116] : memref<18x128xbf16, #tpu.memory_space<vmem>>, vector<8x128xbf16>
    %121 = tpu.concatenate %119, %120 in 1 : vector<8x128xbf16>, vector<8x128xbf16> -> vector<8x256xbf16>
    %c0_117 = arith.constant 0 : index
    %c0_118 = arith.constant 0 : index
    %122 = vector.load %arg8[%c0_117, %c0_118] : memref<256x128xbf16, #tpu.memory_space<vmem>>, vector<256x128xbf16>
    %cst_119 = arith.constant dense<0.000000e+00> : vector<8x128xf32>
    %123 = tpu.matmul %121, %122, %cst_119 {dimension_numbers = #tpu.dot_dimension_numbers<[1], [0], [0], [1], [0, 0, 1, 1], [], []>} : vector<8x256xbf16>, vector<256x128xbf16>, vector<8x128xf32> -> vector<8x128xf32>
    %c0_120 = arith.constant 0 : index
    %c0_121 = arith.constant 0 : index
    %124 = vector.load %arg9[%c0_120, %c0_121] : memref<1x128xf32, #tpu.memory_space<vmem>>, vector<1x128xf32>
    %125 = vector.broadcast %124 : vector<1x128xf32> to vector<8x128xf32>
    %126 = arith.addf %123, %125 : vector<8x128xf32>
    %127 = math.tanh %126 : vector<8x128xf32>
    %c6_122 = arith.constant 6 : index
    %c0_123 = arith.constant 0 : index
    %128 = vector.load %arg20[%c6_122, %c0_123] : memref<18x128xbf16, #tpu.memory_space<vmem>>, vector<8x128xbf16>
    %c7_124 = arith.constant 7 : index
    %c0_125 = arith.constant 0 : index
    %129 = vector.load %arg20[%c7_124, %c0_125] : memref<18x128xbf16, #tpu.memory_space<vmem>>, vector<8x128xbf16>
    %130 = tpu.concatenate %128, %129 in 1 : vector<8x128xbf16>, vector<8x128xbf16> -> vector<8x256xbf16>
    %c0_126 = arith.constant 0 : index
    %c0_127 = arith.constant 0 : index
    %131 = vector.load %arg10[%c0_126, %c0_127] : memref<256x128xbf16, #tpu.memory_space<vmem>>, vector<256x128xbf16>
    %cst_128 = arith.constant dense<0.000000e+00> : vector<8x128xf32>
    %132 = tpu.matmul %130, %131, %cst_128 {dimension_numbers = #tpu.dot_dimension_numbers<[1], [0], [0], [1], [0, 0, 1, 1], [], []>} : vector<8x256xbf16>, vector<256x128xbf16>, vector<8x128xf32> -> vector<8x128xf32>
    %c0_129 = arith.constant 0 : index
    %c0_130 = arith.constant 0 : index
    %133 = vector.load %arg11[%c0_129, %c0_130] : memref<1x128xf32, #tpu.memory_space<vmem>>, vector<1x128xf32>
    %134 = vector.broadcast %133 : vector<1x128xf32> to vector<8x128xf32>
    %135 = arith.addf %132, %134 : vector<8x128xf32>
    %136 = math.tanh %135 : vector<8x128xf32>
    %137 = arith.addf %127, %136 : vector<8x128xf32>
    %c8_131 = arith.constant 8 : index
    %c0_132 = arith.constant 0 : index
    %138 = vector.load %arg19[%c8_131, %c0_132] : memref<18x128xbf16, #tpu.memory_space<vmem>>, vector<8x128xbf16>
    %c0_133 = arith.constant 0 : index
    %c0_134 = arith.constant 0 : index
    %c0_135 = arith.constant 0 : index
    %139 = vector.load %arg12[%c0_133, %c0_134, %c0_135] : memref<3x128x128xbf16, #tpu.memory_space<vmem>>, vector<1x128x128xbf16>
    %140 = vector.shape_cast %139 : vector<1x128x128xbf16> to vector<128x128xbf16>
    %cst_136 = arith.constant dense<0.000000e+00> : vector<8x128xf32>
    %141 = tpu.matmul %138, %140, %cst_136 {dimension_numbers = #tpu.dot_dimension_numbers<[1], [0], [0], [1], [0, 0, 1, 1], [], []>} : vector<8x128xbf16>, vector<128x128xbf16>, vector<8x128xf32> -> vector<8x128xf32>
    %c6_137 = arith.constant 6 : index
    %c0_138 = arith.constant 0 : index
    %142 = vector.load %arg19[%c6_137, %c0_138] : memref<18x128xbf16, #tpu.memory_space<vmem>>, vector<8x128xbf16>
    %c0_139 = arith.constant 0 : index
    %c0_140 = arith.constant 0 : index
    %c0_141 = arith.constant 0 : index
    %143 = vector.load %arg14[%c0_139, %c0_140, %c0_141] : memref<3x128x128xbf16, #tpu.memory_space<vmem>>, vector<1x128x128xbf16>
    %144 = vector.shape_cast %143 : vector<1x128x128xbf16> to vector<128x128xbf16>
    %cst_142 = arith.constant dense<0.000000e+00> : vector<8x128xf32>
    %145 = tpu.matmul %142, %144, %cst_142 {dimension_numbers = #tpu.dot_dimension_numbers<[1], [0], [0], [1], [0, 0, 1, 1], [], []>} : vector<8x128xbf16>, vector<128x128xbf16>, vector<8x128xf32> -> vector<8x128xf32>
    %c9_143 = arith.constant 9 : index
    %c0_144 = arith.constant 0 : index
    %146 = vector.load %arg19[%c9_143, %c0_144] : memref<18x128xbf16, #tpu.memory_space<vmem>>, vector<8x128xbf16>
    %c1_145 = arith.constant 1 : index
    %c0_146 = arith.constant 0 : index
    %c0_147 = arith.constant 0 : index
    %147 = vector.load %arg12[%c1_145, %c0_146, %c0_147] : memref<3x128x128xbf16, #tpu.memory_space<vmem>>, vector<1x128x128xbf16>
    %148 = vector.shape_cast %147 : vector<1x128x128xbf16> to vector<128x128xbf16>
    %cst_148 = arith.constant dense<0.000000e+00> : vector<8x128xf32>
    %149 = tpu.matmul %146, %148, %cst_148 {dimension_numbers = #tpu.dot_dimension_numbers<[1], [0], [0], [1], [0, 0, 1, 1], [], []>} : vector<8x128xbf16>, vector<128x128xbf16>, vector<8x128xf32> -> vector<8x128xf32>
    %150 = arith.addf %141, %149 : vector<8x128xf32>
    %c7_149 = arith.constant 7 : index
    %c0_150 = arith.constant 0 : index
    %151 = vector.load %arg19[%c7_149, %c0_150] : memref<18x128xbf16, #tpu.memory_space<vmem>>, vector<8x128xbf16>
    %c1_151 = arith.constant 1 : index
    %c0_152 = arith.constant 0 : index
    %c0_153 = arith.constant 0 : index
    %152 = vector.load %arg14[%c1_151, %c0_152, %c0_153] : memref<3x128x128xbf16, #tpu.memory_space<vmem>>, vector<1x128x128xbf16>
    %153 = vector.shape_cast %152 : vector<1x128x128xbf16> to vector<128x128xbf16>
    %cst_154 = arith.constant dense<0.000000e+00> : vector<8x128xf32>
    %154 = tpu.matmul %151, %153, %cst_154 {dimension_numbers = #tpu.dot_dimension_numbers<[1], [0], [0], [1], [0, 0, 1, 1], [], []>} : vector<8x128xbf16>, vector<128x128xbf16>, vector<8x128xf32> -> vector<8x128xf32>
    %155 = arith.addf %145, %154 : vector<8x128xf32>
    %c10_155 = arith.constant 10 : index
    %c0_156 = arith.constant 0 : index
    %156 = vector.load %arg19[%c10_155, %c0_156] : memref<18x128xbf16, #tpu.memory_space<vmem>>, vector<8x128xbf16>
    %c2_157 = arith.constant 2 : index
    %c0_158 = arith.constant 0 : index
    %c0_159 = arith.constant 0 : index
    %157 = vector.load %arg12[%c2_157, %c0_158, %c0_159] : memref<3x128x128xbf16, #tpu.memory_space<vmem>>, vector<1x128x128xbf16>
    %158 = vector.shape_cast %157 : vector<1x128x128xbf16> to vector<128x128xbf16>
    %cst_160 = arith.constant dense<0.000000e+00> : vector<8x128xf32>
    %159 = tpu.matmul %156, %158, %cst_160 {dimension_numbers = #tpu.dot_dimension_numbers<[1], [0], [0], [1], [0, 0, 1, 1], [], []>} : vector<8x128xbf16>, vector<128x128xbf16>, vector<8x128xf32> -> vector<8x128xf32>
    %160 = arith.addf %150, %159 : vector<8x128xf32>
    %c8_161 = arith.constant 8 : index
    %c0_162 = arith.constant 0 : index
    %161 = vector.load %arg19[%c8_161, %c0_162] : memref<18x128xbf16, #tpu.memory_space<vmem>>, vector<8x128xbf16>
    %c2_163 = arith.constant 2 : index
    %c0_164 = arith.constant 0 : index
    %c0_165 = arith.constant 0 : index
    %162 = vector.load %arg14[%c2_163, %c0_164, %c0_165] : memref<3x128x128xbf16, #tpu.memory_space<vmem>>, vector<1x128x128xbf16>
    %163 = vector.shape_cast %162 : vector<1x128x128xbf16> to vector<128x128xbf16>
    %cst_166 = arith.constant dense<0.000000e+00> : vector<8x128xf32>
    %164 = tpu.matmul %161, %163, %cst_166 {dimension_numbers = #tpu.dot_dimension_numbers<[1], [0], [0], [1], [0, 0, 1, 1], [], []>} : vector<8x128xbf16>, vector<128x128xbf16>, vector<8x128xf32> -> vector<8x128xf32>
    %165 = arith.addf %155, %164 : vector<8x128xf32>
    %c0_167 = arith.constant 0 : index
    %c0_168 = arith.constant 0 : index
    %166 = vector.load %arg13[%c0_167, %c0_168] : memref<1x128xf32, #tpu.memory_space<vmem>>, vector<1x128xf32>
    %167 = vector.broadcast %166 : vector<1x128xf32> to vector<8x128xf32>
    %168 = arith.addf %160, %167 : vector<8x128xf32>
    %169 = math.tanh %168 : vector<8x128xf32>
    %170 = arith.addf %137, %169 : vector<8x128xf32>
    %c0_169 = arith.constant 0 : index
    %c0_170 = arith.constant 0 : index
    %171 = vector.load %arg15[%c0_169, %c0_170] : memref<1x128xf32, #tpu.memory_space<vmem>>, vector<1x128xf32>
    %172 = vector.broadcast %171 : vector<1x128xf32> to vector<8x128xf32>
    %173 = arith.addf %165, %172 : vector<8x128xf32>
    %174 = math.tanh %173 : vector<8x128xf32>
    %175 = arith.addf %170, %174 : vector<8x128xf32>
    %c0_171 = arith.constant 0 : index
    %c0_172 = arith.constant 0 : index
    %176 = vector.load %arg21[%c0_171, %c0_172] : memref<8x128xf32, #tpu.memory_space<vmem>>, vector<8x128xf32>
    %177 = arith.addf %176, %175 : vector<8x128xf32>
    %c0_173 = arith.constant 0 : index
    %c0_174 = arith.constant 0 : index
    %178 = vector.load %arg21[%c0_173, %c0_174] : memref<8x128xf32, #tpu.memory_space<vmem>>, vector<8x128xf32>
    tpu.vector_store %arg21[%c0_173, %c0_174], %177 {strides = array<i32>} : memref<8x128xf32, #tpu.memory_space<vmem>>, vector<8x128xf32>,
    %179 = arith.truncf %175 : vector<8x128xf32> to vector<8x128xbf16>
    %c8_175 = arith.constant 8 : index
    %c0_176 = arith.constant 0 : index
    %180 = vector.load %arg20[%c8_175, %c0_176] : memref<18x128xbf16, #tpu.memory_space<vmem>>, vector<8x128xbf16>
    tpu.vector_store %arg20[%c8_175, %c0_176], %179 {strides = array<i32>} : memref<18x128xbf16, #tpu.memory_space<vmem>>, vector<8x128xbf16>,
    %c0_177 = arith.constant 0 : index
    %c0_178 = arith.constant 0 : index
    %181 = vector.load %arg21[%c0_177, %c0_178] : memref<8x128xf32, #tpu.memory_space<vmem>>, vector<8x128xf32>
    %182 = arith.truncf %181 : vector<8x128xf32> to vector<8x128xbf16>
    %c0_179 = arith.constant 0 : index
    %c0_180 = arith.constant 0 : index
    %183 = vector.load %arg16[%c0_179, %c0_180] : memref<128x128xbf16, #tpu.memory_space<vmem>>, vector<128x128xbf16>
    %cst_181 = arith.constant dense<0.000000e+00> : vector<8x128xf32>
    %184 = tpu.matmul %182, %183, %cst_181 {dimension_numbers = #tpu.dot_dimension_numbers<[1], [0], [0], [1], [0, 0, 1, 1], [], []>} : vector<8x128xbf16>, vector<128x128xbf16>, vector<8x128xf32> -> vector<8x128xf32>
    %c0_182 = arith.constant 0 : index
    %c0_183 = arith.constant 0 : index
    %185 = vector.load %arg17[%c0_182, %c0_183] : memref<1x128xf32, #tpu.memory_space<vmem>>, vector<1x128xf32>
    %186 = vector.broadcast %185 : vector<1x128xf32> to vector<8x128xf32>
    %187 = arith.addf %184, %186 : vector<8x128xf32>
    %c0_184 = arith.constant 0 : index
    %c0_185 = arith.constant 0 : index
    %c0_186 = arith.constant 0 : index
    %188 = vector.load %arg18[%c0_184, %c0_185, %c0_186] : memref<1x8x128xf32, #tpu.memory_space<vmem>>, vector<1x8x128xf32>
    %189 = vector.shape_cast %188 : vector<1x8x128xf32> to vector<8x128xf32>
    %190 = vector.shape_cast %187 : vector<8x128xf32> to vector<1x8x128xf32>
    tpu.vector_store %arg18[%c0_184, %c0_185, %c0_186], %190 {strides = array<i32>} : memref<1x8x128xf32, #tpu.memory_space<vmem>>, vector<1x8x128xf32>,
    return
  }
  func.func @transform_0(%arg0: i32) -> (i32, i32, i32) {
    %c0_i32 = arith.constant 0 : i32
    %c0_i32_0 = arith.constant 0 : i32
    %c0_i32_1 = arith.constant 0 : i32
    return %arg0, %c0_i32, %c0_i32_0 : i32, i32, i32
  }
  func.func @transform_1(%arg0: i32) -> (i32, i32) {
    %c0_i32 = arith.constant 0 : i32
    %c0_i32_0 = arith.constant 0 : i32
    %c0_i32_1 = arith.constant 0 : i32
    return %c0_i32, %c0_i32_0 : i32, i32
  }
  func.func @transform_2(%arg0: i32) -> (i32, i32) {
    %c0_i32 = arith.constant 0 : i32
    %c0_i32_0 = arith.constant 0 : i32
    %c0_i32_1 = arith.constant 0 : i32
    return %c0_i32, %c0_i32_0 : i32, i32
  }
  func.func @transform_3(%arg0: i32) -> (i32, i32) {
    %c0_i32 = arith.constant 0 : i32
    %c0_i32_0 = arith.constant 0 : i32
    %c0_i32_1 = arith.constant 0 : i32
    return %c0_i32, %c0_i32_0 : i32, i32
  }
  func.func @transform_4(%arg0: i32) -> (i32, i32) {
    %c0_i32 = arith.constant 0 : i32
    %c0_i32_0 = arith.constant 0 : i32
    %c0_i32_1 = arith.constant 0 : i32
    return %c0_i32, %c0_i32_0 : i32, i32
  }
  func.func @transform_5(%arg0: i32) -> (i32, i32) {
    %c0_i32 = arith.constant 0 : i32
    %c0_i32_0 = arith.constant 0 : i32
    %c0_i32_1 = arith.constant 0 : i32
    return %c0_i32, %c0_i32_0 : i32, i32
  }
  func.func @transform_6(%arg0: i32) -> (i32, i32) {
    %c0_i32 = arith.constant 0 : i32
    %c0_i32_0 = arith.constant 0 : i32
    %c0_i32_1 = arith.constant 0 : i32
    return %c0_i32, %c0_i32_0 : i32, i32
  }
  func.func @transform_7(%arg0: i32) -> (i32, i32) {
    %c0_i32 = arith.constant 0 : i32
    %c0_i32_0 = arith.constant 0 : i32
    %c0_i32_1 = arith.constant 0 : i32
    return %c0_i32, %c0_i32_0 : i32, i32
  }
  func.func @transform_8(%arg0: i32) -> (i32, i32) {
    %c0_i32 = arith.constant 0 : i32
    %c0_i32_0 = arith.constant 0 : i32
    %c0_i32_1 = arith.constant 0 : i32
    return %c0_i32, %c0_i32_0 : i32, i32
  }
  func.func @transform_9(%arg0: i32) -> (i32, i32) {
    %c0_i32 = arith.constant 0 : i32
    %c0_i32_0 = arith.constant 0 : i32
    %c0_i32_1 = arith.constant 0 : i32
    return %c0_i32, %c0_i32_0 : i32, i32
  }
  func.func @transform_10(%arg0: i32) -> (i32, i32) {
    %c0_i32 = arith.constant 0 : i32
    %c0_i32_0 = arith.constant 0 : i32
    %c0_i32_1 = arith.constant 0 : i32
    return %c0_i32, %c0_i32_0 : i32, i32
  }
  func.func @transform_11(%arg0: i32) -> (i32, i32, i32) {
    %c0_i32 = arith.constant 0 : i32
    %c0_i32_0 = arith.constant 0 : i32
    %c0_i32_1 = arith.constant 0 : i32
    %c0_i32_2 = arith.constant 0 : i32
    return %c0_i32, %c0_i32_0, %c0_i32_1 : i32, i32, i32
  }
  func.func @transform_12(%arg0: i32) -> (i32, i32) {
    %c0_i32 = arith.constant 0 : i32
    %c0_i32_0 = arith.constant 0 : i32
    %c0_i32_1 = arith.constant 0 : i32
    return %c0_i32, %c0_i32_0 : i32, i32
  }
  func.func @transform_13(%arg0: i32) -> (i32, i32, i32) {
    %c0_i32 = arith.constant 0 : i32
    %c0_i32_0 = arith.constant 0 : i32
    %c0_i32_1 = arith.constant 0 : i32
    %c0_i32_2 = arith.constant 0 : i32
    return %c0_i32, %c0_i32_0, %c0_i32_1 : i32, i32, i32
  }
  func.func @transform_14(%arg0: i32) -> (i32, i32) {
    %c0_i32 = arith.constant 0 : i32
    %c0_i32_0 = arith.constant 0 : i32
    %c0_i32_1 = arith.constant 0 : i32
    return %c0_i32, %c0_i32_0 : i32, i32
  }
  func.func @transform_15(%arg0: i32) -> (i32, i32) {
    %c0_i32 = arith.constant 0 : i32
    %c0_i32_0 = arith.constant 0 : i32
    %c0_i32_1 = arith.constant 0 : i32
    return %c0_i32, %c0_i32_0 : i32, i32
  }
  func.func @transform_16(%arg0: i32) -> (i32, i32) {
    %c0_i32 = arith.constant 0 : i32
    %c0_i32_0 = arith.constant 0 : i32
    %c0_i32_1 = arith.constant 0 : i32
    return %c0_i32, %c0_i32_0 : i32, i32
  }
  func.func @transform_17(%arg0: i32) -> (i32, i32, i32) {
    %c0_i32 = arith.constant 0 : i32
    %c0_i32_0 = arith.constant 0 : i32
    %c0_i32_1 = arith.constant 0 : i32
    return %arg0, %c0_i32, %c0_i32_0 : i32, i32, i32
  }
}

</mosaic_0001>

<llo_original>
// kernel: tpu_custom_call.1
$region0: #{tpu_custom_call.1}
  #allocation0 [shape = 'u32[]', space=smem, size = 0x4, offset = 0x4, fixed_abs, tag = 'smem constant byte address 0x4 - core index']
  #allocation1 [shape = 'u32[72,128]{1,0:T(1,128)}', space=vmem, size = 0x9000, scoped, tag = 'internal scratch']
  #allocation2 [shape = 'bf16[18,128]{1,0:T(8,128)(2,1)}', space=vmem, size = 0x1800, scoped, tag = 'scratch operand']
  #allocation3 [shape = 'bf16[18,128]{1,0:T(8,128)(2,1)}', space=vmem, size = 0x1800, scoped, tag = 'scratch operand']
  #allocation4 [shape = 'f32[8,128]{1,0:T(8,128)}', space=vmem, size = 0x1000, scoped, tag = 'scratch operand']
  %s0 = inlined_call_operand.hbm [shape: bf16[2,8,128], index: 0, kind: input, shape index: {}]
  %s1 = inlined_call_operand.hbm [shape: bf16[128,128], index: 1, kind: input, shape index: {}]
  %s2 = inlined_call_operand.vmem [shape: f32[1,128], index: 2, kind: input, shape index: {}]
  %s3 = inlined_call_operand.hbm [shape: bf16[256,128], index: 3, kind: input, shape index: {}]
  %s4 = inlined_call_operand.vmem [shape: f32[1,128], index: 4, kind: input, shape index: {}]
  %s5 = inlined_call_operand.hbm [shape: bf16[256,128], index: 5, kind: input, shape index: {}]
  %s6 = inlined_call_operand.vmem [shape: f32[1,128], index: 6, kind: input, shape index: {}]
  %s7 = inlined_call_operand.hbm [shape: bf16[256,128], index: 7, kind: input, shape index: {}]
  %s8 = inlined_call_operand.vmem [shape: f32[1,128], index: 8, kind: input, shape index: {}]
  %s9 = inlined_call_operand.hbm [shape: bf16[256,128], index: 9, kind: input, shape index: {}]
  %s10 = inlined_call_operand.vmem [shape: f32[1,128], index: 10, kind: input, shape index: {}]
  %s11 = inlined_call_operand.hbm [shape: bf16[3,128,128], index: 11, kind: input, shape index: {}]
  %s12 = inlined_call_operand.vmem [shape: f32[1,128], index: 12, kind: input, shape index: {}]
  %s13 = inlined_call_operand.hbm [shape: bf16[3,128,128], index: 13, kind: input, shape index: {}]
  %s14 = inlined_call_operand.vmem [shape: f32[1,128], index: 14, kind: input, shape index: {}]
  %s15 = inlined_call_operand.hbm [shape: bf16[128,128], index: 15, kind: input, shape index: {}]
  %s16 = inlined_call_operand.vmem [shape: f32[1,128], index: 16, kind: input, shape index: {}]
  %s17 = inlined_call_operand.hbm [shape: f32[2,8,128], index: 17, kind: output, shape index: {}]
  %s18 = sld [smem:[#allocation0]]
  $region137: #{tpu_custom_call.1} parent=0
    _
  %s20 = ssub.s32 1, %s18
  %s21 = scalar_select 0, %s20, %s18
  $region1: #{tpu_custom_call.1} parent=0
    #allocation5 [shape = 'u8[4096]{0}', space=vmem, size = 0x1000, scoped, tag = 'input window, operand 0']
    #allocation6 [shape = 's32[2]{0}', space=sflag, size = 0x8, scoped, tag = 'scoped memory for tpu_custom_call.1']
    #allocation7 [shape = 's32[2]{0}', space=sflag, size = 0x8, scoped, tag = 'scoped memory for tpu_custom_call.1']
    #allocation8 [shape = 'u8[32768]{0}', space=vmem, size = 0x8000, scoped, tag = 'input window, operand 1, single buffered']
    #allocation9 [shape = 's32[1]{0}', space=sflag, size = 0x4, scoped, tag = 'scoped memory for tpu_custom_call.1']
    #allocation10 [shape = 'u8[65536]{0}', space=vmem, size = 0x10000, scoped, tag = 'input window, operand 3, single buffered']
    #allocation11 [shape = 'u8[65536]{0}', space=vmem, size = 0x10000, scoped, tag = 'input window, operand 5, single buffered']
    #allocation12 [shape = 's32[1]{0}', space=sflag, size = 0x4, scoped, tag = 'scoped memory for tpu_custom_call.1']
    #allocation13 [shape = 'u8[65536]{0}', space=vmem, size = 0x10000, scoped, tag = 'input window, operand 7, single buffered']
    #allocation14 [shape = 'u8[65536]{0}', space=vmem, size = 0x10000, scoped, tag = 'input window, operand 9, single buffered']
    #allocation15 [shape = 's32[1]{0}', space=sflag, size = 0x4, scoped, tag = 'scoped memory for tpu_custom_call.1']
    #allocation16 [shape = 'u8[98304]{0}', space=vmem, size = 0x18000, scoped, tag = 'input window, operand 11, single buffered']
    #allocation17 [shape = 'u8[98304]{0}', space=vmem, size = 0x18000, scoped, tag = 'input window, operand 13, single buffered']
    #allocation18 [shape = 's32[1]{0}', space=sflag, size = 0x4, scoped, tag = 'scoped memory for tpu_custom_call.1']
    #allocation19 [shape = 'u8[32768]{0}', space=vmem, size = 0x8000, scoped, tag = 'input window, operand 15, single buffered']
    #allocation20 [shape = 'u8[8192]{0}', space=vmem, size = 0x2000, scoped, tag = 'output window, operand 0']
    %22 = vsyncpa [#allocation6], 0
    %s23 = scalar_lea.sflag [#allocation6], 1
    %24 = vsyncpa %s23, 0
    %25 = vsyncpa [#allocation9], 0
    %26 = vsyncpa [#allocation12], 0
    %27 = vsyncpa [#allocation15], 0
    %28 = vsyncpa [#allocation18], 0
    %29 = vsyncpa [#allocation7], 0
    %s30 = scalar_lea.sflag [#allocation7], 1
    %31 = vsyncpa %s30, 0
    loop: start=0, step=1, limit=4
    $region2: #{tpu_custom_call.1} parent=1 // loop_pre_header
      _
    $region3: #{tpu_custom_call.1} parent=1 // loop_header
      %s33 = sphi 0, %s37
      %p34 = scmp.ge.s32.totalorder %s33, 4
      %s43 = sphi 0, %s45
      %s46 = sphi 0, %s43
      %s47 = sphi 0, %s46
      %s63 = sphi 0, %s47
      %s67 = sphi 0, %s67
      %s69 = sphi 0, %s67
      %s70 = sphi 0, %s69
      %s84 = sphi 0, %s70
      %s88 = sphi 0, %s88
      %s90 = sphi 0, %s88
      %s91 = sphi 0, %s90
      %s105 = sphi 0, %s91
      %s109 = sphi 0, %s109
      %s111 = sphi 0, %s109
      %s112 = sphi 0, %s111
      %s126 = sphi 0, %s112
      %s130 = sphi 0, %s130
      %s132 = sphi 0, %s130
      %s133 = sphi 0, %s132
      %s147 = sphi 0, %s133
      %s151 = sphi 0, %s151
      %s153 = sphi 0, %s151
      %s154 = sphi 0, %s153
      %s168 = sphi 0, %s154
      %s172 = sphi 0, %s172
      %s174 = sphi 0, %s172
      %s175 = sphi 0, %s174
      %s189 = sphi 0, %s175
      %s193 = sphi 0, %s193
      %s195 = sphi 0, %s193
      %s196 = sphi 0, %s195
      %s210 = sphi 0, %s196
      %s214 = sphi 0, %s214
      %s216 = sphi 0, %s214
      %s217 = sphi 0, %s216
      %s231 = sphi 0, %s217
      %s235 = sphi 0, %s235
      %s237 = sphi 0, %s235
      %s238 = sphi 0, %s237
      %s252 = sphi 0, %s238
      %s256 = sphi 0, %s256
      %s258 = sphi 0, %s256
      %s259 = sphi 0, %s258
      %s273 = sphi 0, %s259
      %s277 = sphi 0, %s277
      %s279 = sphi 0, %s277
      %s280 = sphi 0, %s279
      %s294 = sphi 0, %s280
      %s298 = sphi 0, %s298
      %s300 = sphi 0, %s298
      %s301 = sphi 0, %s300
      %s315 = sphi 0, %s301
      %s319 = sphi 0, %s319
      %s321 = sphi 0, %s319
      %s322 = sphi 0, %s321
      %s336 = sphi 0, %s322
      %s340 = sphi 0, %s340
      %s342 = sphi 0, %s340
      %s343 = sphi 0, %s342
      %s357 = sphi 0, %s343
      %s361 = sphi 0, %s361
      %s363 = sphi 0, %s361
      %s364 = sphi 0, %s363
      %s378 = sphi 0, %s364
      %s382 = sphi 0, %s382
      %s384 = sphi 0, %s382
      %s385 = sphi 0, %s384
      %s399 = sphi 0, %s385
      %s405 = sphi 0, %s407
      %s408 = sphi 0, %s405
      %s409 = sphi 0, %s408
      %s425 = sphi 0, %s409
    $region4: #{tpu_custom_call.1} parent=1 // loop_header_branch
      %36 = sbr.rel (%p34) target = $region8
    $region5: #{tpu_custom_call.1} parent=1 // loop_body
      %s38 = ssub.s32 %s33, 1
      %s39 = ssub.s32 %s33, 2
      %s40 = sadd.s32 %s33, 1
      %s41 = ssub.s32 %s33, %s40
      %p42 = scmp.eq.s32.totalorder %s41, 0
      %s44 = sadd.s32 %s43, 1
      %s45 = scalar_select %p42, %s43, %s44
      %p48 = pneg %p42
      %p49 = scmp.eq.s32.totalorder %s33, 1
      %p50 = por %p48, %p49
      %p51 = scmp.ne.s32.totalorder %s43, %s46
      %p52 = scmp.eq.s32.totalorder %s33, 0
      %p53 = por %p51, %p52
      %p54 = scmp.ne.s32.totalorder %s43, %s46
      %p55 = scmp.eq.s32.totalorder %s38, 1
      %p56 = por %p54, %p55
      %p57 = scmp.ne.s32.totalorder %s46, %s47
      %p58 = scmp.eq.s32.totalorder %s38, 0
      %p59 = por %p57, %p58
      %p60 = scmp.ne.s32.totalorder %s46, %s47
      %p61 = scmp.eq.s32.totalorder %s39, 1
      %p62 = por %p60, %p61
      %p64 = scmp.ne.s32.totalorder %s47, %s63
      %p65 = scmp.eq.s32.totalorder %s39, 0
      %p66 = por %p64, %p65
      %s68 = sadd.s32 %s67, 1
      %p71 = scmp.eq.s32.totalorder %s33, 1
      %p72 = scmp.ne.s32.totalorder %s67, %s69
      %p73 = scmp.eq.s32.totalorder %s33, 0
      %p74 = por %p72, %p73
      %p75 = scmp.ne.s32.totalorder %s67, %s69
      %p76 = scmp.eq.s32.totalorder %s38, 1
      %p77 = por %p75, %p76
      %p78 = scmp.ne.s32.totalorder %s69, %s70
      %p79 = scmp.eq.s32.totalorder %s38, 0
      %p80 = por %p78, %p79
      %p81 = scmp.ne.s32.totalorder %s69, %s70
      %p82 = scmp.eq.s32.totalorder %s39, 1
      %p83 = por %p81, %p82
      %p85 = scmp.ne.s32.totalorder %s70, %s84
      %p86 = scmp.eq.s32.totalorder %s39, 0
      %p87 = por %p85, %p86
      %s89 = sadd.s32 %s88, 1
      %p92 = scmp.eq.s32.totalorder %s33, 1
      %p93 = scmp.ne.s32.totalorder %s88, %s90
      %p94 = scmp.eq.s32.totalorder %s33, 0
      %p95 = por %p93, %p94
      %p96 = scmp.ne.s32.totalorder %s88, %s90
      %p97 = scmp.eq.s32.totalorder %s38, 1
      %p98 = por %p96, %p97
      %p99 = scmp.ne.s32.totalorder %s90, %s91
      %p100 = scmp.eq.s32.totalorder %s38, 0
      %p101 = por %p99, %p100
      %p102 = scmp.ne.s32.totalorder %s90, %s91
      %p103 = scmp.eq.s32.totalorder %s39, 1
      %p104 = por %p102, %p103
      %p106 = scmp.ne.s32.totalorder %s91, %s105
      %p107 = scmp.eq.s32.totalorder %s39, 0
      %p108 = por %p106, %p107
      %s110 = sadd.s32 %s109, 1
      %p113 = scmp.eq.s32.totalorder %s33, 1
      %p114 = scmp.ne.s32.totalorder %s109, %s111
      %p115 = scmp.eq.s32.totalorder %s33, 0
      %p116 = por %p114, %p115
      %p117 = scmp.ne.s32.totalorder %s109, %s111
      %p118 = scmp.eq.s32.totalorder %s38, 1
      %p119 = por %p117, %p118
      %p120 = scmp.ne.s32.totalorder %s111, %s112
      %p121 = scmp.eq.s32.totalorder %s38, 0
      %p122 = por %p120, %p121
      %p123 = scmp.ne.s32.totalorder %s111, %s112
      %p124 = scmp.eq.s32.totalorder %s39, 1
      %p125 = por %p123, %p124
      %p127 = scmp.ne.s32.totalorder %s112, %s126
      %p128 = scmp.eq.s32.totalorder %s39, 0
      %p129 = por %p127, %p128
      %s131 = sadd.s32 %s130, 1
      %p134 = scmp.eq.s32.totalorder %s33, 1
      %p135 = scmp.ne.s32.totalorder %s130, %s132
      %p136 = scmp.eq.s32.totalorder %s33, 0
      %p137 = por %p135, %p136
      %p138 = scmp.ne.s32.totalorder %s130, %s132
      %p139 = scmp.eq.s32.totalorder %s38, 1
      %p140 = por %p138, %p139
      %p141 = scmp.ne.s32.totalorder %s132, %s133
      %p142 = scmp.eq.s32.totalorder %s38, 0
      %p143 = por %p141, %p142
      %p144 = scmp.ne.s32.totalorder %s132, %s133
      %p145 = scmp.eq.s32.totalorder %s39, 1
      %p146 = por %p144, %p145
      %p148 = scmp.ne.s32.totalorder %s133, %s147
      %p149 = scmp.eq.s32.totalorder %s39, 0
      %p150 = por %p148, %p149
      %s152 = sadd.s32 %s151, 1
      %p155 = scmp.eq.s32.totalorder %s33, 1
      %p156 = scmp.ne.s32.totalorder %s151, %s153
      %p157 = scmp.eq.s32.totalorder %s33, 0
      %p158 = por %p156, %p157
      %p159 = scmp.ne.s32.totalorder %s151, %s153
      %p160 = scmp.eq.s32.totalorder %s38, 1
      %p161 = por %p159, %p160
      %p162 = scmp.ne.s32.totalorder %s153, %s154
      %p163 = scmp.eq.s32.totalorder %s38, 0
      %p164 = por %p162, %p163
      %p165 = scmp.ne.s32.totalorder %s153, %s154
      %p166 = scmp.eq.s32.totalorder %s39, 1
      %p167 = por %p165, %p166
      %p169 = scmp.ne.s32.totalorder %s154, %s168
      %p170 = scmp.eq.s32.totalorder %s39, 0
      %p171 = por %p169, %p170
      %s173 = sadd.s32 %s172, 1
      %p176 = scmp.eq.s32.totalorder %s33, 1
      %p177 = scmp.ne.s32.totalorder %s172, %s174
      %p178 = scmp.eq.s32.totalorder %s33, 0
      %p179 = por %p177, %p178
      %p180 = scmp.ne.s32.totalorder %s172, %s174
      %p181 = scmp.eq.s32.totalorder %s38, 1
      %p182 = por %p180, %p181
      %p183 = scmp.ne.s32.totalorder %s174, %s175
      %p184 = scmp.eq.s32.totalorder %s38, 0
      %p185 = por %p183, %p184
      %p186 = scmp.ne.s32.totalorder %s174, %s175
      %p187 = scmp.eq.s32.totalorder %s39, 1
      %p188 = por %p186, %p187
      %p190 = scmp.ne.s32.totalorder %s175, %s189
      %p191 = scmp.eq.s32.totalorder %s39, 0
      %p192 = por %p190, %p191
      %s194 = sadd.s32 %s193, 1
      %p197 = scmp.eq.s32.totalorder %s33, 1
      %p198 = scmp.ne.s32.totalorder %s193, %s195
      %p199 = scmp.eq.s32.totalorder %s33, 0
      %p200 = por %p198, %p199
      %p201 = scmp.ne.s32.totalorder %s193, %s195
      %p202 = scmp.eq.s32.totalorder %s38, 1
      %p203 = por %p201, %p202
      %p204 = scmp.ne.s32.totalorder %s195, %s196
      %p205 = scmp.eq.s32.totalorder %s38, 0
      %p206 = por %p204, %p205
      %p207 = scmp.ne.s32.totalorder %s195, %s196
      %p208 = scmp.eq.s32.totalorder %s39, 1
      %p209 = por %p207, %p208
      %p211 = scmp.ne.s32.totalorder %s196, %s210
      %p212 = scmp.eq.s32.totalorder %s39, 0
      %p213 = por %p211, %p212
      %s215 = sadd.s32 %s214, 1
      %p218 = scmp.eq.s32.totalorder %s33, 1
      %p219 = scmp.ne.s32.totalorder %s214, %s216
      %p220 = scmp.eq.s32.totalorder %s33, 0
      %p221 = por %p219, %p220
      %p222 = scmp.ne.s32.totalorder %s214, %s216
      %p223 = scmp.eq.s32.totalorder %s38, 1
      %p224 = por %p222, %p223
      %p225 = scmp.ne.s32.totalorder %s216, %s217
      %p226 = scmp.eq.s32.totalorder %s38, 0
      %p227 = por %p225, %p226
      %p228 = scmp.ne.s32.totalorder %s216, %s217
      %p229 = scmp.eq.s32.totalorder %s39, 1
      %p230 = por %p228, %p229
      %p232 = scmp.ne.s32.totalorder %s217, %s231
      %p233 = scmp.eq.s32.totalorder %s39, 0
      %p234 = por %p232, %p233
      %s236 = sadd.s32 %s235, 1
      %p239 = scmp.eq.s32.totalorder %s33, 1
      %p240 = scmp.ne.s32.totalorder %s235, %s237
      %p241 = scmp.eq.s32.totalorder %s33, 0
      %p242 = por %p240, %p241
      %p243 = scmp.ne.s32.totalorder %s235, %s237
      %p244 = scmp.eq.s32.totalorder %s38, 1
      %p245 = por %p243, %p244
      %p246 = scmp.ne.s32.totalorder %s237, %s238
      %p247 = scmp.eq.s32.totalorder %s38, 0
      %p248 = por %p246, %p247
      %p249 = scmp.ne.s32.totalorder %s237, %s238
      %p250 = scmp.eq.s32.totalorder %s39, 1
      %p251 = por %p249, %p250
      %p253 = scmp.ne.s32.totalorder %s238, %s252
      %p254 = scmp.eq.s32.totalorder %s39, 0
      %p255 = por %p253, %p254
      %s257 = sadd.s32 %s256, 1
      %p260 = scmp.eq.s32.totalorder %s33, 1
      %p261 = scmp.ne.s32.totalorder %s256, %s258
      %p262 = scmp.eq.s32.totalorder %s33, 0
      %p263 = por %p261, %p262
      %p264 = scmp.ne.s32.totalorder %s256, %s258
      %p265 = scmp.eq.s32.totalorder %s38, 1
      %p266 = por %p264, %p265
      %p267 = scmp.ne.s32.totalorder %s258, %s259
      %p268 = scmp.eq.s32.totalorder %s38, 0
      %p269 = por %p267, %p268
      %p270 = scmp.ne.s32.totalorder %s258, %s259
      %p271 = scmp.eq.s32.totalorder %s39, 1
      %p272 = por %p270, %p271
      %p274 = scmp.ne.s32.totalorder %s259, %s273
      %p275 = scmp.eq.s32.totalorder %s39, 0
      %p276 = por %p274, %p275
      %s278 = sadd.s32 %s277, 1
      %p281 = scmp.eq.s32.totalorder %s33, 1
      %p282 = scmp.ne.s32.totalorder %s277, %s279
      %p283 = scmp.eq.s32.totalorder %s33, 0
      %p284 = por %p282, %p283
      %p285 = scmp.ne.s32.totalorder %s277, %s279
      %p286 = scmp.eq.s32.totalorder %s38, 1
      %p287 = por %p285, %p286
      %p288 = scmp.ne.s32.totalorder %s279, %s280
      %p289 = scmp.eq.s32.totalorder %s38, 0
      %p290 = por %p288, %p289
      %p291 = scmp.ne.s32.totalorder %s279, %s280
      %p292 = scmp.eq.s32.totalorder %s39, 1
      %p293 = por %p291, %p292
      %p295 = scmp.ne.s32.totalorder %s280, %s294
      %p296 = scmp.eq.s32.totalorder %s39, 0
      %p297 = por %p295, %p296
      %s299 = sadd.s32 %s298, 1
      %p302 = scmp.eq.s32.totalorder %s33, 1
      %p303 = scmp.ne.s32.totalorder %s298, %s300
      %p304 = scmp.eq.s32.totalorder %s33, 0
      %p305 = por %p303, %p304
      %p306 = scmp.ne.s32.totalorder %s298, %s300
      %p307 = scmp.eq.s32.totalorder %s38, 1
      %p308 = por %p306, %p307
      %p309 = scmp.ne.s32.totalorder %s300, %s301
      %p310 = scmp.eq.s32.totalorder %s38, 0
      %p311 = por %p309, %p310
      %p312 = scmp.ne.s32.totalorder %s300, %s301
      %p313 = scmp.eq.s32.totalorder %s39, 1
      %p314 = por %p312, %p313
      %p316 = scmp.ne.s32.totalorder %s301, %s315
      %p317 = scmp.eq.s32.totalorder %s39, 0
      %p318 = por %p316, %p317
      %s320 = sadd.s32 %s319, 1
      %p323 = scmp.eq.s32.totalorder %s33, 1
      %p324 = scmp.ne.s32.totalorder %s319, %s321
      %p325 = scmp.eq.s32.totalorder %s33, 0
      %p326 = por %p324, %p325
      %p327 = scmp.ne.s32.totalorder %s319, %s321
      %p328 = scmp.eq.s32.totalorder %s38, 1
      %p329 = por %p327, %p328
      %p330 = scmp.ne.s32.totalorder %s321, %s322
      %p331 = scmp.eq.s32.totalorder %s38, 0
      %p332 = por %p330, %p331
      %p333 = scmp.ne.s32.totalorder %s321, %s322
      %p334 = scmp.eq.s32.totalorder %s39, 1
      %p335 = por %p333, %p334
      %p337 = scmp.ne.s32.totalorder %s322, %s336
      %p338 = scmp.eq.s32.totalorder %s39, 0
      %p339 = por %p337, %p338
      %s341 = sadd.s32 %s340, 1
      %p344 = scmp.eq.s32.totalorder %s33, 1
      %p345 = scmp.ne.s32.totalorder %s340, %s342
      %p346 = scmp.eq.s32.totalorder %s33, 0
      %p347 = por %p345, %p346
      %p348 = scmp.ne.s32.totalorder %s340, %s342
      %p349 = scmp.eq.s32.totalorder %s38, 1
      %p350 = por %p348, %p349
      %p351 = scmp.ne.s32.totalorder %s342, %s343
      %p352 = scmp.eq.s32.totalorder %s38, 0
      %p353 = por %p351, %p352
      %p354 = scmp.ne.s32.totalorder %s342, %s343
      %p355 = scmp.eq.s32.totalorder %s39, 1
      %p356 = por %p354, %p355
      %p358 = scmp.ne.s32.totalorder %s343, %s357
      %p359 = scmp.eq.s32.totalorder %s39, 0
      %p360 = por %p358, %p359
      %s362 = sadd.s32 %s361, 1
      %p365 = scmp.eq.s32.totalorder %s33, 1
      %p366 = scmp.ne.s32.totalorder %s361, %s363
      %p367 = scmp.eq.s32.totalorder %s33, 0
      %p368 = por %p366, %p367
      %p369 = scmp.ne.s32.totalorder %s361, %s363
      %p370 = scmp.eq.s32.totalorder %s38, 1
      %p371 = por %p369, %p370
      %p372 = scmp.ne.s32.totalorder %s363, %s364
      %p373 = scmp.eq.s32.totalorder %s38, 0
      %p374 = por %p372, %p373
      %p375 = scmp.ne.s32.totalorder %s363, %s364
      %p376 = scmp.eq.s32.totalorder %s39, 1
      %p377 = por %p375, %p376
      %p379 = scmp.ne.s32.totalorder %s364, %s378
      %p380 = scmp.eq.s32.totalorder %s39, 0
      %p381 = por %p379, %p380
      %s383 = sadd.s32 %s382, 1
      %p386 = scmp.eq.s32.totalorder %s33, 1
      %p387 = scmp.ne.s32.totalorder %s382, %s384
      %p388 = scmp.eq.s32.totalorder %s33, 0
      %p389 = por %p387, %p388
      %p390 = scmp.ne.s32.totalorder %s382, %s384
      %p391 = scmp.eq.s32.totalorder %s38, 1
      %p392 = por %p390, %p391
      %p393 = scmp.ne.s32.totalorder %s384, %s385
      %p394 = scmp.eq.s32.totalorder %s38, 0
      %p395 = por %p393, %p394
      %p396 = scmp.ne.s32.totalorder %s384, %s385
      %p397 = scmp.eq.s32.totalorder %s39, 1
      %p398 = por %p396, %p397
      %p400 = scmp.ne.s32.totalorder %s385, %s399
      %p401 = scmp.eq.s32.totalorder %s39, 0
      %p402 = por %p400, %p401
      %s403 = ssub.s32 %s33, %s40
      %p404 = scmp.eq.s32.totalorder %s403, 0
      %s406 = sadd.s32 %s405, 1
      %s407 = scalar_select %p404, %s405, %s406
      %p410 = pneg %p404
      %p411 = scmp.eq.s32.totalorder %s33, 1
      %p412 = por %p410, %p411
      %p413 = scmp.ne.s32.totalorder %s405, %s408
      %p414 = scmp.eq.s32.totalorder %s33, 0
      %p415 = por %p413, %p414
      %p416 = scmp.ne.s32.totalorder %s405, %s408
      %p417 = scmp.eq.s32.totalorder %s38, 1
      %p418 = por %p416, %p417
      %p419 = scmp.ne.s32.totalorder %s408, %s409
      %p420 = scmp.eq.s32.totalorder %s38, 0
      %p421 = por %p419, %p420
      %p422 = scmp.ne.s32.totalorder %s408, %s409
      %p423 = scmp.eq.s32.totalorder %s39, 1
      %p424 = por %p422, %p423
      %p426 = scmp.ne.s32.totalorder %s409, %s425
      %p427 = scmp.eq.s32.totalorder %s39, 0
      %p428 = por %p426, %p427
      %p429 = scmp.le.s32.totalorder 1, %s33
      %p430 = scmp.lt.s32.totalorder %s33, 3
      %p431 = pnand %p429, %p430
      %p432 = pneg %p431
      // Predicated region
      $region9: #{tpu_custom_call.1} parent=5 // pred_check
        _
      $region10: #{tpu_custom_call.1} parent=5 // pred_check_branch
        %434 = sbr.rel (%p431) target = $region12
      $region11: #{tpu_custom_call.1} parent=5 // pred_region
        %s435 = ssub.s32 %s33, 1
        // Predicated region
        $region13: #{tpu_custom_call.1} parent=11 // pred_check
          %p436 = pneg %p80
        $region14: #{tpu_custom_call.1} parent=11 // pred_check_branch
          %438 = sbr.rel (%p436) target = $region16
        $region15: #{tpu_custom_call.1} parent=11 // pred_region
          %440 = vsyncadd [#allocation9], 0
          %s441 = sshll.u32 %s1, 4
          %s442 = int_to_ptr.hbm [resolvable:$true] %s441
          %s443 = sshll.u32 [#allocation8], 4
          %s444 = int_to_ptr.vmem [resolvable:$true] %s443
          %449 = dma.hbm_to_vmem [thread:$0]  %s442, 1024, %s444, [#allocation9], 64, 64, 4
        $region16: #{tpu_custom_call.1} parent=11 // pred_fallthru
          _
        // Predicated region
        $region17: #{tpu_custom_call.1} parent=11 // pred_check
          %p450 = pneg %p101
        $region18: #{tpu_custom_call.1} parent=11 // pred_check_branch
          %452 = sbr.rel (%p450) target = $region20
        $region19: #{tpu_custom_call.1} parent=11 // pred_region
          _
        $region20: #{tpu_custom_call.1} parent=11 // pred_fallthru
          _
        // Predicated region
        $region21: #{tpu_custom_call.1} parent=11 // pred_check
          %p453 = pneg %p122
        $region22: #{tpu_custom_call.1} parent=11 // pred_check_branch
          %455 = sbr.rel (%p453) target = $region24
        $region23: #{tpu_custom_call.1} parent=11 // pred_region
          %457 = vsyncadd [#allocation9], 0
          %s458 = sshll.u32 %s3, 4
          %s459 = int_to_ptr.hbm [resolvable:$true] %s458
          %s460 = sshll.u32 [#allocation10], 4
          %s461 = int_to_ptr.vmem [resolvable:$true] %s460
          %466 = dma.hbm_to_vmem [thread:$0]  %s459, 2048, %s461, [#allocation9], 64, 64, 4
        $region24: #{tpu_custom_call.1} parent=11 // pred_fallthru
          _
        // Predicated region
        $region25: #{tpu_custom_call.1} parent=11 // pred_check
          %p467 = pneg %p143
        $region26: #{tpu_custom_call.1} parent=11 // pred_check_branch
          %469 = sbr.rel (%p467) target = $region28
        $region27: #{tpu_custom_call.1} parent=11 // pred_region
          _
        $region28: #{tpu_custom_call.1} parent=11 // pred_fallthru
          _
        // Predicated region
        $region29: #{tpu_custom_call.1} parent=11 // pred_check
          %p470 = pneg %p164
        $region30: #{tpu_custom_call.1} parent=11 // pred_check_branch
          %472 = sbr.rel (%p470) target = $region32
        $region31: #{tpu_custom_call.1} parent=11 // pred_region
          %474 = vsyncadd [#allocation12], 0
          %s475 = sshll.u32 %s5, 4
          %s476 = int_to_ptr.hbm [resolvable:$true] %s475
          %s477 = sshll.u32 [#allocation11], 4
          %s478 = int_to_ptr.vmem [resolvable:$true] %s477
          %483 = dma.hbm_to_vmem [thread:$0]  %s476, 2048, %s478, [#allocation12], 64, 64, 4
        $region32: #{tpu_custom_call.1} parent=11 // pred_fallthru
          _
        // Predicated region
        $region33: #{tpu_custom_call.1} parent=11 // pred_check
          %p484 = pneg %p185
        $region34: #{tpu_custom_call.1} parent=11 // pred_check_branch
          %486 = sbr.rel (%p484) target = $region36
        $region35: #{tpu_custom_call.1} parent=11 // pred_region
          _
        $region36: #{tpu_custom_call.1} parent=11 // pred_fallthru
          _
        // Predicated region
        $region37: #{tpu_custom_call.1} parent=11 // pred_check
          %p487 = pneg %p206
        $region38: #{tpu_custom_call.1} parent=11 // pred_check_branch
          %489 = sbr.rel (%p487) target = $region40
        $region39: #{tpu_custom_call.1} parent=11 // pred_region
          %491 = vsyncadd [#allocation12], 0
          %s492 = sshll.u32 %s7, 4
          %s493 = int_to_ptr.hbm [resolvable:$true] %s492
          %s494 = sshll.u32 [#allocation13], 4
          %s495 = int_to_ptr.vmem [resolvable:$true] %s494
          %500 = dma.hbm_to_vmem [thread:$0]  %s493, 2048, %s495, [#allocation12], 64, 64, 4
        $region40: #{tpu_custom_call.1} parent=11 // pred_fallthru
          _
        // Predicated region
        $region41: #{tpu_custom_call.1} parent=11 // pred_check
          %p501 = pneg %p227
        $region42: #{tpu_custom_call.1} parent=11 // pred_check_branch
          %503 = sbr.rel (%p501) target = $region44
        $region43: #{tpu_custom_call.1} parent=11 // pred_region
          _
        $region44: #{tpu_custom_call.1} parent=11 // pred_fallthru
          _
        // Predicated region
        $region45: #{tpu_custom_call.1} parent=11 // pred_check
          %p504 = pneg %p248
        $region46: #{tpu_custom_call.1} parent=11 // pred_check_branch
          %506 = sbr.rel (%p504) target = $region48
        $region47: #{tpu_custom_call.1} parent=11 // pred_region
          %508 = vsyncadd [#allocation15], 0
          %s509 = sshll.u32 %s9, 4
          %s510 = int_to_ptr.hbm [resolvable:$true] %s509
          %s511 = sshll.u32 [#allocation14], 4
          %s512 = int_to_ptr.vmem [resolvable:$true] %s511
          %517 = dma.hbm_to_vmem [thread:$0]  %s510, 2048, %s512, [#allocation15], 64, 64, 4
        $region48: #{tpu_custom_call.1} parent=11 // pred_fallthru
          _
        // Predicated region
        $region49: #{tpu_custom_call.1} parent=11 // pred_check
          %p518 = pneg %p269
        $region50: #{tpu_custom_call.1} parent=11 // pred_check_branch
          %520 = sbr.rel (%p518) target = $region52
        $region51: #{tpu_custom_call.1} parent=11 // pred_region
          _
        $region52: #{tpu_custom_call.1} parent=11 // pred_fallthru
          _
        // Predicated region
        $region53: #{tpu_custom_call.1} parent=11 // pred_check
          %p521 = pneg %p290
        $region54: #{tpu_custom_call.1} parent=11 // pred_check_branch
          %523 = sbr.rel (%p521) target = $region56
        $region55: #{tpu_custom_call.1} parent=11 // pred_region
          %525 = vsyncadd [#allocation15], 0
          %s526 = sshll.u32 %s11, 4
          %s527 = int_to_ptr.hbm [resolvable:$true] %s526
          %s528 = sshll.u32 [#allocation16], 4
          %s529 = int_to_ptr.vmem [resolvable:$true] %s528
          %534 = dma.hbm_to_vmem [thread:$0]  %s527, 3072, %s529, [#allocation15], 64, 64, 4
        $region56: #{tpu_custom_call.1} parent=11 // pred_fallthru
          _
        // Predicated region
        $region57: #{tpu_custom_call.1} parent=11 // pred_check
          %p535 = pneg %p311
        $region58: #{tpu_custom_call.1} parent=11 // pred_check_branch
          %537 = sbr.rel (%p535) target = $region60
        $region59: #{tpu_custom_call.1} parent=11 // pred_region
          _
        $region60: #{tpu_custom_call.1} parent=11 // pred_fallthru
          _
        // Predicated region
        $region61: #{tpu_custom_call.1} parent=11 // pred_check
          %p538 = pneg %p332
        $region62: #{tpu_custom_call.1} parent=11 // pred_check_branch
          %540 = sbr.rel (%p538) target = $region64
        $region63: #{tpu_custom_call.1} parent=11 // pred_region
          %542 = vsyncadd [#allocation18], 0
          %s543 = sshll.u32 %s13, 4
          %s544 = int_to_ptr.hbm [resolvable:$true] %s543
          %s545 = sshll.u32 [#allocation17], 4
          %s546 = int_to_ptr.vmem [resolvable:$true] %s545
          %551 = dma.hbm_to_vmem [thread:$0]  %s544, 3072, %s546, [#allocation18], 64, 64, 4
        $region64: #{tpu_custom_call.1} parent=11 // pred_fallthru
          _
        // Predicated region
        $region65: #{tpu_custom_call.1} parent=11 // pred_check
          %p552 = pneg %p353
        $region66: #{tpu_custom_call.1} parent=11 // pred_check_branch
          %554 = sbr.rel (%p552) target = $region68
        $region67: #{tpu_custom_call.1} parent=11 // pred_region
          _
        $region68: #{tpu_custom_call.1} parent=11 // pred_fallthru
          _
        // Predicated region
        $region69: #{tpu_custom_call.1} parent=11 // pred_check
          %p555 = pneg %p374
        $region70: #{tpu_custom_call.1} parent=11 // pred_check_branch
          %557 = sbr.rel (%p555) target = $region72
        $region71: #{tpu_custom_call.1} parent=11 // pred_region
          %559 = vsyncadd [#allocation18], 0
          %s560 = sshll.u32 %s15, 4
          %s561 = int_to_ptr.hbm [resolvable:$true] %s560
          %s562 = sshll.u32 [#allocation19], 4
          %s563 = int_to_ptr.vmem [resolvable:$true] %s562
          %568 = dma.hbm_to_vmem [thread:$0]  %s561, 1024, %s563, [#allocation18], 64, 64, 4
        $region72: #{tpu_custom_call.1} parent=11 // pred_fallthru
          _
        // Predicated region
        $region73: #{tpu_custom_call.1} parent=11 // pred_check
          %p569 = pneg %p395
        $region74: #{tpu_custom_call.1} parent=11 // pred_check_branch
          %571 = sbr.rel (%p569) target = $region76
        $region75: #{tpu_custom_call.1} parent=11 // pred_region
          _
        $region76: #{tpu_custom_call.1} parent=11 // pred_fallthru
          _
      $region12: #{tpu_custom_call.1} parent=5 // pred_fallthru
        _
      %p572 = scmp.lt.s32.totalorder %s33, 2
      // Predicated region
      $region77: #{tpu_custom_call.1} parent=5 // pred_check
        %p573 = pneg %p572
      $region78: #{tpu_custom_call.1} parent=5 // pred_check_branch
        %575 = sbr.rel (%p573) target = $region80
      $region79: #{tpu_custom_call.1} parent=5 // pred_region
        // Predicated region
        $region81: #{tpu_custom_call.1} parent=79 // pred_check
          %p576 = pneg %p53
        $region82: #{tpu_custom_call.1} parent=79 // pred_check_branch
          %578 = sbr.rel (%p576) target = $region84
        $region83: #{tpu_custom_call.1} parent=79 // pred_region
          %s579 = sand.u32 %s43, 1
          %s580 = scalar_lea.sflag [#allocation6], %s579
          %s581 = sand.u32 %s43, 1
          %s582 = smul.addr %s581, 4
          %s583 = scalar_lea.vmem [#allocation5], %s582
          %585 = vsyncadd %s580, 0
          %s586 = smul.addr %s33, 4
          %s587 = scalar_lea.hbm %s0, %s586
          %s589 = sshll.u32 %s587, 4
          %s590 = int_to_ptr.hbm [resolvable:$true] %s589
          %s591 = sshll.u32 %s583, 4
          %s592 = int_to_ptr.vmem [resolvable:$true] %s591
          %594 = dma.hbm_to_vmem [thread:$0]  %s590, 64, %s592, %s580
        $region84: #{tpu_custom_call.1} parent=79 // pred_fallthru
          _
      $region80: #{tpu_custom_call.1} parent=5 // pred_fallthru
        _
      %p595 = scmp.le.s32.totalorder 1, %s33
      %p596 = scmp.lt.s32.totalorder %s33, 3
      %p597 = pnand %p595, %p596
      %p598 = pneg %p597
      // Predicated region
      $region85: #{tpu_custom_call.1} parent=5 // pred_check
        _
      $region86: #{tpu_custom_call.1} parent=5 // pred_check_branch
        %600 = sbr.rel (%p597) target = $region88
      $region87: #{tpu_custom_call.1} parent=5 // pred_region
        %s601 = ssub.s32 %s33, 1
        %s602 = sand.u32 %s46, 1
        %s603 = scalar_lea.sflag [#allocation6], %s602
        %s604 = sand.u32 %s46, 1
        %s605 = smul.addr %s604, 4
        %s606 = scalar_lea.vmem [#allocation5], %s605
        // Predicated region
        $region89: #{tpu_custom_call.1} parent=87 // pred_check
          %p607 = pneg %p59
        $region90: #{tpu_custom_call.1} parent=87 // pred_check_branch
          %609 = sbr.rel (%p607) target = $region92
        $region91: #{tpu_custom_call.1} parent=87 // pred_region
          %611 = dma.done %s603, 64
        $region92: #{tpu_custom_call.1} parent=87 // pred_fallthru
          _
        // Predicated region
        $region93: #{tpu_custom_call.1} parent=87 // pred_check
          %p612 = pneg %p80
        $region94: #{tpu_custom_call.1} parent=87 // pred_check_branch
          %614 = sbr.rel (%p612) target = $region96
        $region95: #{tpu_custom_call.1} parent=87 // pred_region
          %616 = dma.done [#allocation9], 1024
        $region96: #{tpu_custom_call.1} parent=87 // pred_fallthru
          _
        // Predicated region
        $region97: #{tpu_custom_call.1} parent=87 // pred_check
          %p617 = pneg %p122
        $region98: #{tpu_custom_call.1} parent=87 // pred_check_branch
          %619 = sbr.rel (%p617) target = $region100
        $region99: #{tpu_custom_call.1} parent=87 // pred_region
          %621 = dma.done [#allocation9], 2048
        $region100: #{tpu_custom_call.1} parent=87 // pred_fallthru
          _
        // Predicated region
        $region101: #{tpu_custom_call.1} parent=87 // pred_check
          %p622 = pneg %p164
        $region102: #{tpu_custom_call.1} parent=87 // pred_check_branch
          %624 = sbr.rel (%p622) target = $region104
        $region103: #{tpu_custom_call.1} parent=87 // pred_region
          %626 = dma.done [#allocation12], 2048
        $region104: #{tpu_custom_call.1} parent=87 // pred_fallthru
          _
        // Predicated region
        $region105: #{tpu_custom_call.1} parent=87 // pred_check
          %p627 = pneg %p206
        $region106: #{tpu_custom_call.1} parent=87 // pred_check_branch
          %629 = sbr.rel (%p627) target = $region108
        $region107: #{tpu_custom_call.1} parent=87 // pred_region
          %631 = dma.done [#allocation12], 2048
        $region108: #{tpu_custom_call.1} parent=87 // pred_fallthru
          _
        // Predicated region
        $region109: #{tpu_custom_call.1} parent=87 // pred_check
          %p632 = pneg %p248
        $region110: #{tpu_custom_call.1} parent=87 // pred_check_branch
          %634 = sbr.rel (%p632) target = $region112
        $region111: #{tpu_custom_call.1} parent=87 // pred_region
          %636 = dma.done [#allocation15], 2048
        $region112: #{tpu_custom_call.1} parent=87 // pred_fallthru
          _
        // Predicated region
        $region113: #{tpu_custom_call.1} parent=87 // pred_check
          %p637 = pneg %p290
        $region114: #{tpu_custom_call.1} parent=87 // pred_check_branch
          %639 = sbr.rel (%p637) target = $region116
        $region115: #{tpu_custom_call.1} parent=87 // pred_region
          %641 = dma.done [#allocation15], 3072
        $region116: #{tpu_custom_call.1} parent=87 // pred_fallthru
          _
        // Predicated region
        $region117: #{tpu_custom_call.1} parent=87 // pred_check
          %p642 = pneg %p332
        $region118: #{tpu_custom_call.1} parent=87 // pred_check_branch
          %644 = sbr.rel (%p642) target = $region120
        $region119: #{tpu_custom_call.1} parent=87 // pred_region
          %646 = dma.done [#allocation18], 3072
        $region120: #{tpu_custom_call.1} parent=87 // pred_fallthru
          _
        // Predicated region
        $region121: #{tpu_custom_call.1} parent=87 // pred_check
          %p647 = pneg %p374
        $region122: #{tpu_custom_call.1} parent=87 // pred_check_branch
          %649 = sbr.rel (%p647) target = $region124
        $region123: #{tpu_custom_call.1} parent=87 // pred_region
          %651 = dma.done [#allocation18], 1024
        $region124: #{tpu_custom_call.1} parent=87 // pred_fallthru
          _
        %s652 = sand.u32 %s46, 1
        %s653 = scalar_lea.sflag [#allocation6], %s652
        %s654 = sand.u32 %s46, 1
        %s655 = smul.addr %s654, 4
        %s656 = scalar_lea.vmem [#allocation5], %s655
        %p657 = pneg %p59
        %p658 = pneg %p56
        %p659 = pneg %p80
        %p660 = pneg %p77
        %p661 = pneg %p101
        %p662 = pneg %p98
        %p663 = pneg %p122
        %p664 = pneg %p119
        %p665 = pneg %p143
        %p666 = pneg %p140
        %p667 = pneg %p164
        %p668 = pneg %p161
        %p669 = pneg %p185
        %p670 = pneg %p182
        %p671 = pneg %p206
        %p672 = pneg %p203
        %p673 = pneg %p227
        %p674 = pneg %p224
        %p675 = pneg %p248
        %p676 = pneg %p245
        %p677 = pneg %p269
        %p678 = pneg %p266
        %p679 = pneg %p290
        %p680 = pneg %p287
        %p681 = pneg %p311
        %p682 = pneg %p308
        %p683 = pneg %p332
        %p684 = pneg %p329
        %p685 = pneg %p353
        %p686 = pneg %p350
        %p687 = pneg %p374
        %p688 = pneg %p371
        %p689 = pneg %p395
        %p690 = pneg %p392
        %p691 = pneg %p421
        %p692 = pneg %p418
        %s693 = sand.u32 %s408, 1
        %s694 = scalar_lea.sflag [#allocation7], %s693
        %s695 = sand.u32 %s408, 1
        %s696 = smul.addr %s695, 8
        %s697 = scalar_lea.vmem [#allocation20], %s696
        %v699 = vld [vmem:[%s606] sm:$0xf]
        %v700 = vld [vmem:[#allocation8] sm:$0xf]
        %v701 = vld [vmem:[#allocation8 + $0x4] sm:$0xf]
        %v702 = vld [vmem:[#allocation8 + $0x8] sm:$0xf]
        %v703 = vld [vmem:[#allocation8 + $0xc] sm:$0xf]
        %v704 = vld [vmem:[#allocation8 + $0x10] sm:$0xf]
        %v705 = vld [vmem:[#allocation8 + $0x14] sm:$0xf]
        %v706 = vld [vmem:[#allocation8 + $0x18] sm:$0xf]
        %v707 = vld [vmem:[#allocation8 + $0x1c] sm:$0xf]
        %v708 = vld [vmem:[#allocation8 + $0x20] sm:$0xf]
        %v709 = vld [vmem:[#allocation8 + $0x24] sm:$0xf]
        %v710 = vld [vmem:[#allocation8 + $0x28] sm:$0xf]
        %v711 = vld [vmem:[#allocation8 + $0x2c] sm:$0xf]
        %v712 = vld [vmem:[#allocation8 + $0x30] sm:$0xf]
        %v713 = vld [vmem:[#allocation8 + $0x34] sm:$0xf]
        %v714 = vld [vmem:[#allocation8 + $0x38] sm:$0xf]
        %v715 = vld [vmem:[#allocation8 + $0x3c] sm:$0xf]
        %v716 = vld [vmem:[%s2] sm:$0x1]
        %v718 = vperm.slane %v716, 0
        %v736 = vunpack.c.l.b16 %v700
        %v737 = vunpack.c.l.b16 %v701
        %v738 = vunpack.c.l.b16 %v702
        %v739 = vunpack.c.l.b16 %v703
        %v740 = vunpack.c.l.b16 %v704
        %v741 = vunpack.c.l.b16 %v705
        %v742 = vunpack.c.l.b16 %v706
        %v743 = vunpack.c.l.b16 %v707
        %v744 = vunpack.c.l.b16 %v708
        %v745 = vunpack.c.l.b16 %v709
        %v746 = vunpack.c.l.b16 %v710
        %v747 = vunpack.c.l.b16 %v711
        %v748 = vunpack.c.l.b16 %v712
        %v749 = vunpack.c.l.b16 %v713
        %v750 = vunpack.c.l.b16 %v714
        %v751 = vunpack.c.l.b16 %v715
        %v752 = vpack.c.b16 %v737, %v736
        %v753 = vpack.c.b16 %v739, %v738
        %v754 = vpack.c.b16 %v741, %v740
        %v755 = vpack.c.b16 %v743, %v742
        %v756 = vpack.c.b16 %v745, %v744
        %v757 = vpack.c.b16 %v747, %v746
        %v758 = vpack.c.b16 %v749, %v748
        %v759 = vpack.c.b16 %v751, %v750
        %768 = vmatpush.bf16.msra.mxu0 %v759
        %769 = vmatpush.bf16.msra.mxu0 %v758
        %770 = vmatpush.bf16.msra.mxu0 %v757
        %771 = vmatpush.bf16.msra.mxu0 %v756
        %772 = vmatpush.bf16.msra.mxu0 %v755
        %773 = vmatpush.bf16.msra.mxu0 %v754
        %774 = vmatpush.bf16.msra.mxu0 %v753
        %775 = vmatpush.bf16.msra.mxu0 %v752
        %776 = vmatmul.bf16.gmra.mxu0 %v699
        %v777 = vpop.f32.mrf.mxu0
        %v778 = vadd.f32 %v718, %v777
        %v779 = vpop.f32.mrf.mxu0
        %780 = vdwg.mxu0
        %v781 = vtanh.pop %v778
        %v782 = vpack.c.bf16 %v781, %v781
        %783 = vst [vmem:[#allocation2] sm:$0xf] 0
        %784 = vst [vmem:[#allocation2 + $0x4] sm:$0xf] 0
        %785 = vst [vmem:[#allocation2 + $0x8] sm:$0x1] 0
        %786 = vst [vmem:[#allocation3] sm:$0xf] 0
        %787 = vst [vmem:[#allocation3 + $0x4] sm:$0xf] 0
        %788 = vst [vmem:[#allocation3 + $0x8] sm:$0x1] 0
        %789 = vst [vmem:[#allocation2 + $0x4] sm:$0xf] %v782
        %790 = vst [vmem:[#allocation4] sm:$0xff] %v781
        %v791 = vld [vmem:[#allocation2 + $0x4] sm:$0xf]
        %v792 = vld [vmem:[#allocation2 + $0x8] sm:$0x1]
        %v795 = vunpack.c.l.b16 %v791
        %v796 = vunpack.c.l.b16 %v792
        %v797 = vpack.c.b16 %v796, %v795
        %v799 = vshrl.u32 %v797, 16
        %v801 = vshll.u32 %v797, 16
        %v803 = vrot.slane %v801, 1
        %v804 = vor.u32 %v799, %v803
        %v806 = vld [vmem:[#allocation10] sm:$0xf]
        %v807 = vld [vmem:[#allocation10 + $0x4] sm:$0xf]
        %v808 = vld [vmem:[#allocation10 + $0x8] sm:$0xf]
        %v809 = vld [vmem:[#allocation10 + $0xc] sm:$0xf]
        %v810 = vld [vmem:[#allocation10 + $0x10] sm:$0xf]
        %v811 = vld [vmem:[#allocation10 + $0x14] sm:$0xf]
        %v812 = vld [vmem:[#allocation10 + $0x18] sm:$0xf]
        %v813 = vld [vmem:[#allocation10 + $0x1c] sm:$0xf]
        %v814 = vld [vmem:[#allocation10 + $0x20] sm:$0xf]
        %v815 = vld [vmem:[#allocation10 + $0x24] sm:$0xf]
        %v816 = vld [vmem:[#allocation10 + $0x28] sm:$0xf]
        %v817 = vld [vmem:[#allocation10 + $0x2c] sm:$0xf]
        %v818 = vld [vmem:[#allocation10 + $0x30] sm:$0xf]
        %v819 = vld [vmem:[#allocation10 + $0x34] sm:$0xf]
        %v820 = vld [vmem:[#allocation10 + $0x38] sm:$0xf]
        %v821 = vld [vmem:[#allocation10 + $0x3c] sm:$0xf]
        %v822 = vld [vmem:[#allocation10 + $0x40] sm:$0xf]
        %v823 = vld [vmem:[#allocation10 + $0x44] sm:$0xf]
        %v824 = vld [vmem:[#allocation10 + $0x48] sm:$0xf]
        %v825 = vld [vmem:[#allocation10 + $0x4c] sm:$0xf]
        %v826 = vld [vmem:[#allocation10 + $0x50] sm:$0xf]
        %v827 = vld [vmem:[#allocation10 + $0x54] sm:$0xf]
        %v828 = vld [vmem:[#allocation10 + $0x58] sm:$0xf]
        %v829 = vld [vmem:[#allocation10 + $0x5c] sm:$0xf]
        %v830 = vld [vmem:[#allocation10 + $0x60] sm:$0xf]
        %v831 = vld [vmem:[#allocation10 + $0x64] sm:$0xf]
        %v832 = vld [vmem:[#allocation10 + $0x68] sm:$0xf]
        %v833 = vld [vmem:[#allocation10 + $0x6c] sm:$0xf]
        %v834 = vld [vmem:[#allocation10 + $0x70] sm:$0xf]
        %v835 = vld [vmem:[#allocation10 + $0x74] sm:$0xf]
        %v836 = vld [vmem:[#allocation10 + $0x78] sm:$0xf]
        %v837 = vld [vmem:[#allocation10 + $0x7c] sm:$0xf]
        %v838 = vld [vmem:[%s4] sm:$0x1]
        %v840 = vperm.slane %v838, 0
        %v874 = vunpack.c.l.b16 %v806
        %v875 = vunpack.c.l.b16 %v807
        %v876 = vunpack.c.l.b16 %v808
        %v877 = vunpack.c.l.b16 %v809
        %v878 = vunpack.c.l.b16 %v810
        %v879 = vunpack.c.l.b16 %v811
        %v880 = vunpack.c.l.b16 %v812
        %v881 = vunpack.c.l.b16 %v813
        %v882 = vunpack.c.l.b16 %v814
        %v883 = vunpack.c.l.b16 %v815
        %v884 = vunpack.c.l.b16 %v816
        %v885 = vunpack.c.l.b16 %v817
        %v886 = vunpack.c.l.b16 %v818
        %v887 = vunpack.c.l.b16 %v819
        %v888 = vunpack.c.l.b16 %v820
        %v889 = vunpack.c.l.b16 %v821
        %v890 = vunpack.c.l.b16 %v822
        %v891 = vunpack.c.l.b16 %v823
        %v892 = vunpack.c.l.b16 %v824
        %v893 = vunpack.c.l.b16 %v825
        %v894 = vunpack.c.l.b16 %v826
        %v895 = vunpack.c.l.b16 %v827
        %v896 = vunpack.c.l.b16 %v828
        %v897 = vunpack.c.l.b16 %v829
        %v898 = vunpack.c.l.b16 %v830
        %v899 = vunpack.c.l.b16 %v831
        %v900 = vunpack.c.l.b16 %v832
        %v901 = vunpack.c.l.b16 %v833
        %v902 = vunpack.c.l.b16 %v834
        %v903 = vunpack.c.l.b16 %v835
        %v904 = vunpack.c.l.b16 %v836
        %v905 = vunpack.c.l.b16 %v837
        %v906 = vpack.c.b16 %v875, %v874
        %v907 = vpack.c.b16 %v877, %v876
        %v908 = vpack.c.b16 %v879, %v878
        %v909 = vpack.c.b16 %v881, %v880
        %v910 = vpack.c.b16 %v883, %v882
        %v911 = vpack.c.b16 %v885, %v884
        %v912 = vpack.c.b16 %v887, %v886
        %v913 = vpack.c.b16 %v889, %v888
        %v914 = vpack.c.b16 %v891, %v890
        %v915 = vpack.c.b16 %v893, %v892
        %v916 = vpack.c.b16 %v895, %v894
        %v917 = vpack.c.b16 %v897, %v896
        %v918 = vpack.c.b16 %v899, %v898
        %v919 = vpack.c.b16 %v901, %v900
        %v920 = vpack.c.b16 %v903, %v902
        %v921 = vpack.c.b16 %v905, %v904
        %938 = vmatpush.bf16.msra.mxu0 %v913
        %939 = vmatpush.bf16.msra.mxu0 %v912
        %940 = vmatpush.bf16.msra.mxu0 %v911
        %941 = vmatpush.bf16.msra.mxu0 %v910
        %942 = vmatpush.bf16.msra.mxu0 %v909
        %943 = vmatpush.bf16.msra.mxu0 %v908
        %944 = vmatpush.bf16.msra.mxu0 %v907
        %945 = vmatpush.bf16.msra.mxu0 %v906
        %946 = vmatmul.bf16.gmra.mxu0 %v791
        %v947 = vpop.f32.mrf.mxu0
        %v948 = vadd.f32 %v840, %v947
        %v949 = vpop.f32.mrf.mxu0
        %950 = vdwg.mxu0
        %951 = vmatpush.bf16.msra.mxu0 %v921
        %952 = vmatpush.bf16.msra.mxu0 %v920
        %953 = vmatpush.bf16.msra.mxu0 %v919
        %954 = vmatpush.bf16.msra.mxu0 %v918
        %955 = vmatpush.bf16.msra.mxu0 %v917
        %956 = vmatpush.bf16.msra.mxu0 %v916
        %957 = vmatpush.bf16.msra.mxu0 %v915
        %958 = vmatpush.bf16.msra.mxu0 %v914
        %959 = vmatmul.bf16.gmra.mxu0 %v804
        %v960 = vpop.f32.mrf.mxu0
        %v961 = vadd.f32 %v948, %v960
        %v962 = vpop.f32.mrf.mxu0
        %963 = vdwg.mxu0
        %v964 = vtanh.pop %v961
        %v965 = vld [vmem:[#allocation2] sm:$0x8]
        %v967 = vunpack.c.l.b16 %v965
        %v968 = vpack.c.b16 %v795, %v967
        %v969 = vpack.c.b16 %v795, %v795
        %v971 = vshrl.u32 %v969, 16
        %v973 = vrot.slane %v971, 4
        %v974 = vshll.u32 %v969, 16
        %v976 = vrot.slane %v974, 5
        %v977 = vor.u32 %v973, %v976
        %v978 = vld [vmem:[#allocation11] sm:$0xf]
        %v979 = vld [vmem:[#allocation11 + $0x4] sm:$0xf]
        %v980 = vld [vmem:[#allocation11 + $0x8] sm:$0xf]
        %v981 = vld [vmem:[#allocation11 + $0xc] sm:$0xf]
        %v982 = vld [vmem:[#allocation11 + $0x10] sm:$0xf]
        %v983 = vld [vmem:[#allocation11 + $0x14] sm:$0xf]
        %v984 = vld [vmem:[#allocation11 + $0x18] sm:$0xf]
        %v985 = vld [vmem:[#allocation11 + $0x1c] sm:$0xf]
        %v986 = vld [vmem:[#allocation11 + $0x20] sm:$0xf]
        %v987 = vld [vmem:[#allocation11 + $0x24] sm:$0xf]
        %v988 = vld [vmem:[#allocation11 + $0x28] sm:$0xf]
        %v989 = vld [vmem:[#allocation11 + $0x2c] sm:$0xf]
        %v990 = vld [vmem:[#allocation11 + $0x30] sm:$0xf]
        %v991 = vld [vmem:[#allocation11 + $0x34] sm:$0xf]
        %v992 = vld [vmem:[#allocation11 + $0x38] sm:$0xf]
        %v993 = vld [vmem:[#allocation11 + $0x3c] sm:$0xf]
        %v994 = vld [vmem:[#allocation11 + $0x40] sm:$0xf]
        %v995 = vld [vmem:[#allocation11 + $0x44] sm:$0xf]
        %v996 = vld [vmem:[#allocation11 + $0x48] sm:$0xf]
        %v997 = vld [vmem:[#allocation11 + $0x4c] sm:$0xf]
        %v998 = vld [vmem:[#allocation11 + $0x50] sm:$0xf]
        %v999 = vld [vmem:[#allocation11 + $0x54] sm:$0xf]
        %v1000 = vld [vmem:[#allocation11 + $0x58] sm:$0xf]
        %v1001 = vld [vmem:[#allocation11 + $0x5c] sm:$0xf]
        %v1002 = vld [vmem:[#allocation11 + $0x60] sm:$0xf]
        %v1003 = vld [vmem:[#allocation11 + $0x64] sm:$0xf]
        %v1004 = vld [vmem:[#allocation11 + $0x68] sm:$0xf]
        %v1005 = vld [vmem:[#allocation11 + $0x6c] sm:$0xf]
        %v1006 = vld [vmem:[#allocation11 + $0x70] sm:$0xf]
        %v1007 = vld [vmem:[#allocation11 + $0x74] sm:$0xf]
        %v1008 = vld [vmem:[#allocation11 + $0x78] sm:$0xf]
        %v1009 = vld [vmem:[#allocation11 + $0x7c] sm:$0xf]
        %v1010 = vld [vmem:[%s6] sm:$0x1]
        %v1012 = vperm.slane %v1010, 0
        %v1015 = vshrl.u32 %v968, 16
        %v1017 = vrot.slane %v1015, 3
        %v1018 = vshll.u32 %v968, 16
        %v1020 = vrot.slane %v1018, 4
        %v1021 = vor.u32 %v1017, %v1020
        %v1023 = vshrl.u32 %v977, 16
        %v1025 = vrot.slane %v1023, 3
        %v1026 = vshll.u32 %v977, 16
        %v1028 = vrot.slane %v1026, 4
        %v1029 = vor.u32 %v1025, %v1028
        %v1064 = vunpack.c.l.b16 %v978
        %v1065 = vunpack.c.l.b16 %v979
        %v1066 = vunpack.c.l.b16 %v980
        %v1067 = vunpack.c.l.b16 %v981
        %v1068 = vunpack.c.l.b16 %v982
        %v1069 = vunpack.c.l.b16 %v983
        %v1070 = vunpack.c.l.b16 %v984
        %v1071 = vunpack.c.l.b16 %v985
        %v1072 = vunpack.c.l.b16 %v986
        %v1073 = vunpack.c.l.b16 %v987
        %v1074 = vunpack.c.l.b16 %v988
        %v1075 = vunpack.c.l.b16 %v989
        %v1076 = vunpack.c.l.b16 %v990
        %v1077 = vunpack.c.l.b16 %v991
        %v1078 = vunpack.c.l.b16 %v992
        %v1079 = vunpack.c.l.b16 %v993
        %v1080 = vunpack.c.l.b16 %v994
        %v1081 = vunpack.c.l.b16 %v995
        %v1082 = vunpack.c.l.b16 %v996
        %v1083 = vunpack.c.l.b16 %v997
        %v1084 = vunpack.c.l.b16 %v998
        %v1085 = vunpack.c.l.b16 %v999
        %v1086 = vunpack.c.l.b16 %v1000
        %v1087 = vunpack.c.l.b16 %v1001
        %v1088 = vunpack.c.l.b16 %v1002
        %v1089 = vunpack.c.l.b16 %v1003
        %v1090 = vunpack.c.l.b16 %v1004
        %v1091 = vunpack.c.l.b16 %v1005
        %v1092 = vunpack.c.l.b16 %v1006
        %v1093 = vunpack.c.l.b16 %v1007
        %v1094 = vunpack.c.l.b16 %v1008
        %v1095 = vunpack.c.l.b16 %v1009
        %v1096 = vpack.c.b16 %v1065, %v1064
        %v1097 = vpack.c.b16 %v1067, %v1066
        %v1098 = vpack.c.b16 %v1069, %v1068
        %v1099 = vpack.c.b16 %v1071, %v1070
        %v1100 = vpack.c.b16 %v1073, %v1072
        %v1101 = vpack.c.b16 %v1075, %v1074
        %v1102 = vpack.c.b16 %v1077, %v1076
        %v1103 = vpack.c.b16 %v1079, %v1078
        %v1104 = vpack.c.b16 %v1081, %v1080
        %v1105 = vpack.c.b16 %v1083, %v1082
        %v1106 = vpack.c.b16 %v1085, %v1084
        %v1107 = vpack.c.b16 %v1087, %v1086
        %v1108 = vpack.c.b16 %v1089, %v1088
        %v1109 = vpack.c.b16 %v1091, %v1090
        %v1110 = vpack.c.b16 %v1093, %v1092
        %v1111 = vpack.c.b16 %v1095, %v1094
        %1128 = vmatpush.bf16.msra.mxu0 %v1103
        %1129 = vmatpush.bf16.msra.mxu0 %v1102
        %1130 = vmatpush.bf16.msra.mxu0 %v1101
        %1131 = vmatpush.bf16.msra.mxu0 %v1100
        %1132 = vmatpush.bf16.msra.mxu0 %v1099
        %1133 = vmatpush.bf16.msra.mxu0 %v1098
        %1134 = vmatpush.bf16.msra.mxu0 %v1097
        %1135 = vmatpush.bf16.msra.mxu0 %v1096
        %1136 = vmatmul.bf16.gmra.mxu0 %v1021
        %v1137 = vpop.f32.mrf.mxu0
        %v1138 = vadd.f32 %v1012, %v1137
        %v1139 = vpop.f32.mrf.mxu0
        %1140 = vdwg.mxu0
        %1141 = vmatpush.bf16.msra.mxu0 %v1111
        %1142 = vmatpush.bf16.msra.mxu0 %v1110
        %1143 = vmatpush.bf16.msra.mxu0 %v1109
        %1144 = vmatpush.bf16.msra.mxu0 %v1108
        %1145 = vmatpush.bf16.msra.mxu0 %v1107
        %1146 = vmatpush.bf16.msra.mxu0 %v1106
        %1147 = vmatpush.bf16.msra.mxu0 %v1105
        %1148 = vmatpush.bf16.msra.mxu0 %v1104
        %1149 = vmatmul.bf16.gmra.mxu0 %v1029
        %v1150 = vpop.f32.mrf.mxu0
        %v1151 = vadd.f32 %v1138, %v1150
        %v1152 = vpop.f32.mrf.mxu0
        %1153 = vdwg.mxu0
        %v1154 = vtanh.pop %v1151
        %v1155 = vadd.f32 %v964, %v1154
        %v1156 = vpack.c.bf16 %v1155, %v1155
        %1157 = vst [vmem:[#allocation3 + $0x4] sm:$0xf] %v1156
        %v1158 = vld [vmem:[#allocation3 + $0x4] sm:$0xf]
        %v1159 = vld [vmem:[#allocation3 + $0x8] sm:$0x1]
        %v1162 = vunpack.c.l.b16 %v1158
        %v1163 = vunpack.c.l.b16 %v1159
        %v1164 = vpack.c.b16 %v1163, %v1162
        %v1166 = vshrl.u32 %v1164, 16
        %v1168 = vshll.u32 %v1164, 16
        %v1170 = vrot.slane %v1168, 1
        %v1171 = vor.u32 %v1166, %v1170
        %v1173 = vld [vmem:[#allocation13] sm:$0xf]
        %v1174 = vld [vmem:[#allocation13 + $0x4] sm:$0xf]
        %v1175 = vld [vmem:[#allocation13 + $0x8] sm:$0xf]
        %v1176 = vld [vmem:[#allocation13 + $0xc] sm:$0xf]
        %v1177 = vld [vmem:[#allocation13 + $0x10] sm:$0xf]
        %v1178 = vld [vmem:[#allocation13 + $0x14] sm:$0xf]
        %v1179 = vld [vmem:[#allocation13 + $0x18] sm:$0xf]
        %v1180 = vld [vmem:[#allocation13 + $0x1c] sm:$0xf]
        %v1181 = vld [vmem:[#allocation13 + $0x20] sm:$0xf]
        %v1182 = vld [vmem:[#allocation13 + $0x24] sm:$0xf]
        %v1183 = vld [vmem:[#allocation13 + $0x28] sm:$0xf]
        %v1184 = vld [vmem:[#allocation13 + $0x2c] sm:$0xf]
        %v1185 = vld [vmem:[#allocation13 + $0x30] sm:$0xf]
        %v1186 = vld [vmem:[#allocation13 + $0x34] sm:$0xf]
        %v1187 = vld [vmem:[#allocation13 + $0x38] sm:$0xf]
        %v1188 = vld [vmem:[#allocation13 + $0x3c] sm:$0xf]
        %v1189 = vld [vmem:[#allocation13 + $0x40] sm:$0xf]
        %v1190 = vld [vmem:[#allocation13 + $0x44] sm:$0xf]
        %v1191 = vld [vmem:[#allocation13 + $0x48] sm:$0xf]
        %v1192 = vld [vmem:[#allocation13 + $0x4c] sm:$0xf]
        %v1193 = vld [vmem:[#allocation13 + $0x50] sm:$0xf]
        %v1194 = vld [vmem:[#allocation13 + $0x54] sm:$0xf]
        %v1195 = vld [vmem:[#allocation13 + $0x58] sm:$0xf]
        %v1196 = vld [vmem:[#allocation13 + $0x5c] sm:$0xf]
        %v1197 = vld [vmem:[#allocation13 + $0x60] sm:$0xf]
        %v1198 = vld [vmem:[#allocation13 + $0x64] sm:$0xf]
        %v1199 = vld [vmem:[#allocation13 + $0x68] sm:$0xf]
        %v1200 = vld [vmem:[#allocation13 + $0x6c] sm:$0xf]
        %v1201 = vld [vmem:[#allocation13 + $0x70] sm:$0xf]
        %v1202 = vld [vmem:[#allocation13 + $0x74] sm:$0xf]
        %v1203 = vld [vmem:[#allocation13 + $0x78] sm:$0xf]
        %v1204 = vld [vmem:[#allocation13 + $0x7c] sm:$0xf]
        %v1205 = vld [vmem:[%s8] sm:$0x1]
        %v1207 = vperm.slane %v1205, 0
        %v1241 = vunpack.c.l.b16 %v1173
        %v1242 = vunpack.c.l.b16 %v1174
        %v1243 = vunpack.c.l.b16 %v1175
        %v1244 = vunpack.c.l.b16 %v1176
        %v1245 = vunpack.c.l.b16 %v1177
        %v1246 = vunpack.c.l.b16 %v1178
        %v1247 = vunpack.c.l.b16 %v1179
        %v1248 = vunpack.c.l.b16 %v1180
        %v1249 = vunpack.c.l.b16 %v1181
        %v1250 = vunpack.c.l.b16 %v1182
        %v1251 = vunpack.c.l.b16 %v1183
        %v1252 = vunpack.c.l.b16 %v1184
        %v1253 = vunpack.c.l.b16 %v1185
        %v1254 = vunpack.c.l.b16 %v1186
        %v1255 = vunpack.c.l.b16 %v1187
        %v1256 = vunpack.c.l.b16 %v1188
        %v1257 = vunpack.c.l.b16 %v1189
        %v1258 = vunpack.c.l.b16 %v1190
        %v1259 = vunpack.c.l.b16 %v1191
        %v1260 = vunpack.c.l.b16 %v1192
        %v1261 = vunpack.c.l.b16 %v1193
        %v1262 = vunpack.c.l.b16 %v1194
        %v1263 = vunpack.c.l.b16 %v1195
        %v1264 = vunpack.c.l.b16 %v1196
        %v1265 = vunpack.c.l.b16 %v1197
        %v1266 = vunpack.c.l.b16 %v1198
        %v1267 = vunpack.c.l.b16 %v1199
        %v1268 = vunpack.c.l.b16 %v1200
        %v1269 = vunpack.c.l.b16 %v1201
        %v1270 = vunpack.c.l.b16 %v1202
        %v1271 = vunpack.c.l.b16 %v1203
        %v1272 = vunpack.c.l.b16 %v1204
        %v1273 = vpack.c.b16 %v1242, %v1241
        %v1274 = vpack.c.b16 %v1244, %v1243
        %v1275 = vpack.c.b16 %v1246, %v1245
        %v1276 = vpack.c.b16 %v1248, %v1247
        %v1277 = vpack.c.b16 %v1250, %v1249
        %v1278 = vpack.c.b16 %v1252, %v1251
        %v1279 = vpack.c.b16 %v1254, %v1253
        %v1280 = vpack.c.b16 %v1256, %v1255
        %v1281 = vpack.c.b16 %v1258, %v1257
        %v1282 = vpack.c.b16 %v1260, %v1259
        %v1283 = vpack.c.b16 %v1262, %v1261
        %v1284 = vpack.c.b16 %v1264, %v1263
        %v1285 = vpack.c.b16 %v1266, %v1265
        %v1286 = vpack.c.b16 %v1268, %v1267
        %v1287 = vpack.c.b16 %v1270, %v1269
        %v1288 = vpack.c.b16 %v1272, %v1271
        %1305 = vmatpush.bf16.msra.mxu0 %v1280
        %1306 = vmatpush.bf16.msra.mxu0 %v1279
        %1307 = vmatpush.bf16.msra.mxu0 %v1278
        %1308 = vmatpush.bf16.msra.mxu0 %v1277
        %1309 = vmatpush.bf16.msra.mxu0 %v1276
        %1310 = vmatpush.bf16.msra.mxu0 %v1275
        %1311 = vmatpush.bf16.msra.mxu0 %v1274
        %1312 = vmatpush.bf16.msra.mxu0 %v1273
        %1313 = vmatmul.bf16.gmra.mxu0 %v1158
        %v1314 = vpop.f32.mrf.mxu0
        %v1315 = vadd.f32 %v1207, %v1314
        %v1316 = vpop.f32.mrf.mxu0
        %1317 = vdwg.mxu0
        %1318 = vmatpush.bf16.msra.mxu0 %v1288
        %1319 = vmatpush.bf16.msra.mxu0 %v1287
        %1320 = vmatpush.bf16.msra.mxu0 %v1286
        %1321 = vmatpush.bf16.msra.mxu0 %v1285
        %1322 = vmatpush.bf16.msra.mxu0 %v1284
        %1323 = vmatpush.bf16.msra.mxu0 %v1283
        %1324 = vmatpush.bf16.msra.mxu0 %v1282
        %1325 = vmatpush.bf16.msra.mxu0 %v1281
        %1326 = vmatmul.bf16.gmra.mxu0 %v1171
        %v1327 = vpop.f32.mrf.mxu0
        %v1328 = vadd.f32 %v1315, %v1327
        %v1329 = vpop.f32.mrf.mxu0
        %1330 = vdwg.mxu0
        %v1331 = vtanh.pop %v1328
        %v1332 = vld [vmem:[#allocation3] sm:$0x8]
        %v1333 = vld [vmem:[#allocation3 + $0x4] sm:$0x7]
        %v1336 = vunpack.c.l.b16 %v1332
        %v1337 = vunpack.c.l.b16 %v1333
        %v1338 = vpack.c.b16 %v1337, %v1336
        %v1339 = vpack.c.b16 %v1162, %v1336
        %v1341 = vshrl.u32 %v1339, 16
        %v1343 = vshll.u32 %v1339, 16
        %v1345 = vrot.slane %v1343, 1
        %v1346 = vor.u32 %v1341, %v1345
        %v1347 = vld [vmem:[#allocation14] sm:$0xf]
        %v1348 = vld [vmem:[#allocation14 + $0x4] sm:$0xf]
        %v1349 = vld [vmem:[#allocation14 + $0x8] sm:$0xf]
        %v1350 = vld [vmem:[#allocation14 + $0xc] sm:$0xf]
        %v1351 = vld [vmem:[#allocation14 + $0x10] sm:$0xf]
        %v1352 = vld [vmem:[#allocation14 + $0x14] sm:$0xf]
        %v1353 = vld [vmem:[#allocation14 + $0x18] sm:$0xf]
        %v1354 = vld [vmem:[#allocation14 + $0x1c] sm:$0xf]
        %v1355 = vld [vmem:[#allocation14 + $0x20] sm:$0xf]
        %v1356 = vld [vmem:[#allocation14 + $0x24] sm:$0xf]
        %v1357 = vld [vmem:[#allocation14 + $0x28] sm:$0xf]
        %v1358 = vld [vmem:[#allocation14 + $0x2c] sm:$0xf]
        %v1359 = vld [vmem:[#allocation14 + $0x30] sm:$0xf]
        %v1360 = vld [vmem:[#allocation14 + $0x34] sm:$0xf]
        %v1361 = vld [vmem:[#allocation14 + $0x38] sm:$0xf]
        %v1362 = vld [vmem:[#allocation14 + $0x3c] sm:$0xf]
        %v1363 = vld [vmem:[#allocation14 + $0x40] sm:$0xf]
        %v1364 = vld [vmem:[#allocation14 + $0x44] sm:$0xf]
        %v1365 = vld [vmem:[#allocation14 + $0x48] sm:$0xf]
        %v1366 = vld [vmem:[#allocation14 + $0x4c] sm:$0xf]
        %v1367 = vld [vmem:[#allocation14 + $0x50] sm:$0xf]
        %v1368 = vld [vmem:[#allocation14 + $0x54] sm:$0xf]
        %v1369 = vld [vmem:[#allocation14 + $0x58] sm:$0xf]
        %v1370 = vld [vmem:[#allocation14 + $0x5c] sm:$0xf]
        %v1371 = vld [vmem:[#allocation14 + $0x60] sm:$0xf]
        %v1372 = vld [vmem:[#allocation14 + $0x64] sm:$0xf]
        %v1373 = vld [vmem:[#allocation14 + $0x68] sm:$0xf]
        %v1374 = vld [vmem:[#allocation14 + $0x6c] sm:$0xf]
        %v1375 = vld [vmem:[#allocation14 + $0x70] sm:$0xf]
        %v1376 = vld [vmem:[#allocation14 + $0x74] sm:$0xf]
        %v1377 = vld [vmem:[#allocation14 + $0x78] sm:$0xf]
        %v1378 = vld [vmem:[#allocation14 + $0x7c] sm:$0xf]
        %v1379 = vld [vmem:[%s10] sm:$0x1]
        %v1381 = vperm.slane %v1379, 0
        %v1383 = vrot.slane %v1338, 3
        %v1384 = vrot.slane %v1346, 3
        %v1419 = vunpack.c.l.b16 %v1347
        %v1420 = vunpack.c.l.b16 %v1348
        %v1421 = vunpack.c.l.b16 %v1349
        %v1422 = vunpack.c.l.b16 %v1350
        %v1423 = vunpack.c.l.b16 %v1351
        %v1424 = vunpack.c.l.b16 %v1352
        %v1425 = vunpack.c.l.b16 %v1353
        %v1426 = vunpack.c.l.b16 %v1354
        %v1427 = vunpack.c.l.b16 %v1355
        %v1428 = vunpack.c.l.b16 %v1356
        %v1429 = vunpack.c.l.b16 %v1357
        %v1430 = vunpack.c.l.b16 %v1358
        %v1431 = vunpack.c.l.b16 %v1359
        %v1432 = vunpack.c.l.b16 %v1360
        %v1433 = vunpack.c.l.b16 %v1361
        %v1434 = vunpack.c.l.b16 %v1362
        %v1435 = vunpack.c.l.b16 %v1363
        %v1436 = vunpack.c.l.b16 %v1364
        %v1437 = vunpack.c.l.b16 %v1365
        %v1438 = vunpack.c.l.b16 %v1366
        %v1439 = vunpack.c.l.b16 %v1367
        %v1440 = vunpack.c.l.b16 %v1368
        %v1441 = vunpack.c.l.b16 %v1369
        %v1442 = vunpack.c.l.b16 %v1370
        %v1443 = vunpack.c.l.b16 %v1371
        %v1444 = vunpack.c.l.b16 %v1372
        %v1445 = vunpack.c.l.b16 %v1373
        %v1446 = vunpack.c.l.b16 %v1374
        %v1447 = vunpack.c.l.b16 %v1375
        %v1448 = vunpack.c.l.b16 %v1376
        %v1449 = vunpack.c.l.b16 %v1377
        %v1450 = vunpack.c.l.b16 %v1378
        %v1451 = vpack.c.b16 %v1420, %v1419
        %v1452 = vpack.c.b16 %v1422, %v1421
        %v1453 = vpack.c.b16 %v1424, %v1423
        %v1454 = vpack.c.b16 %v1426, %v1425
        %v1455 = vpack.c.b16 %v1428, %v1427
        %v1456 = vpack.c.b16 %v1430, %v1429
        %v1457 = vpack.c.b16 %v1432, %v1431
        %v1458 = vpack.c.b16 %v1434, %v1433
        %v1459 = vpack.c.b16 %v1436, %v1435
        %v1460 = vpack.c.b16 %v1438, %v1437
        %v1461 = vpack.c.b16 %v1440, %v1439
        %v1462 = vpack.c.b16 %v1442, %v1441
        %v1463 = vpack.c.b16 %v1444, %v1443
        %v1464 = vpack.c.b16 %v1446, %v1445
        %v1465 = vpack.c.b16 %v1448, %v1447
        %v1466 = vpack.c.b16 %v1450, %v1449
        %1483 = vmatpush.bf16.msra.mxu0 %v1458
        %1484 = vmatpush.bf16.msra.mxu0 %v1457
        %1485 = vmatpush.bf16.msra.mxu0 %v1456
        %1486 = vmatpush.bf16.msra.mxu0 %v1455
        %1487 = vmatpush.bf16.msra.mxu0 %v1454
        %1488 = vmatpush.bf16.msra.mxu0 %v1453
        %1489 = vmatpush.bf16.msra.mxu0 %v1452
        %1490 = vmatpush.bf16.msra.mxu0 %v1451
        %1491 = vmatmul.bf16.gmra.mxu0 %v1383
        %v1492 = vpop.f32.mrf.mxu0
        %v1493 = vadd.f32 %v1381, %v1492
        %v1494 = vpop.f32.mrf.mxu0
        %1495 = vdwg.mxu0
        %1496 = vmatpush.bf16.msra.mxu0 %v1466
        %1497 = vmatpush.bf16.msra.mxu0 %v1465
        %1498 = vmatpush.bf16.msra.mxu0 %v1464
        %1499 = vmatpush.bf16.msra.mxu0 %v1463
        %1500 = vmatpush.bf16.msra.mxu0 %v1462
        %1501 = vmatpush.bf16.msra.mxu0 %v1461
        %1502 = vmatpush.bf16.msra.mxu0 %v1460
        %1503 = vmatpush.bf16.msra.mxu0 %v1459
        %1504 = vmatmul.bf16.gmra.mxu0 %v1384
        %v1505 = vpop.f32.mrf.mxu0
        %v1506 = vadd.f32 %v1493, %v1505
        %v1507 = vpop.f32.mrf.mxu0
        %1508 = vdwg.mxu0
        %v1509 = vtanh.pop %v1506
        %v1510 = vadd.f32 %v1331, %v1509
        %v1511 = vld [vmem:[#allocation2 + $0x4] sm:$0xf]
        %v1512 = vld [vmem:[#allocation16] sm:$0xf]
        %v1513 = vld [vmem:[#allocation16 + $0x4] sm:$0xf]
        %v1514 = vld [vmem:[#allocation16 + $0x8] sm:$0xf]
        %v1515 = vld [vmem:[#allocation16 + $0xc] sm:$0xf]
        %v1516 = vld [vmem:[#allocation16 + $0x10] sm:$0xf]
        %v1517 = vld [vmem:[#allocation16 + $0x14] sm:$0xf]
        %v1518 = vld [vmem:[#allocation16 + $0x18] sm:$0xf]
        %v1519 = vld [vmem:[#allocation16 + $0x1c] sm:$0xf]
        %v1520 = vld [vmem:[#allocation16 + $0x20] sm:$0xf]
        %v1521 = vld [vmem:[#allocation16 + $0x24] sm:$0xf]
        %v1522 = vld [vmem:[#allocation16 + $0x28] sm:$0xf]
        %v1523 = vld [vmem:[#allocation16 + $0x2c] sm:$0xf]
        %v1524 = vld [vmem:[#allocation16 + $0x30] sm:$0xf]
        %v1525 = vld [vmem:[#allocation16 + $0x34] sm:$0xf]
        %v1526 = vld [vmem:[#allocation16 + $0x38] sm:$0xf]
        %v1527 = vld [vmem:[#allocation16 + $0x3c] sm:$0xf]
        %v1528 = vld [vmem:[#allocation2] sm:$0x8]
        %v1529 = vld [vmem:[#allocation2 + $0x4] sm:$0x7]
        %v1530 = vld [vmem:[#allocation17] sm:$0xf]
        %v1531 = vld [vmem:[#allocation17 + $0x4] sm:$0xf]
        %v1532 = vld [vmem:[#allocation17 + $0x8] sm:$0xf]
        %v1533 = vld [vmem:[#allocation17 + $0xc] sm:$0xf]
        %v1534 = vld [vmem:[#allocation17 + $0x10] sm:$0xf]
        %v1535 = vld [vmem:[#allocation17 + $0x14] sm:$0xf]
        %v1536 = vld [vmem:[#allocation17 + $0x18] sm:$0xf]
        %v1537 = vld [vmem:[#allocation17 + $0x1c] sm:$0xf]
        %v1538 = vld [vmem:[#allocation17 + $0x20] sm:$0xf]
        %v1539 = vld [vmem:[#allocation17 + $0x24] sm:$0xf]
        %v1540 = vld [vmem:[#allocation17 + $0x28] sm:$0xf]
        %v1541 = vld [vmem:[#allocation17 + $0x2c] sm:$0xf]
        %v1542 = vld [vmem:[#allocation17 + $0x30] sm:$0xf]
        %v1543 = vld [vmem:[#allocation17 + $0x34] sm:$0xf]
        %v1544 = vld [vmem:[#allocation17 + $0x38] sm:$0xf]
        %v1545 = vld [vmem:[#allocation17 + $0x3c] sm:$0xf]
        %v1546 = vld [vmem:[#allocation2 + $0x8] sm:$0x1]
        %s1547 = scalar_lea.vmem [#allocation16], 64
        %v1548 = vld [vmem:[%s1547] sm:$0xf]
        %v1549 = vld [vmem:[%s1547 + $0x4] sm:$0xf]
        %v1550 = vld [vmem:[%s1547 + $0x8] sm:$0xf]
        %v1551 = vld [vmem:[%s1547 + $0xc] sm:$0xf]
        %v1552 = vld [vmem:[%s1547 + $0x10] sm:$0xf]
        %v1553 = vld [vmem:[%s1547 + $0x14] sm:$0xf]
        %v1554 = vld [vmem:[%s1547 + $0x18] sm:$0xf]
        %v1555 = vld [vmem:[%s1547 + $0x1c] sm:$0xf]
        %v1556 = vld [vmem:[%s1547 + $0x20] sm:$0xf]
        %v1557 = vld [vmem:[%s1547 + $0x24] sm:$0xf]
        %v1558 = vld [vmem:[%s1547 + $0x28] sm:$0xf]
        %v1559 = vld [vmem:[%s1547 + $0x2c] sm:$0xf]
        %v1560 = vld [vmem:[%s1547 + $0x30] sm:$0xf]
        %v1561 = vld [vmem:[%s1547 + $0x34] sm:$0xf]
        %v1562 = vld [vmem:[%s1547 + $0x38] sm:$0xf]
        %v1563 = vld [vmem:[%s1547 + $0x3c] sm:$0xf]
        %v1566 = vunpack.c.l.b16 %v1511
        %v1567 = vunpack.c.l.b16 %v1546
        %v1568 = vpack.c.b16 %v1567, %v1566
        %v1570 = vshrl.u32 %v1568, 16
        %v1572 = vshll.u32 %v1568, 16
        %v1574 = vrot.slane %v1572, 1
        %v1575 = vor.u32 %v1570, %v1574
        %v1593 = vunpack.c.l.b16 %v1548
        %v1594 = vunpack.c.l.b16 %v1549
        %v1595 = vunpack.c.l.b16 %v1550
        %v1596 = vunpack.c.l.b16 %v1551
        %v1597 = vunpack.c.l.b16 %v1552
        %v1598 = vunpack.c.l.b16 %v1553
        %v1599 = vunpack.c.l.b16 %v1554
        %v1600 = vunpack.c.l.b16 %v1555
        %v1601 = vunpack.c.l.b16 %v1556
        %v1602 = vunpack.c.l.b16 %v1557
        %v1603 = vunpack.c.l.b16 %v1558
        %v1604 = vunpack.c.l.b16 %v1559
        %v1605 = vunpack.c.l.b16 %v1560
        %v1606 = vunpack.c.l.b16 %v1561
        %v1607 = vunpack.c.l.b16 %v1562
        %v1608 = vunpack.c.l.b16 %v1563
        %v1609 = vpack.c.b16 %v1594, %v1593
        %v1610 = vpack.c.b16 %v1596, %v1595
        %v1611 = vpack.c.b16 %v1598, %v1597
        %v1612 = vpack.c.b16 %v1600, %v1599
        %v1613 = vpack.c.b16 %v1602, %v1601
        %v1614 = vpack.c.b16 %v1604, %v1603
        %v1615 = vpack.c.b16 %v1606, %v1605
        %v1616 = vpack.c.b16 %v1608, %v1607
        %1625 = vmatpush.bf16.msra.mxu0 %v1616
        %1626 = vmatpush.bf16.msra.mxu0 %v1615
        %1627 = vmatpush.bf16.msra.mxu0 %v1614
        %1628 = vmatpush.bf16.msra.mxu0 %v1613
        %1629 = vmatpush.bf16.msra.mxu0 %v1612
        %1630 = vmatpush.bf16.msra.mxu0 %v1611
        %1631 = vmatpush.bf16.msra.mxu0 %v1610
        %1632 = vmatpush.bf16.msra.mxu0 %v1609
        %1633 = vmatmul.bf16.gmra.mxu0 %v1575
        %v1634 = vpop.f32.mrf.mxu0
        %v1635 = vadd.f32 0.0, %v1634
        %v1636 = vpop.f32.mrf.mxu0
        %1637 = vdwg.mxu0
        %v1654 = vunpack.c.l.b16 %v1512
        %v1655 = vunpack.c.l.b16 %v1513
        %v1656 = vunpack.c.l.b16 %v1514
        %v1657 = vunpack.c.l.b16 %v1515
        %v1658 = vunpack.c.l.b16 %v1516
        %v1659 = vunpack.c.l.b16 %v1517
        %v1660 = vunpack.c.l.b16 %v1518
        %v1661 = vunpack.c.l.b16 %v1519
        %v1662 = vunpack.c.l.b16 %v1520
        %v1663 = vunpack.c.l.b16 %v1521
        %v1664 = vunpack.c.l.b16 %v1522
        %v1665 = vunpack.c.l.b16 %v1523
        %v1666 = vunpack.c.l.b16 %v1524
        %v1667 = vunpack.c.l.b16 %v1525
        %v1668 = vunpack.c.l.b16 %v1526
        %v1669 = vunpack.c.l.b16 %v1527
        %v1670 = vpack.c.b16 %v1655, %v1654
        %v1671 = vpack.c.b16 %v1657, %v1656
        %v1672 = vpack.c.b16 %v1659, %v1658
        %v1673 = vpack.c.b16 %v1661, %v1660
        %v1674 = vpack.c.b16 %v1663, %v1662
        %v1675 = vpack.c.b16 %v1665, %v1664
        %v1676 = vpack.c.b16 %v1667, %v1666
        %v1677 = vpack.c.b16 %v1669, %v1668
        %1686 = vmatpush.bf16.msra.mxu0 %v1677
        %1687 = vmatpush.bf16.msra.mxu0 %v1676
        %1688 = vmatpush.bf16.msra.mxu0 %v1675
        %1689 = vmatpush.bf16.msra.mxu0 %v1674
        %1690 = vmatpush.bf16.msra.mxu0 %v1673
        %1691 = vmatpush.bf16.msra.mxu0 %v1672
        %1692 = vmatpush.bf16.msra.mxu0 %v1671
        %1693 = vmatpush.bf16.msra.mxu0 %v1670
        %1694 = vmatmul.bf16.gmra.mxu0 %v1511
        %v1695 = vpop.f32.mrf.mxu0
        %v1696 = vadd.f32 %v1635, %v1695
        %v1697 = vpop.f32.mrf.mxu0
        %1698 = vdwg.mxu0
        %s1699 = scalar_lea.vmem [#allocation17], 64
        %v1700 = vld [vmem:[%s1699] sm:$0xf]
        %v1701 = vld [vmem:[%s1699 + $0x4] sm:$0xf]
        %v1702 = vld [vmem:[%s1699 + $0x8] sm:$0xf]
        %v1703 = vld [vmem:[%s1699 + $0xc] sm:$0xf]
        %v1704 = vld [vmem:[%s1699 + $0x10] sm:$0xf]
        %v1705 = vld [vmem:[%s1699 + $0x14] sm:$0xf]
        %v1706 = vld [vmem:[%s1699 + $0x18] sm:$0xf]
        %v1707 = vld [vmem:[%s1699 + $0x1c] sm:$0xf]
        %v1708 = vld [vmem:[%s1699 + $0x20] sm:$0xf]
        %v1709 = vld [vmem:[%s1699 + $0x24] sm:$0xf]
        %v1710 = vld [vmem:[%s1699 + $0x28] sm:$0xf]
        %v1711 = vld [vmem:[%s1699 + $0x2c] sm:$0xf]
        %v1712 = vld [vmem:[%s1699 + $0x30] sm:$0xf]
        %v1713 = vld [vmem:[%s1699 + $0x34] sm:$0xf]
        %v1714 = vld [vmem:[%s1699 + $0x38] sm:$0xf]
        %v1715 = vld [vmem:[%s1699 + $0x3c] sm:$0xf]
        %v1717 = vunpack.c.l.b16 %v1528
        %v1718 = vpack.c.b16 %v1566, %v1717
        %v1720 = vshrl.u32 %v1718, 16
        %v1722 = vrot.slane %v1720, 3
        %v1723 = vshll.u32 %v1718, 16
        %v1725 = vrot.slane %v1723, 4
        %v1726 = vor.u32 %v1722, %v1725
        %v1744 = vunpack.c.l.b16 %v1700
        %v1745 = vunpack.c.l.b16 %v1701
        %v1746 = vunpack.c.l.b16 %v1702
        %v1747 = vunpack.c.l.b16 %v1703
        %v1748 = vunpack.c.l.b16 %v1704
        %v1749 = vunpack.c.l.b16 %v1705
        %v1750 = vunpack.c.l.b16 %v1706
        %v1751 = vunpack.c.l.b16 %v1707
        %v1752 = vunpack.c.l.b16 %v1708
        %v1753 = vunpack.c.l.b16 %v1709
        %v1754 = vunpack.c.l.b16 %v1710
        %v1755 = vunpack.c.l.b16 %v1711
        %v1756 = vunpack.c.l.b16 %v1712
        %v1757 = vunpack.c.l.b16 %v1713
        %v1758 = vunpack.c.l.b16 %v1714
        %v1759 = vunpack.c.l.b16 %v1715
        %v1760 = vpack.c.b16 %v1745, %v1744
        %v1761 = vpack.c.b16 %v1747, %v1746
        %v1762 = vpack.c.b16 %v1749, %v1748
        %v1763 = vpack.c.b16 %v1751, %v1750
        %v1764 = vpack.c.b16 %v1753, %v1752
        %v1765 = vpack.c.b16 %v1755, %v1754
        %v1766 = vpack.c.b16 %v1757, %v1756
        %v1767 = vpack.c.b16 %v1759, %v1758
        %1776 = vmatpush.bf16.msra.mxu0 %v1767
        %1777 = vmatpush.bf16.msra.mxu0 %v1766
        %1778 = vmatpush.bf16.msra.mxu0 %v1765
        %1779 = vmatpush.bf16.msra.mxu0 %v1764
        %1780 = vmatpush.bf16.msra.mxu0 %v1763
        %1781 = vmatpush.bf16.msra.mxu0 %v1762
        %1782 = vmatpush.bf16.msra.mxu0 %v1761
        %1783 = vmatpush.bf16.msra.mxu0 %v1760
        %1784 = vmatmul.bf16.gmra.mxu0 %v1726
        %v1785 = vpop.f32.mrf.mxu0
        %v1786 = vadd.f32 0.0, %v1785
        %v1787 = vpop.f32.mrf.mxu0
        %1788 = vdwg.mxu0
        %v1790 = vunpack.c.l.b16 %v1529
        %v1791 = vpack.c.b16 %v1790, %v1717
        %v1792 = vrot.slane %v1791, 3
        %v1810 = vunpack.c.l.b16 %v1530
        %v1811 = vunpack.c.l.b16 %v1531
        %v1812 = vunpack.c.l.b16 %v1532
        %v1813 = vunpack.c.l.b16 %v1533
        %v1814 = vunpack.c.l.b16 %v1534
        %v1815 = vunpack.c.l.b16 %v1535
        %v1816 = vunpack.c.l.b16 %v1536
        %v1817 = vunpack.c.l.b16 %v1537
        %v1818 = vunpack.c.l.b16 %v1538
        %v1819 = vunpack.c.l.b16 %v1539
        %v1820 = vunpack.c.l.b16 %v1540
        %v1821 = vunpack.c.l.b16 %v1541
        %v1822 = vunpack.c.l.b16 %v1542
        %v1823 = vunpack.c.l.b16 %v1543
        %v1824 = vunpack.c.l.b16 %v1544
        %v1825 = vunpack.c.l.b16 %v1545
        %v1826 = vpack.c.b16 %v1811, %v1810
        %v1827 = vpack.c.b16 %v1813, %v1812
        %v1828 = vpack.c.b16 %v1815, %v1814
        %v1829 = vpack.c.b16 %v1817, %v1816
        %v1830 = vpack.c.b16 %v1819, %v1818
        %v1831 = vpack.c.b16 %v1821, %v1820
        %v1832 = vpack.c.b16 %v1823, %v1822
        %v1833 = vpack.c.b16 %v1825, %v1824
        %1842 = vmatpush.bf16.msra.mxu0 %v1833
        %1843 = vmatpush.bf16.msra.mxu0 %v1832
        %1844 = vmatpush.bf16.msra.mxu0 %v1831
        %1845 = vmatpush.bf16.msra.mxu0 %v1830
        %1846 = vmatpush.bf16.msra.mxu0 %v1829
        %1847 = vmatpush.bf16.msra.mxu0 %v1828
        %1848 = vmatpush.bf16.msra.mxu0 %v1827
        %1849 = vmatpush.bf16.msra.mxu0 %v1826
        %1850 = vmatmul.bf16.gmra.mxu0 %v1792
        %v1851 = vpop.f32.mrf.mxu0
        %v1852 = vadd.f32 %v1786, %v1851
        %v1853 = vpop.f32.mrf.mxu0
        %1854 = vdwg.mxu0
        %v1855 = vld [vmem:[#allocation2 + $0x4] sm:$0xe]
        %s1856 = scalar_lea.vmem [#allocation16], 128
        %v1857 = vld [vmem:[%s1856] sm:$0xf]
        %v1858 = vld [vmem:[%s1856 + $0x4] sm:$0xf]
        %v1859 = vld [vmem:[%s1856 + $0x8] sm:$0xf]
        %v1860 = vld [vmem:[%s1856 + $0xc] sm:$0xf]
        %v1861 = vld [vmem:[%s1856 + $0x10] sm:$0xf]
        %v1862 = vld [vmem:[%s1856 + $0x14] sm:$0xf]
        %v1863 = vld [vmem:[%s1856 + $0x18] sm:$0xf]
        %v1864 = vld [vmem:[%s1856 + $0x1c] sm:$0xf]
        %v1865 = vld [vmem:[%s1856 + $0x20] sm:$0xf]
        %v1866 = vld [vmem:[%s1856 + $0x24] sm:$0xf]
        %v1867 = vld [vmem:[%s1856 + $0x28] sm:$0xf]
        %v1868 = vld [vmem:[%s1856 + $0x2c] sm:$0xf]
        %v1869 = vld [vmem:[%s1856 + $0x30] sm:$0xf]
        %v1870 = vld [vmem:[%s1856 + $0x34] sm:$0xf]
        %v1871 = vld [vmem:[%s1856 + $0x38] sm:$0xf]
        %v1872 = vld [vmem:[%s1856 + $0x3c] sm:$0xf]
        %v1874 = vunpack.c.l.b16 %v1855
        %v1875 = vpack.c.b16 %v1567, %v1874
        %v1876 = vrot.slane %v1875, 1
        %v1894 = vunpack.c.l.b16 %v1857
        %v1895 = vunpack.c.l.b16 %v1858
        %v1896 = vunpack.c.l.b16 %v1859
        %v1897 = vunpack.c.l.b16 %v1860
        %v1898 = vunpack.c.l.b16 %v1861
        %v1899 = vunpack.c.l.b16 %v1862
        %v1900 = vunpack.c.l.b16 %v1863
        %v1901 = vunpack.c.l.b16 %v1864
        %v1902 = vunpack.c.l.b16 %v1865
        %v1903 = vunpack.c.l.b16 %v1866
        %v1904 = vunpack.c.l.b16 %v1867
        %v1905 = vunpack.c.l.b16 %v1868
        %v1906 = vunpack.c.l.b16 %v1869
        %v1907 = vunpack.c.l.b16 %v1870
        %v1908 = vunpack.c.l.b16 %v1871
        %v1909 = vunpack.c.l.b16 %v1872
        %v1910 = vpack.c.b16 %v1895, %v1894
        %v1911 = vpack.c.b16 %v1897, %v1896
        %v1912 = vpack.c.b16 %v1899, %v1898
        %v1913 = vpack.c.b16 %v1901, %v1900
        %v1914 = vpack.c.b16 %v1903, %v1902
        %v1915 = vpack.c.b16 %v1905, %v1904
        %v1916 = vpack.c.b16 %v1907, %v1906
        %v1917 = vpack.c.b16 %v1909, %v1908
        %1926 = vmatpush.bf16.msra.mxu0 %v1917
        %1927 = vmatpush.bf16.msra.mxu0 %v1916
        %1928 = vmatpush.bf16.msra.mxu0 %v1915
        %1929 = vmatpush.bf16.msra.mxu0 %v1914
        %1930 = vmatpush.bf16.msra.mxu0 %v1913
        %1931 = vmatpush.bf16.msra.mxu0 %v1912
        %1932 = vmatpush.bf16.msra.mxu0 %v1911
        %1933 = vmatpush.bf16.msra.mxu0 %v1910
        %1934 = vmatmul.bf16.gmra.mxu0 %v1876
        %v1935 = vpop.f32.mrf.mxu0
        %v1936 = vadd.f32 0.0, %v1935
        %v1937 = vpop.f32.mrf.mxu0
        %1938 = vdwg.mxu0
        %v1939 = vadd.f32 %v1696, %v1936
        %s1940 = scalar_lea.vmem [#allocation17], 128
        %v1941 = vld [vmem:[%s1940] sm:$0xf]
        %v1942 = vld [vmem:[%s1940 + $0x4] sm:$0xf]
        %v1943 = vld [vmem:[%s1940 + $0x8] sm:$0xf]
        %v1944 = vld [vmem:[%s1940 + $0xc] sm:$0xf]
        %v1945 = vld [vmem:[%s1940 + $0x10] sm:$0xf]
        %v1946 = vld [vmem:[%s1940 + $0x14] sm:$0xf]
        %v1947 = vld [vmem:[%s1940 + $0x18] sm:$0xf]
        %v1948 = vld [vmem:[%s1940 + $0x1c] sm:$0xf]
        %v1949 = vld [vmem:[%s1940 + $0x20] sm:$0xf]
        %v1950 = vld [vmem:[%s1940 + $0x24] sm:$0xf]
        %v1951 = vld [vmem:[%s1940 + $0x28] sm:$0xf]
        %v1952 = vld [vmem:[%s1940 + $0x2c] sm:$0xf]
        %v1953 = vld [vmem:[%s1940 + $0x30] sm:$0xf]
        %v1954 = vld [vmem:[%s1940 + $0x34] sm:$0xf]
        %v1955 = vld [vmem:[%s1940 + $0x38] sm:$0xf]
        %v1956 = vld [vmem:[%s1940 + $0x3c] sm:$0xf]
        %v1973 = vunpack.c.l.b16 %v1941
        %v1974 = vunpack.c.l.b16 %v1942
        %v1975 = vunpack.c.l.b16 %v1943
        %v1976 = vunpack.c.l.b16 %v1944
        %v1977 = vunpack.c.l.b16 %v1945
        %v1978 = vunpack.c.l.b16 %v1946
        %v1979 = vunpack.c.l.b16 %v1947
        %v1980 = vunpack.c.l.b16 %v1948
        %v1981 = vunpack.c.l.b16 %v1949
        %v1982 = vunpack.c.l.b16 %v1950
        %v1983 = vunpack.c.l.b16 %v1951
        %v1984 = vunpack.c.l.b16 %v1952
        %v1985 = vunpack.c.l.b16 %v1953
        %v1986 = vunpack.c.l.b16 %v1954
        %v1987 = vunpack.c.l.b16 %v1955
        %v1988 = vunpack.c.l.b16 %v1956
        %v1989 = vpack.c.b16 %v1974, %v1973
        %v1990 = vpack.c.b16 %v1976, %v1975
        %v1991 = vpack.c.b16 %v1978, %v1977
        %v1992 = vpack.c.b16 %v1980, %v1979
        %v1993 = vpack.c.b16 %v1982, %v1981
        %v1994 = vpack.c.b16 %v1984, %v1983
        %v1995 = vpack.c.b16 %v1986, %v1985
        %v1996 = vpack.c.b16 %v1988, %v1987
        %2005 = vmatpush.bf16.msra.mxu0 %v1996
        %2006 = vmatpush.bf16.msra.mxu0 %v1995
        %2007 = vmatpush.bf16.msra.mxu0 %v1994
        %2008 = vmatpush.bf16.msra.mxu0 %v1993
        %2009 = vmatpush.bf16.msra.mxu0 %v1992
        %2010 = vmatpush.bf16.msra.mxu0 %v1991
        %2011 = vmatpush.bf16.msra.mxu0 %v1990
        %2012 = vmatpush.bf16.msra.mxu0 %v1989
        %2013 = vmatmul.bf16.gmra.mxu0 %v1511
        %v2014 = vpop.f32.mrf.mxu0
        %v2015 = vadd.f32 0.0, %v2014
        %v2016 = vpop.f32.mrf.mxu0
        %2017 = vdwg.mxu0
        %v2018 = vadd.f32 %v1852, %v2015
        %v2019 = vld [vmem:[%s12] sm:$0x1]
        %v2021 = vperm.slane %v2019, 0
        %v2023 = vadd.f32 %v1939, %v2021
        %v2024 = vtanh.pop %v2023
        %v2025 = vadd.f32 %v1510, %v2024
        %v2026 = vld [vmem:[%s14] sm:$0x1]
        %v2028 = vperm.slane %v2026, 0
        %v2030 = vadd.f32 %v2018, %v2028
        %v2031 = vtanh.pop %v2030
        %v2032 = vadd.f32 %v2025, %v2031
        %v2033 = vpack.c.bf16 %v2032, %v2032
        %2034 = vst [vmem:[#allocation3 + $0x4] sm:$0xf] %v2033
        %v2035 = vld [vmem:[#allocation2 + $0x4] sm:$0xf]
        %v2036 = vld [vmem:[#allocation2 + $0x8] sm:$0x1]
        %v2039 = vunpack.c.l.b16 %v2035
        %v2040 = vunpack.c.l.b16 %v2036
        %v2041 = vpack.c.b16 %v2040, %v2039
        %v2043 = vshrl.u32 %v2041, 16
        %v2045 = vshll.u32 %v2041, 16
        %v2047 = vrot.slane %v2045, 1
        %v2048 = vor.u32 %v2043, %v2047
        %v2050 = vld [vmem:[#allocation10] sm:$0xf]
        %v2051 = vld [vmem:[#allocation10 + $0x4] sm:$0xf]
        %v2052 = vld [vmem:[#allocation10 + $0x8] sm:$0xf]
        %v2053 = vld [vmem:[#allocation10 + $0xc] sm:$0xf]
        %v2054 = vld [vmem:[#allocation10 + $0x10] sm:$0xf]
        %v2055 = vld [vmem:[#allocation10 + $0x14] sm:$0xf]
        %v2056 = vld [vmem:[#allocation10 + $0x18] sm:$0xf]
        %v2057 = vld [vmem:[#allocation10 + $0x1c] sm:$0xf]
        %v2058 = vld [vmem:[#allocation10 + $0x20] sm:$0xf]
        %v2059 = vld [vmem:[#allocation10 + $0x24] sm:$0xf]
        %v2060 = vld [vmem:[#allocation10 + $0x28] sm:$0xf]
        %v2061 = vld [vmem:[#allocation10 + $0x2c] sm:$0xf]
        %v2062 = vld [vmem:[#allocation10 + $0x30] sm:$0xf]
        %v2063 = vld [vmem:[#allocation10 + $0x34] sm:$0xf]
        %v2064 = vld [vmem:[#allocation10 + $0x38] sm:$0xf]
        %v2065 = vld [vmem:[#allocation10 + $0x3c] sm:$0xf]
        %v2066 = vld [vmem:[#allocation10 + $0x40] sm:$0xf]
        %v2067 = vld [vmem:[#allocation10 + $0x44] sm:$0xf]
        %v2068 = vld [vmem:[#allocation10 + $0x48] sm:$0xf]
        %v2069 = vld [vmem:[#allocation10 + $0x4c] sm:$0xf]
        %v2070 = vld [vmem:[#allocation10 + $0x50] sm:$0xf]
        %v2071 = vld [vmem:[#allocation10 + $0x54] sm:$0xf]
        %v2072 = vld [vmem:[#allocation10 + $0x58] sm:$0xf]
        %v2073 = vld [vmem:[#allocation10 + $0x5c] sm:$0xf]
        %v2074 = vld [vmem:[#allocation10 + $0x60] sm:$0xf]
        %v2075 = vld [vmem:[#allocation10 + $0x64] sm:$0xf]
        %v2076 = vld [vmem:[#allocation10 + $0x68] sm:$0xf]
        %v2077 = vld [vmem:[#allocation10 + $0x6c] sm:$0xf]
        %v2078 = vld [vmem:[#allocation10 + $0x70] sm:$0xf]
        %v2079 = vld [vmem:[#allocation10 + $0x74] sm:$0xf]
        %v2080 = vld [vmem:[#allocation10 + $0x78] sm:$0xf]
        %v2081 = vld [vmem:[#allocation10 + $0x7c] sm:$0xf]
        %v2082 = vld [vmem:[%s4] sm:$0x1]
        %v2084 = vperm.slane %v2082, 0
        %v2118 = vunpack.c.l.b16 %v2050
        %v2119 = vunpack.c.l.b16 %v2051
        %v2120 = vunpack.c.l.b16 %v2052
        %v2121 = vunpack.c.l.b16 %v2053
        %v2122 = vunpack.c.l.b16 %v2054
        %v2123 = vunpack.c.l.b16 %v2055
        %v2124 = vunpack.c.l.b16 %v2056
        %v2125 = vunpack.c.l.b16 %v2057
        %v2126 = vunpack.c.l.b16 %v2058
        %v2127 = vunpack.c.l.b16 %v2059
        %v2128 = vunpack.c.l.b16 %v2060
        %v2129 = vunpack.c.l.b16 %v2061
        %v2130 = vunpack.c.l.b16 %v2062
        %v2131 = vunpack.c.l.b16 %v2063
        %v2132 = vunpack.c.l.b16 %v2064
        %v2133 = vunpack.c.l.b16 %v2065
        %v2134 = vunpack.c.l.b16 %v2066
        %v2135 = vunpack.c.l.b16 %v2067
        %v2136 = vunpack.c.l.b16 %v2068
        %v2137 = vunpack.c.l.b16 %v2069
        %v2138 = vunpack.c.l.b16 %v2070
        %v2139 = vunpack.c.l.b16 %v2071
        %v2140 = vunpack.c.l.b16 %v2072
        %v2141 = vunpack.c.l.b16 %v2073
        %v2142 = vunpack.c.l.b16 %v2074
        %v2143 = vunpack.c.l.b16 %v2075
        %v2144 = vunpack.c.l.b16 %v2076
        %v2145 = vunpack.c.l.b16 %v2077
        %v2146 = vunpack.c.l.b16 %v2078
        %v2147 = vunpack.c.l.b16 %v2079
        %v2148 = vunpack.c.l.b16 %v2080
        %v2149 = vunpack.c.l.b16 %v2081
        %v2150 = vpack.c.b16 %v2119, %v2118
        %v2151 = vpack.c.b16 %v2121, %v2120
        %v2152 = vpack.c.b16 %v2123, %v2122
        %v2153 = vpack.c.b16 %v2125, %v2124
        %v2154 = vpack.c.b16 %v2127, %v2126
        %v2155 = vpack.c.b16 %v2129, %v2128
        %v2156 = vpack.c.b16 %v2131, %v2130
        %v2157 = vpack.c.b16 %v2133, %v2132
        %v2158 = vpack.c.b16 %v2135, %v2134
        %v2159 = vpack.c.b16 %v2137, %v2136
        %v2160 = vpack.c.b16 %v2139, %v2138
        %v2161 = vpack.c.b16 %v2141, %v2140
        %v2162 = vpack.c.b16 %v2143, %v2142
        %v2163 = vpack.c.b16 %v2145, %v2144
        %v2164 = vpack.c.b16 %v2147, %v2146
        %v2165 = vpack.c.b16 %v2149, %v2148
        %2182 = vmatpush.bf16.msra.mxu0 %v2157
        %2183 = vmatpush.bf16.msra.mxu0 %v2156
        %2184 = vmatpush.bf16.msra.mxu0 %v2155
        %2185 = vmatpush.bf16.msra.mxu0 %v2154
        %2186 = vmatpush.bf16.msra.mxu0 %v2153
        %2187 = vmatpush.bf16.msra.mxu0 %v2152
        %2188 = vmatpush.bf16.msra.mxu0 %v2151
        %2189 = vmatpush.bf16.msra.mxu0 %v2150
        %2190 = vmatmul.bf16.gmra.mxu0 %v2035
        %v2191 = vpop.f32.mrf.mxu0
        %v2192 = vadd.f32 %v2084, %v2191
        %v2193 = vpop.f32.mrf.mxu0
        %2194 = vdwg.mxu0
        %2195 = vmatpush.bf16.msra.mxu0 %v2165
        %2196 = vmatpush.bf16.msra.mxu0 %v2164
        %2197 = vmatpush.bf16.msra.mxu0 %v2163
        %2198 = vmatpush.bf16.msra.mxu0 %v2162
        %2199 = vmatpush.bf16.msra.mxu0 %v2161
        %2200 = vmatpush.bf16.msra.mxu0 %v2160
        %2201 = vmatpush.bf16.msra.mxu0 %v2159
        %2202 = vmatpush.bf16.msra.mxu0 %v2158
        %2203 = vmatmul.bf16.gmra.mxu0 %v2048
        %v2204 = vpop.f32.mrf.mxu0
        %v2205 = vadd.f32 %v2192, %v2204
        %v2206 = vpop.f32.mrf.mxu0
        %2207 = vdwg.mxu0
        %v2208 = vtanh.pop %v2205
        %v2209 = vld [vmem:[#allocation2] sm:$0x8]
        %v2211 = vunpack.c.l.b16 %v2209
        %v2212 = vpack.c.b16 %v2039, %v2211
        %v2213 = vpack.c.b16 %v2039, %v2039
        %v2215 = vshrl.u32 %v2213, 16
        %v2217 = vrot.slane %v2215, 4
        %v2218 = vshll.u32 %v2213, 16
        %v2220 = vrot.slane %v2218, 5
        %v2221 = vor.u32 %v2217, %v2220
        %v2222 = vld [vmem:[#allocation11] sm:$0xf]
        %v2223 = vld [vmem:[#allocation11 + $0x4] sm:$0xf]
        %v2224 = vld [vmem:[#allocation11 + $0x8] sm:$0xf]
        %v2225 = vld [vmem:[#allocation11 + $0xc] sm:$0xf]
        %v2226 = vld [vmem:[#allocation11 + $0x10] sm:$0xf]
        %v2227 = vld [vmem:[#allocation11 + $0x14] sm:$0xf]
        %v2228 = vld [vmem:[#allocation11 + $0x18] sm:$0xf]
        %v2229 = vld [vmem:[#allocation11 + $0x1c] sm:$0xf]
        %v2230 = vld [vmem:[#allocation11 + $0x20] sm:$0xf]
        %v2231 = vld [vmem:[#allocation11 + $0x24] sm:$0xf]
        %v2232 = vld [vmem:[#allocation11 + $0x28] sm:$0xf]
        %v2233 = vld [vmem:[#allocation11 + $0x2c] sm:$0xf]
        %v2234 = vld [vmem:[#allocation11 + $0x30] sm:$0xf]
        %v2235 = vld [vmem:[#allocation11 + $0x34] sm:$0xf]
        %v2236 = vld [vmem:[#allocation11 + $0x38] sm:$0xf]
        %v2237 = vld [vmem:[#allocation11 + $0x3c] sm:$0xf]
        %v2238 = vld [vmem:[#allocation11 + $0x40] sm:$0xf]
        %v2239 = vld [vmem:[#allocation11 + $0x44] sm:$0xf]
        %v2240 = vld [vmem:[#allocation11 + $0x48] sm:$0xf]
        %v2241 = vld [vmem:[#allocation11 + $0x4c] sm:$0xf]
        %v2242 = vld [vmem:[#allocation11 + $0x50] sm:$0xf]
        %v2243 = vld [vmem:[#allocation11 + $0x54] sm:$0xf]
        %v2244 = vld [vmem:[#allocation11 + $0x58] sm:$0xf]
        %v2245 = vld [vmem:[#allocation11 + $0x5c] sm:$0xf]
        %v2246 = vld [vmem:[#allocation11 + $0x60] sm:$0xf]
        %v2247 = vld [vmem:[#allocation11 + $0x64] sm:$0xf]
        %v2248 = vld [vmem:[#allocation11 + $0x68] sm:$0xf]
        %v2249 = vld [vmem:[#allocation11 + $0x6c] sm:$0xf]
        %v2250 = vld [vmem:[#allocation11 + $0x70] sm:$0xf]
        %v2251 = vld [vmem:[#allocation11 + $0x74] sm:$0xf]
        %v2252 = vld [vmem:[#allocation11 + $0x78] sm:$0xf]
        %v2253 = vld [vmem:[#allocation11 + $0x7c] sm:$0xf]
        %v2254 = vld [vmem:[%s6] sm:$0x1]
        %v2256 = vperm.slane %v2254, 0
        %v2259 = vshrl.u32 %v2212, 16
        %v2261 = vrot.slane %v2259, 3
        %v2262 = vshll.u32 %v2212, 16
        %v2264 = vrot.slane %v2262, 4
        %v2265 = vor.u32 %v2261, %v2264
        %v2267 = vshrl.u32 %v2221, 16
        %v2269 = vrot.slane %v2267, 3
        %v2270 = vshll.u32 %v2221, 16
        %v2272 = vrot.slane %v2270, 4
        %v2273 = vor.u32 %v2269, %v2272
        %v2308 = vunpack.c.l.b16 %v2222
        %v2309 = vunpack.c.l.b16 %v2223
        %v2310 = vunpack.c.l.b16 %v2224
        %v2311 = vunpack.c.l.b16 %v2225
        %v2312 = vunpack.c.l.b16 %v2226
        %v2313 = vunpack.c.l.b16 %v2227
        %v2314 = vunpack.c.l.b16 %v2228
        %v2315 = vunpack.c.l.b16 %v2229
        %v2316 = vunpack.c.l.b16 %v2230
        %v2317 = vunpack.c.l.b16 %v2231
        %v2318 = vunpack.c.l.b16 %v2232
        %v2319 = vunpack.c.l.b16 %v2233
        %v2320 = vunpack.c.l.b16 %v2234
        %v2321 = vunpack.c.l.b16 %v2235
        %v2322 = vunpack.c.l.b16 %v2236
        %v2323 = vunpack.c.l.b16 %v2237
        %v2324 = vunpack.c.l.b16 %v2238
        %v2325 = vunpack.c.l.b16 %v2239
        %v2326 = vunpack.c.l.b16 %v2240
        %v2327 = vunpack.c.l.b16 %v2241
        %v2328 = vunpack.c.l.b16 %v2242
        %v2329 = vunpack.c.l.b16 %v2243
        %v2330 = vunpack.c.l.b16 %v2244
        %v2331 = vunpack.c.l.b16 %v2245
        %v2332 = vunpack.c.l.b16 %v2246
        %v2333 = vunpack.c.l.b16 %v2247
        %v2334 = vunpack.c.l.b16 %v2248
        %v2335 = vunpack.c.l.b16 %v2249
        %v2336 = vunpack.c.l.b16 %v2250
        %v2337 = vunpack.c.l.b16 %v2251
        %v2338 = vunpack.c.l.b16 %v2252
        %v2339 = vunpack.c.l.b16 %v2253
        %v2340 = vpack.c.b16 %v2309, %v2308
        %v2341 = vpack.c.b16 %v2311, %v2310
        %v2342 = vpack.c.b16 %v2313, %v2312
        %v2343 = vpack.c.b16 %v2315, %v2314
        %v2344 = vpack.c.b16 %v2317, %v2316
        %v2345 = vpack.c.b16 %v2319, %v2318
        %v2346 = vpack.c.b16 %v2321, %v2320
        %v2347 = vpack.c.b16 %v2323, %v2322
        %v2348 = vpack.c.b16 %v2325, %v2324
        %v2349 = vpack.c.b16 %v2327, %v2326
        %v2350 = vpack.c.b16 %v2329, %v2328
        %v2351 = vpack.c.b16 %v2331, %v2330
        %v2352 = vpack.c.b16 %v2333, %v2332
        %v2353 = vpack.c.b16 %v2335, %v2334
        %v2354 = vpack.c.b16 %v2337, %v2336
        %v2355 = vpack.c.b16 %v2339, %v2338
        %2372 = vmatpush.bf16.msra.mxu0 %v2347
        %2373 = vmatpush.bf16.msra.mxu0 %v2346
        %2374 = vmatpush.bf16.msra.mxu0 %v2345
        %2375 = vmatpush.bf16.msra.mxu0 %v2344
        %2376 = vmatpush.bf16.msra.mxu0 %v2343
        %2377 = vmatpush.bf16.msra.mxu0 %v2342
        %2378 = vmatpush.bf16.msra.mxu0 %v2341
        %2379 = vmatpush.bf16.msra.mxu0 %v2340
        %2380 = vmatmul.bf16.gmra.mxu0 %v2265
        %v2381 = vpop.f32.mrf.mxu0
        %v2382 = vadd.f32 %v2256, %v2381
        %v2383 = vpop.f32.mrf.mxu0
        %2384 = vdwg.mxu0
        %2385 = vmatpush.bf16.msra.mxu0 %v2355
        %2386 = vmatpush.bf16.msra.mxu0 %v2354
        %2387 = vmatpush.bf16.msra.mxu0 %v2353
        %2388 = vmatpush.bf16.msra.mxu0 %v2352
        %2389 = vmatpush.bf16.msra.mxu0 %v2351
        %2390 = vmatpush.bf16.msra.mxu0 %v2350
        %2391 = vmatpush.bf16.msra.mxu0 %v2349
        %2392 = vmatpush.bf16.msra.mxu0 %v2348
        %2393 = vmatmul.bf16.gmra.mxu0 %v2273
        %v2394 = vpop.f32.mrf.mxu0
        %v2395 = vadd.f32 %v2382, %v2394
        %v2396 = vpop.f32.mrf.mxu0
        %2397 = vdwg.mxu0
        %v2398 = vtanh.pop %v2395
        %v2399 = vadd.f32 %v2208, %v2398
        %v2400 = vld [vmem:[#allocation4] sm:$0xff]
        %v2401 = vadd.f32 %v2400, %v2399
        %2402 = vst [vmem:[#allocation4] sm:$0xff] %v2401
        %v2403 = vpack.c.bf16 %v2399, %v2399
        %2404 = vst [vmem:[#allocation3 + $0x4] sm:$0xf] %v2403
        %v2405 = vld [vmem:[#allocation3 + $0x4] sm:$0xf]
        %v2406 = vld [vmem:[#allocation3 + $0x8] sm:$0x1]
        %v2409 = vunpack.c.l.b16 %v2405
        %v2410 = vunpack.c.l.b16 %v2406
        %v2411 = vpack.c.b16 %v2410, %v2409
        %v2413 = vshrl.u32 %v2411, 16
        %v2415 = vshll.u32 %v2411, 16
        %v2417 = vrot.slane %v2415, 1
        %v2418 = vor.u32 %v2413, %v2417
        %v2420 = vld [vmem:[#allocation13] sm:$0xf]
        %v2421 = vld [vmem:[#allocation13 + $0x4] sm:$0xf]
        %v2422 = vld [vmem:[#allocation13 + $0x8] sm:$0xf]
        %v2423 = vld [vmem:[#allocation13 + $0xc] sm:$0xf]
        %v2424 = vld [vmem:[#allocation13 + $0x10] sm:$0xf]
        %v2425 = vld [vmem:[#allocation13 + $0x14] sm:$0xf]
        %v2426 = vld [vmem:[#allocation13 + $0x18] sm:$0xf]
        %v2427 = vld [vmem:[#allocation13 + $0x1c] sm:$0xf]
        %v2428 = vld [vmem:[#allocation13 + $0x20] sm:$0xf]
        %v2429 = vld [vmem:[#allocation13 + $0x24] sm:$0xf]
        %v2430 = vld [vmem:[#allocation13 + $0x28] sm:$0xf]
        %v2431 = vld [vmem:[#allocation13 + $0x2c] sm:$0xf]
        %v2432 = vld [vmem:[#allocation13 + $0x30] sm:$0xf]
        %v2433 = vld [vmem:[#allocation13 + $0x34] sm:$0xf]
        %v2434 = vld [vmem:[#allocation13 + $0x38] sm:$0xf]
        %v2435 = vld [vmem:[#allocation13 + $0x3c] sm:$0xf]
        %v2436 = vld [vmem:[#allocation13 + $0x40] sm:$0xf]
        %v2437 = vld [vmem:[#allocation13 + $0x44] sm:$0xf]
        %v2438 = vld [vmem:[#allocation13 + $0x48] sm:$0xf]
        %v2439 = vld [vmem:[#allocation13 + $0x4c] sm:$0xf]
        %v2440 = vld [vmem:[#allocation13 + $0x50] sm:$0xf]
        %v2441 = vld [vmem:[#allocation13 + $0x54] sm:$0xf]
        %v2442 = vld [vmem:[#allocation13 + $0x58] sm:$0xf]
        %v2443 = vld [vmem:[#allocation13 + $0x5c] sm:$0xf]
        %v2444 = vld [vmem:[#allocation13 + $0x60] sm:$0xf]
        %v2445 = vld [vmem:[#allocation13 + $0x64] sm:$0xf]
        %v2446 = vld [vmem:[#allocation13 + $0x68] sm:$0xf]
        %v2447 = vld [vmem:[#allocation13 + $0x6c] sm:$0xf]
        %v2448 = vld [vmem:[#allocation13 + $0x70] sm:$0xf]
        %v2449 = vld [vmem:[#allocation13 + $0x74] sm:$0xf]
        %v2450 = vld [vmem:[#allocation13 + $0x78] sm:$0xf]
        %v2451 = vld [vmem:[#allocation13 + $0x7c] sm:$0xf]
        %v2452 = vld [vmem:[%s8] sm:$0x1]
        %v2454 = vperm.slane %v2452, 0
        %v2488 = vunpack.c.l.b16 %v2420
        %v2489 = vunpack.c.l.b16 %v2421
        %v2490 = vunpack.c.l.b16 %v2422
        %v2491 = vunpack.c.l.b16 %v2423
        %v2492 = vunpack.c.l.b16 %v2424
        %v2493 = vunpack.c.l.b16 %v2425
        %v2494 = vunpack.c.l.b16 %v2426
        %v2495 = vunpack.c.l.b16 %v2427
        %v2496 = vunpack.c.l.b16 %v2428
        %v2497 = vunpack.c.l.b16 %v2429
        %v2498 = vunpack.c.l.b16 %v2430
        %v2499 = vunpack.c.l.b16 %v2431
        %v2500 = vunpack.c.l.b16 %v2432
        %v2501 = vunpack.c.l.b16 %v2433
        %v2502 = vunpack.c.l.b16 %v2434
        %v2503 = vunpack.c.l.b16 %v2435
        %v2504 = vunpack.c.l.b16 %v2436
        %v2505 = vunpack.c.l.b16 %v2437
        %v2506 = vunpack.c.l.b16 %v2438
        %v2507 = vunpack.c.l.b16 %v2439
        %v2508 = vunpack.c.l.b16 %v2440
        %v2509 = vunpack.c.l.b16 %v2441
        %v2510 = vunpack.c.l.b16 %v2442
        %v2511 = vunpack.c.l.b16 %v2443
        %v2512 = vunpack.c.l.b16 %v2444
        %v2513 = vunpack.c.l.b16 %v2445
        %v2514 = vunpack.c.l.b16 %v2446
        %v2515 = vunpack.c.l.b16 %v2447
        %v2516 = vunpack.c.l.b16 %v2448
        %v2517 = vunpack.c.l.b16 %v2449
        %v2518 = vunpack.c.l.b16 %v2450
        %v2519 = vunpack.c.l.b16 %v2451
        %v2520 = vpack.c.b16 %v2489, %v2488
        %v2521 = vpack.c.b16 %v2491, %v2490
        %v2522 = vpack.c.b16 %v2493, %v2492
        %v2523 = vpack.c.b16 %v2495, %v2494
        %v2524 = vpack.c.b16 %v2497, %v2496
        %v2525 = vpack.c.b16 %v2499, %v2498
        %v2526 = vpack.c.b16 %v2501, %v2500
        %v2527 = vpack.c.b16 %v2503, %v2502
        %v2528 = vpack.c.b16 %v2505, %v2504
        %v2529 = vpack.c.b16 %v2507, %v2506
        %v2530 = vpack.c.b16 %v2509, %v2508
        %v2531 = vpack.c.b16 %v2511, %v2510
        %v2532 = vpack.c.b16 %v2513, %v2512
        %v2533 = vpack.c.b16 %v2515, %v2514
        %v2534 = vpack.c.b16 %v2517, %v2516
        %v2535 = vpack.c.b16 %v2519, %v2518
        %2552 = vmatpush.bf16.msra.mxu0 %v2527
        %2553 = vmatpush.bf16.msra.mxu0 %v2526
        %2554 = vmatpush.bf16.msra.mxu0 %v2525
        %2555 = vmatpush.bf16.msra.mxu0 %v2524
        %2556 = vmatpush.bf16.msra.mxu0 %v2523
        %2557 = vmatpush.bf16.msra.mxu0 %v2522
        %2558 = vmatpush.bf16.msra.mxu0 %v2521
        %2559 = vmatpush.bf16.msra.mxu0 %v2520
        %2560 = vmatmul.bf16.gmra.mxu0 %v2405
        %v2561 = vpop.f32.mrf.mxu0
        %v2562 = vadd.f32 %v2454, %v2561
        %v2563 = vpop.f32.mrf.mxu0
        %2564 = vdwg.mxu0
        %2565 = vmatpush.bf16.msra.mxu0 %v2535
        %2566 = vmatpush.bf16.msra.mxu0 %v2534
        %2567 = vmatpush.bf16.msra.mxu0 %v2533
        %2568 = vmatpush.bf16.msra.mxu0 %v2532
        %2569 = vmatpush.bf16.msra.mxu0 %v2531
        %2570 = vmatpush.bf16.msra.mxu0 %v2530
        %2571 = vmatpush.bf16.msra.mxu0 %v2529
        %2572 = vmatpush.bf16.msra.mxu0 %v2528
        %2573 = vmatmul.bf16.gmra.mxu0 %v2418
        %v2574 = vpop.f32.mrf.mxu0
        %v2575 = vadd.f32 %v2562, %v2574
        %v2576 = vpop.f32.mrf.mxu0
        %2577 = vdwg.mxu0
        %v2578 = vtanh.pop %v2575
        %v2579 = vld [vmem:[#allocation3] sm:$0x8]
        %v2580 = vld [vmem:[#allocation3 + $0x4] sm:$0x7]
        %v2583 = vunpack.c.l.b16 %v2579
        %v2584 = vunpack.c.l.b16 %v2580
        %v2585 = vpack.c.b16 %v2584, %v2583
        %v2586 = vpack.c.b16 %v2409, %v2583
        %v2588 = vshrl.u32 %v2586, 16
        %v2590 = vshll.u32 %v2586, 16
        %v2592 = vrot.slane %v2590, 1
        %v2593 = vor.u32 %v2588, %v2592
        %v2594 = vld [vmem:[#allocation14] sm:$0xf]
        %v2595 = vld [vmem:[#allocation14 + $0x4] sm:$0xf]
        %v2596 = vld [vmem:[#allocation14 + $0x8] sm:$0xf]
        %v2597 = vld [vmem:[#allocation14 + $0xc] sm:$0xf]
        %v2598 = vld [vmem:[#allocation14 + $0x10] sm:$0xf]
        %v2599 = vld [vmem:[#allocation14 + $0x14] sm:$0xf]
        %v2600 = vld [vmem:[#allocation14 + $0x18] sm:$0xf]
        %v2601 = vld [vmem:[#allocation14 + $0x1c] sm:$0xf]
        %v2602 = vld [vmem:[#allocation14 + $0x20] sm:$0xf]
        %v2603 = vld [vmem:[#allocation14 + $0x24] sm:$0xf]
        %v2604 = vld [vmem:[#allocation14 + $0x28] sm:$0xf]
        %v2605 = vld [vmem:[#allocation14 + $0x2c] sm:$0xf]
        %v2606 = vld [vmem:[#allocation14 + $0x30] sm:$0xf]
        %v2607 = vld [vmem:[#allocation14 + $0x34] sm:$0xf]
        %v2608 = vld [vmem:[#allocation14 + $0x38] sm:$0xf]
        %v2609 = vld [vmem:[#allocation14 + $0x3c] sm:$0xf]
        %v2610 = vld [vmem:[#allocation14 + $0x40] sm:$0xf]
        %v2611 = vld [vmem:[#allocation14 + $0x44] sm:$0xf]
        %v2612 = vld [vmem:[#allocation14 + $0x48] sm:$0xf]
        %v2613 = vld [vmem:[#allocation14 + $0x4c] sm:$0xf]
        %v2614 = vld [vmem:[#allocation14 + $0x50] sm:$0xf]
        %v2615 = vld [vmem:[#allocation14 + $0x54] sm:$0xf]
        %v2616 = vld [vmem:[#allocation14 + $0x58] sm:$0xf]
        %v2617 = vld [vmem:[#allocation14 + $0x5c] sm:$0xf]
        %v2618 = vld [vmem:[#allocation14 + $0x60] sm:$0xf]
        %v2619 = vld [vmem:[#allocation14 + $0x64] sm:$0xf]
        %v2620 = vld [vmem:[#allocation14 + $0x68] sm:$0xf]
        %v2621 = vld [vmem:[#allocation14 + $0x6c] sm:$0xf]
        %v2622 = vld [vmem:[#allocation14 + $0x70] sm:$0xf]
        %v2623 = vld [vmem:[#allocation14 + $0x74] sm:$0xf]
        %v2624 = vld [vmem:[#allocation14 + $0x78] sm:$0xf]
        %v2625 = vld [vmem:[#allocation14 + $0x7c] sm:$0xf]
        %v2626 = vld [vmem:[%s10] sm:$0x1]
        %v2628 = vperm.slane %v2626, 0
        %v2630 = vrot.slane %v2585, 3
        %v2631 = vrot.slane %v2593, 3
        %v2666 = vunpack.c.l.b16 %v2594
        %v2667 = vunpack.c.l.b16 %v2595
        %v2668 = vunpack.c.l.b16 %v2596
        %v2669 = vunpack.c.l.b16 %v2597
        %v2670 = vunpack.c.l.b16 %v2598
        %v2671 = vunpack.c.l.b16 %v2599
        %v2672 = vunpack.c.l.b16 %v2600
        %v2673 = vunpack.c.l.b16 %v2601
        %v2674 = vunpack.c.l.b16 %v2602
        %v2675 = vunpack.c.l.b16 %v2603
        %v2676 = vunpack.c.l.b16 %v2604
        %v2677 = vunpack.c.l.b16 %v2605
        %v2678 = vunpack.c.l.b16 %v2606
        %v2679 = vunpack.c.l.b16 %v2607
        %v2680 = vunpack.c.l.b16 %v2608
        %v2681 = vunpack.c.l.b16 %v2609
        %v2682 = vunpack.c.l.b16 %v2610
        %v2683 = vunpack.c.l.b16 %v2611
        %v2684 = vunpack.c.l.b16 %v2612
        %v2685 = vunpack.c.l.b16 %v2613
        %v2686 = vunpack.c.l.b16 %v2614
        %v2687 = vunpack.c.l.b16 %v2615
        %v2688 = vunpack.c.l.b16 %v2616
        %v2689 = vunpack.c.l.b16 %v2617
        %v2690 = vunpack.c.l.b16 %v2618
        %v2691 = vunpack.c.l.b16 %v2619
        %v2692 = vunpack.c.l.b16 %v2620
        %v2693 = vunpack.c.l.b16 %v2621
        %v2694 = vunpack.c.l.b16 %v2622
        %v2695 = vunpack.c.l.b16 %v2623
        %v2696 = vunpack.c.l.b16 %v2624
        %v2697 = vunpack.c.l.b16 %v2625
        %v2698 = vpack.c.b16 %v2667, %v2666
        %v2699 = vpack.c.b16 %v2669, %v2668
        %v2700 = vpack.c.b16 %v2671, %v2670
        %v2701 = vpack.c.b16 %v2673, %v2672
        %v2702 = vpack.c.b16 %v2675, %v2674
        %v2703 = vpack.c.b16 %v2677, %v2676
        %v2704 = vpack.c.b16 %v2679, %v2678
        %v2705 = vpack.c.b16 %v2681, %v2680
        %v2706 = vpack.c.b16 %v2683, %v2682
        %v2707 = vpack.c.b16 %v2685, %v2684
        %v2708 = vpack.c.b16 %v2687, %v2686
        %v2709 = vpack.c.b16 %v2689, %v2688
        %v2710 = vpack.c.b16 %v2691, %v2690
        %v2711 = vpack.c.b16 %v2693, %v2692
        %v2712 = vpack.c.b16 %v2695, %v2694
        %v2713 = vpack.c.b16 %v2697, %v2696
        %2730 = vmatpush.bf16.msra.mxu0 %v2705
        %2731 = vmatpush.bf16.msra.mxu0 %v2704
        %2732 = vmatpush.bf16.msra.mxu0 %v2703
        %2733 = vmatpush.bf16.msra.mxu0 %v2702
        %2734 = vmatpush.bf16.msra.mxu0 %v2701
        %2735 = vmatpush.bf16.msra.mxu0 %v2700
        %2736 = vmatpush.bf16.msra.mxu0 %v2699
        %2737 = vmatpush.bf16.msra.mxu0 %v2698
        %2738 = vmatmul.bf16.gmra.mxu0 %v2630
        %v2739 = vpop.f32.mrf.mxu0
        %v2740 = vadd.f32 %v2628, %v2739
        %v2741 = vpop.f32.mrf.mxu0
        %2742 = vdwg.mxu0
        %2743 = vmatpush.bf16.msra.mxu0 %v2713
        %2744 = vmatpush.bf16.msra.mxu0 %v2712
        %2745 = vmatpush.bf16.msra.mxu0 %v2711
        %2746 = vmatpush.bf16.msra.mxu0 %v2710
        %2747 = vmatpush.bf16.msra.mxu0 %v2709
        %2748 = vmatpush.bf16.msra.mxu0 %v2708
        %2749 = vmatpush.bf16.msra.mxu0 %v2707
        %2750 = vmatpush.bf16.msra.mxu0 %v2706
        %2751 = vmatmul.bf16.gmra.mxu0 %v2631
        %v2752 = vpop.f32.mrf.mxu0
        %v2753 = vadd.f32 %v2740, %v2752
        %v2754 = vpop.f32.mrf.mxu0
        %2755 = vdwg.mxu0
        %v2756 = vtanh.pop %v2753
        %v2757 = vadd.f32 %v2578, %v2756
        %v2758 = vld [vmem:[#allocation2 + $0x4] sm:$0xf]
        %v2759 = vld [vmem:[#allocation16] sm:$0xf]
        %v2760 = vld [vmem:[#allocation16 + $0x4] sm:$0xf]
        %v2761 = vld [vmem:[#allocation16 + $0x8] sm:$0xf]
        %v2762 = vld [vmem:[#allocation16 + $0xc] sm:$0xf]
        %v2763 = vld [vmem:[#allocation16 + $0x10] sm:$0xf]
        %v2764 = vld [vmem:[#allocation16 + $0x14] sm:$0xf]
        %v2765 = vld [vmem:[#allocation16 + $0x18] sm:$0xf]
        %v2766 = vld [vmem:[#allocation16 + $0x1c] sm:$0xf]
        %v2767 = vld [vmem:[#allocation16 + $0x20] sm:$0xf]
        %v2768 = vld [vmem:[#allocation16 + $0x24] sm:$0xf]
        %v2769 = vld [vmem:[#allocation16 + $0x28] sm:$0xf]
        %v2770 = vld [vmem:[#allocation16 + $0x2c] sm:$0xf]
        %v2771 = vld [vmem:[#allocation16 + $0x30] sm:$0xf]
        %v2772 = vld [vmem:[#allocation16 + $0x34] sm:$0xf]
        %v2773 = vld [vmem:[#allocation16 + $0x38] sm:$0xf]
        %v2774 = vld [vmem:[#allocation16 + $0x3c] sm:$0xf]
        %v2775 = vld [vmem:[#allocation2] sm:$0x8]
        %v2776 = vld [vmem:[#allocation2 + $0x4] sm:$0x7]
        %v2777 = vld [vmem:[#allocation17] sm:$0xf]
        %v2778 = vld [vmem:[#allocation17 + $0x4] sm:$0xf]
        %v2779 = vld [vmem:[#allocation17 + $0x8] sm:$0xf]
        %v2780 = vld [vmem:[#allocation17 + $0xc] sm:$0xf]
        %v2781 = vld [vmem:[#allocation17 + $0x10] sm:$0xf]
        %v2782 = vld [vmem:[#allocation17 + $0x14] sm:$0xf]
        %v2783 = vld [vmem:[#allocation17 + $0x18] sm:$0xf]
        %v2784 = vld [vmem:[#allocation17 + $0x1c] sm:$0xf]
        %v2785 = vld [vmem:[#allocation17 + $0x20] sm:$0xf]
        %v2786 = vld [vmem:[#allocation17 + $0x24] sm:$0xf]
        %v2787 = vld [vmem:[#allocation17 + $0x28] sm:$0xf]
        %v2788 = vld [vmem:[#allocation17 + $0x2c] sm:$0xf]
        %v2789 = vld [vmem:[#allocation17 + $0x30] sm:$0xf]
        %v2790 = vld [vmem:[#allocation17 + $0x34] sm:$0xf]
        %v2791 = vld [vmem:[#allocation17 + $0x38] sm:$0xf]
        %v2792 = vld [vmem:[#allocation17 + $0x3c] sm:$0xf]
        %v2793 = vld [vmem:[#allocation2 + $0x8] sm:$0x1]
        %v2794 = vld [vmem:[%s1547] sm:$0xf]
        %v2795 = vld [vmem:[%s1547 + $0x4] sm:$0xf]
        %v2796 = vld [vmem:[%s1547 + $0x8] sm:$0xf]
        %v2797 = vld [vmem:[%s1547 + $0xc] sm:$0xf]
        %v2798 = vld [vmem:[%s1547 + $0x10] sm:$0xf]
        %v2799 = vld [vmem:[%s1547 + $0x14] sm:$0xf]
        %v2800 = vld [vmem:[%s1547 + $0x18] sm:$0xf]
        %v2801 = vld [vmem:[%s1547 + $0x1c] sm:$0xf]
        %v2802 = vld [vmem:[%s1547 + $0x20] sm:$0xf]
        %v2803 = vld [vmem:[%s1547 + $0x24] sm:$0xf]
        %v2804 = vld [vmem:[%s1547 + $0x28] sm:$0xf]
        %v2805 = vld [vmem:[%s1547 + $0x2c] sm:$0xf]
        %v2806 = vld [vmem:[%s1547 + $0x30] sm:$0xf]
        %v2807 = vld [vmem:[%s1547 + $0x34] sm:$0xf]
        %v2808 = vld [vmem:[%s1547 + $0x38] sm:$0xf]
        %v2809 = vld [vmem:[%s1547 + $0x3c] sm:$0xf]
        %v2812 = vunpack.c.l.b16 %v2758
        %v2813 = vunpack.c.l.b16 %v2793
        %v2814 = vpack.c.b16 %v2813, %v2812
        %v2816 = vshrl.u32 %v2814, 16
        %v2818 = vshll.u32 %v2814, 16
        %v2820 = vrot.slane %v2818, 1
        %v2821 = vor.u32 %v2816, %v2820
        %v2839 = vunpack.c.l.b16 %v2794
        %v2840 = vunpack.c.l.b16 %v2795
        %v2841 = vunpack.c.l.b16 %v2796
        %v2842 = vunpack.c.l.b16 %v2797
        %v2843 = vunpack.c.l.b16 %v2798
        %v2844 = vunpack.c.l.b16 %v2799
        %v2845 = vunpack.c.l.b16 %v2800
        %v2846 = vunpack.c.l.b16 %v2801
        %v2847 = vunpack.c.l.b16 %v2802
        %v2848 = vunpack.c.l.b16 %v2803
        %v2849 = vunpack.c.l.b16 %v2804
        %v2850 = vunpack.c.l.b16 %v2805
        %v2851 = vunpack.c.l.b16 %v2806
        %v2852 = vunpack.c.l.b16 %v2807
        %v2853 = vunpack.c.l.b16 %v2808
        %v2854 = vunpack.c.l.b16 %v2809
        %v2855 = vpack.c.b16 %v2840, %v2839
        %v2856 = vpack.c.b16 %v2842, %v2841
        %v2857 = vpack.c.b16 %v2844, %v2843
        %v2858 = vpack.c.b16 %v2846, %v2845
        %v2859 = vpack.c.b16 %v2848, %v2847
        %v2860 = vpack.c.b16 %v2850, %v2849
        %v2861 = vpack.c.b16 %v2852, %v2851
        %v2862 = vpack.c.b16 %v2854, %v2853
        %2871 = vmatpush.bf16.msra.mxu0 %v2862
        %2872 = vmatpush.bf16.msra.mxu0 %v2861
        %2873 = vmatpush.bf16.msra.mxu0 %v2860
        %2874 = vmatpush.bf16.msra.mxu0 %v2859
        %2875 = vmatpush.bf16.msra.mxu0 %v2858
        %2876 = vmatpush.bf16.msra.mxu0 %v2857
        %2877 = vmatpush.bf16.msra.mxu0 %v2856
        %2878 = vmatpush.bf16.msra.mxu0 %v2855
        %2879 = vmatmul.bf16.gmra.mxu0 %v2821
        %v2880 = vpop.f32.mrf.mxu0
        %v2881 = vadd.f32 0.0, %v2880
        %v2882 = vpop.f32.mrf.mxu0
        %2883 = vdwg.mxu0
        %v2900 = vunpack.c.l.b16 %v2759
        %v2901 = vunpack.c.l.b16 %v2760
        %v2902 = vunpack.c.l.b16 %v2761
        %v2903 = vunpack.c.l.b16 %v2762
        %v2904 = vunpack.c.l.b16 %v2763
        %v2905 = vunpack.c.l.b16 %v2764
        %v2906 = vunpack.c.l.b16 %v2765
        %v2907 = vunpack.c.l.b16 %v2766
        %v2908 = vunpack.c.l.b16 %v2767
        %v2909 = vunpack.c.l.b16 %v2768
        %v2910 = vunpack.c.l.b16 %v2769
        %v2911 = vunpack.c.l.b16 %v2770
        %v2912 = vunpack.c.l.b16 %v2771
        %v2913 = vunpack.c.l.b16 %v2772
        %v2914 = vunpack.c.l.b16 %v2773
        %v2915 = vunpack.c.l.b16 %v2774
        %v2916 = vpack.c.b16 %v2901, %v2900
        %v2917 = vpack.c.b16 %v2903, %v2902
        %v2918 = vpack.c.b16 %v2905, %v2904
        %v2919 = vpack.c.b16 %v2907, %v2906
        %v2920 = vpack.c.b16 %v2909, %v2908
        %v2921 = vpack.c.b16 %v2911, %v2910
        %v2922 = vpack.c.b16 %v2913, %v2912
        %v2923 = vpack.c.b16 %v2915, %v2914
        %2932 = vmatpush.bf16.msra.mxu0 %v2923
        %2933 = vmatpush.bf16.msra.mxu0 %v2922
        %2934 = vmatpush.bf16.msra.mxu0 %v2921
        %2935 = vmatpush.bf16.msra.mxu0 %v2920
        %2936 = vmatpush.bf16.msra.mxu0 %v2919
        %2937 = vmatpush.bf16.msra.mxu0 %v2918
        %2938 = vmatpush.bf16.msra.mxu0 %v2917
        %2939 = vmatpush.bf16.msra.mxu0 %v2916
        %2940 = vmatmul.bf16.gmra.mxu0 %v2758
        %v2941 = vpop.f32.mrf.mxu0
        %v2942 = vadd.f32 %v2881, %v2941
        %v2943 = vpop.f32.mrf.mxu0
        %2944 = vdwg.mxu0
        %v2945 = vld [vmem:[%s1699] sm:$0xf]
        %v2946 = vld [vmem:[%s1699 + $0x4] sm:$0xf]
        %v2947 = vld [vmem:[%s1699 + $0x8] sm:$0xf]
        %v2948 = vld [vmem:[%s1699 + $0xc] sm:$0xf]
        %v2949 = vld [vmem:[%s1699 + $0x10] sm:$0xf]
        %v2950 = vld [vmem:[%s1699 + $0x14] sm:$0xf]
        %v2951 = vld [vmem:[%s1699 + $0x18] sm:$0xf]
        %v2952 = vld [vmem:[%s1699 + $0x1c] sm:$0xf]
        %v2953 = vld [vmem:[%s1699 + $0x20] sm:$0xf]
        %v2954 = vld [vmem:[%s1699 + $0x24] sm:$0xf]
        %v2955 = vld [vmem:[%s1699 + $0x28] sm:$0xf]
        %v2956 = vld [vmem:[%s1699 + $0x2c] sm:$0xf]
        %v2957 = vld [vmem:[%s1699 + $0x30] sm:$0xf]
        %v2958 = vld [vmem:[%s1699 + $0x34] sm:$0xf]
        %v2959 = vld [vmem:[%s1699 + $0x38] sm:$0xf]
        %v2960 = vld [vmem:[%s1699 + $0x3c] sm:$0xf]
        %v2962 = vunpack.c.l.b16 %v2775
        %v2963 = vpack.c.b16 %v2812, %v2962
        %v2965 = vshrl.u32 %v2963, 16
        %v2967 = vrot.slane %v2965, 3
        %v2968 = vshll.u32 %v2963, 16
        %v2970 = vrot.slane %v2968, 4
        %v2971 = vor.u32 %v2967, %v2970
        %v2989 = vunpack.c.l.b16 %v2945
        %v2990 = vunpack.c.l.b16 %v2946
        %v2991 = vunpack.c.l.b16 %v2947
        %v2992 = vunpack.c.l.b16 %v2948
        %v2993 = vunpack.c.l.b16 %v2949
        %v2994 = vunpack.c.l.b16 %v2950
        %v2995 = vunpack.c.l.b16 %v2951
        %v2996 = vunpack.c.l.b16 %v2952
        %v2997 = vunpack.c.l.b16 %v2953
        %v2998 = vunpack.c.l.b16 %v2954
        %v2999 = vunpack.c.l.b16 %v2955
        %v3000 = vunpack.c.l.b16 %v2956
        %v3001 = vunpack.c.l.b16 %v2957
        %v3002 = vunpack.c.l.b16 %v2958
        %v3003 = vunpack.c.l.b16 %v2959
        %v3004 = vunpack.c.l.b16 %v2960
        %v3005 = vpack.c.b16 %v2990, %v2989
        %v3006 = vpack.c.b16 %v2992, %v2991
        %v3007 = vpack.c.b16 %v2994, %v2993
        %v3008 = vpack.c.b16 %v2996, %v2995
        %v3009 = vpack.c.b16 %v2998, %v2997
        %v3010 = vpack.c.b16 %v3000, %v2999
        %v3011 = vpack.c.b16 %v3002, %v3001
        %v3012 = vpack.c.b16 %v3004, %v3003
        %3021 = vmatpush.bf16.msra.mxu0 %v3012
        %3022 = vmatpush.bf16.msra.mxu0 %v3011
        %3023 = vmatpush.bf16.msra.mxu0 %v3010
        %3024 = vmatpush.bf16.msra.mxu0 %v3009
        %3025 = vmatpush.bf16.msra.mxu0 %v3008
        %3026 = vmatpush.bf16.msra.mxu0 %v3007
        %3027 = vmatpush.bf16.msra.mxu0 %v3006
        %3028 = vmatpush.bf16.msra.mxu0 %v3005
        %3029 = vmatmul.bf16.gmra.mxu0 %v2971
        %v3030 = vpop.f32.mrf.mxu0
        %v3031 = vadd.f32 0.0, %v3030
        %v3032 = vpop.f32.mrf.mxu0
        %3033 = vdwg.mxu0
        %v3035 = vunpack.c.l.b16 %v2776
        %v3036 = vpack.c.b16 %v3035, %v2962
        %v3037 = vrot.slane %v3036, 3
        %v3055 = vunpack.c.l.b16 %v2777
        %v3056 = vunpack.c.l.b16 %v2778
        %v3057 = vunpack.c.l.b16 %v2779
        %v3058 = vunpack.c.l.b16 %v2780
        %v3059 = vunpack.c.l.b16 %v2781
        %v3060 = vunpack.c.l.b16 %v2782
        %v3061 = vunpack.c.l.b16 %v2783
        %v3062 = vunpack.c.l.b16 %v2784
        %v3063 = vunpack.c.l.b16 %v2785
        %v3064 = vunpack.c.l.b16 %v2786
        %v3065 = vunpack.c.l.b16 %v2787
        %v3066 = vunpack.c.l.b16 %v2788
        %v3067 = vunpack.c.l.b16 %v2789
        %v3068 = vunpack.c.l.b16 %v2790
        %v3069 = vunpack.c.l.b16 %v2791
        %v3070 = vunpack.c.l.b16 %v2792
        %v3071 = vpack.c.b16 %v3056, %v3055
        %v3072 = vpack.c.b16 %v3058, %v3057
        %v3073 = vpack.c.b16 %v3060, %v3059
        %v3074 = vpack.c.b16 %v3062, %v3061
        %v3075 = vpack.c.b16 %v3064, %v3063
        %v3076 = vpack.c.b16 %v3066, %v3065
        %v3077 = vpack.c.b16 %v3068, %v3067
        %v3078 = vpack.c.b16 %v3070, %v3069
        %3087 = vmatpush.bf16.msra.mxu0 %v3078
        %3088 = vmatpush.bf16.msra.mxu0 %v3077
        %3089 = vmatpush.bf16.msra.mxu0 %v3076
        %3090 = vmatpush.bf16.msra.mxu0 %v3075
        %3091 = vmatpush.bf16.msra.mxu0 %v3074
        %3092 = vmatpush.bf16.msra.mxu0 %v3073
        %3093 = vmatpush.bf16.msra.mxu0 %v3072
        %3094 = vmatpush.bf16.msra.mxu0 %v3071
        %3095 = vmatmul.bf16.gmra.mxu0 %v3037
        %v3096 = vpop.f32.mrf.mxu0
        %v3097 = vadd.f32 %v3031, %v3096
        %v3098 = vpop.f32.mrf.mxu0
        %3099 = vdwg.mxu0
        %v3100 = vld [vmem:[#allocation2 + $0x4] sm:$0xe]
        %v3101 = vld [vmem:[%s1856] sm:$0xf]
        %v3102 = vld [vmem:[%s1856 + $0x4] sm:$0xf]
        %v3103 = vld [vmem:[%s1856 + $0x8] sm:$0xf]
        %v3104 = vld [vmem:[%s1856 + $0xc] sm:$0xf]
        %v3105 = vld [vmem:[%s1856 + $0x10] sm:$0xf]
        %v3106 = vld [vmem:[%s1856 + $0x14] sm:$0xf]
        %v3107 = vld [vmem:[%s1856 + $0x18] sm:$0xf]
        %v3108 = vld [vmem:[%s1856 + $0x1c] sm:$0xf]
        %v3109 = vld [vmem:[%s1856 + $0x20] sm:$0xf]
        %v3110 = vld [vmem:[%s1856 + $0x24] sm:$0xf]
        %v3111 = vld [vmem:[%s1856 + $0x28] sm:$0xf]
        %v3112 = vld [vmem:[%s1856 + $0x2c] sm:$0xf]
        %v3113 = vld [vmem:[%s1856 + $0x30] sm:$0xf]
        %v3114 = vld [vmem:[%s1856 + $0x34] sm:$0xf]
        %v3115 = vld [vmem:[%s1856 + $0x38] sm:$0xf]
        %v3116 = vld [vmem:[%s1856 + $0x3c] sm:$0xf]
        %v3118 = vunpack.c.l.b16 %v3100
        %v3119 = vpack.c.b16 %v2813, %v3118
        %v3120 = vrot.slane %v3119, 1
        %v3138 = vunpack.c.l.b16 %v3101
        %v3139 = vunpack.c.l.b16 %v3102
        %v3140 = vunpack.c.l.b16 %v3103
        %v3141 = vunpack.c.l.b16 %v3104
        %v3142 = vunpack.c.l.b16 %v3105
        %v3143 = vunpack.c.l.b16 %v3106
        %v3144 = vunpack.c.l.b16 %v3107
        %v3145 = vunpack.c.l.b16 %v3108
        %v3146 = vunpack.c.l.b16 %v3109
        %v3147 = vunpack.c.l.b16 %v3110
        %v3148 = vunpack.c.l.b16 %v3111
        %v3149 = vunpack.c.l.b16 %v3112
        %v3150 = vunpack.c.l.b16 %v3113
        %v3151 = vunpack.c.l.b16 %v3114
        %v3152 = vunpack.c.l.b16 %v3115
        %v3153 = vunpack.c.l.b16 %v3116
        %v3154 = vpack.c.b16 %v3139, %v3138
        %v3155 = vpack.c.b16 %v3141, %v3140
        %v3156 = vpack.c.b16 %v3143, %v3142
        %v3157 = vpack.c.b16 %v3145, %v3144
        %v3158 = vpack.c.b16 %v3147, %v3146
        %v3159 = vpack.c.b16 %v3149, %v3148
        %v3160 = vpack.c.b16 %v3151, %v3150
        %v3161 = vpack.c.b16 %v3153, %v3152
        %3170 = vmatpush.bf16.msra.mxu0 %v3161
        %3171 = vmatpush.bf16.msra.mxu0 %v3160
        %3172 = vmatpush.bf16.msra.mxu0 %v3159
        %3173 = vmatpush.bf16.msra.mxu0 %v3158
        %3174 = vmatpush.bf16.msra.mxu0 %v3157
        %3175 = vmatpush.bf16.msra.mxu0 %v3156
        %3176 = vmatpush.bf16.msra.mxu0 %v3155
        %3177 = vmatpush.bf16.msra.mxu0 %v3154
        %3178 = vmatmul.bf16.gmra.mxu0 %v3120
        %v3179 = vpop.f32.mrf.mxu0
        %v3180 = vadd.f32 0.0, %v3179
        %v3181 = vpop.f32.mrf.mxu0
        %3182 = vdwg.mxu0
        %v3183 = vadd.f32 %v2942, %v3180
        %v3184 = vld [vmem:[%s1940] sm:$0xf]
        %v3185 = vld [vmem:[%s1940 + $0x4] sm:$0xf]
        %v3186 = vld [vmem:[%s1940 + $0x8] sm:$0xf]
        %v3187 = vld [vmem:[%s1940 + $0xc] sm:$0xf]
        %v3188 = vld [vmem:[%s1940 + $0x10] sm:$0xf]
        %v3189 = vld [vmem:[%s1940 + $0x14] sm:$0xf]
        %v3190 = vld [vmem:[%s1940 + $0x18] sm:$0xf]
        %v3191 = vld [vmem:[%s1940 + $0x1c] sm:$0xf]
        %v3192 = vld [vmem:[%s1940 + $0x20] sm:$0xf]
        %v3193 = vld [vmem:[%s1940 + $0x24] sm:$0xf]
        %v3194 = vld [vmem:[%s1940 + $0x28] sm:$0xf]
        %v3195 = vld [vmem:[%s1940 + $0x2c] sm:$0xf]
        %v3196 = vld [vmem:[%s1940 + $0x30] sm:$0xf]
        %v3197 = vld [vmem:[%s1940 + $0x34] sm:$0xf]
        %v3198 = vld [vmem:[%s1940 + $0x38] sm:$0xf]
        %v3199 = vld [vmem:[%s1940 + $0x3c] sm:$0xf]
        %v3216 = vunpack.c.l.b16 %v3184
        %v3217 = vunpack.c.l.b16 %v3185
        %v3218 = vunpack.c.l.b16 %v3186
        %v3219 = vunpack.c.l.b16 %v3187
        %v3220 = vunpack.c.l.b16 %v3188
        %v3221 = vunpack.c.l.b16 %v3189
        %v3222 = vunpack.c.l.b16 %v3190
        %v3223 = vunpack.c.l.b16 %v3191
        %v3224 = vunpack.c.l.b16 %v3192
        %v3225 = vunpack.c.l.b16 %v3193
        %v3226 = vunpack.c.l.b16 %v3194
        %v3227 = vunpack.c.l.b16 %v3195
        %v3228 = vunpack.c.l.b16 %v3196
        %v3229 = vunpack.c.l.b16 %v3197
        %v3230 = vunpack.c.l.b16 %v3198
        %v3231 = vunpack.c.l.b16 %v3199
        %v3232 = vpack.c.b16 %v3217, %v3216
        %v3233 = vpack.c.b16 %v3219, %v3218
        %v3234 = vpack.c.b16 %v3221, %v3220
        %v3235 = vpack.c.b16 %v3223, %v3222
        %v3236 = vpack.c.b16 %v3225, %v3224
        %v3237 = vpack.c.b16 %v3227, %v3226
        %v3238 = vpack.c.b16 %v3229, %v3228
        %v3239 = vpack.c.b16 %v3231, %v3230
        %3248 = vmatpush.bf16.msra.mxu0 %v3239
        %3249 = vmatpush.bf16.msra.mxu0 %v3238
        %3250 = vmatpush.bf16.msra.mxu0 %v3237
        %3251 = vmatpush.bf16.msra.mxu0 %v3236
        %3252 = vmatpush.bf16.msra.mxu0 %v3235
        %3253 = vmatpush.bf16.msra.mxu0 %v3234
        %3254 = vmatpush.bf16.msra.mxu0 %v3233
        %3255 = vmatpush.bf16.msra.mxu0 %v3232
        %3256 = vmatmul.bf16.gmra.mxu0 %v2758
        %v3257 = vpop.f32.mrf.mxu0
        %v3258 = vadd.f32 0.0, %v3257
        %v3259 = vpop.f32.mrf.mxu0
        %3260 = vdwg.mxu0
        %v3261 = vadd.f32 %v3097, %v3258
        %v3262 = vld [vmem:[%s12] sm:$0x1]
        %v3264 = vperm.slane %v3262, 0
        %v3266 = vadd.f32 %v3183, %v3264
        %v3267 = vtanh.pop %v3266
        %v3268 = vadd.f32 %v2757, %v3267
        %v3269 = vld [vmem:[%s14] sm:$0x1]
        %v3271 = vperm.slane %v3269, 0
        %v3273 = vadd.f32 %v3261, %v3271
        %v3274 = vtanh.pop %v3273
        %v3275 = vadd.f32 %v3268, %v3274
        %v3276 = vld [vmem:[#allocation4] sm:$0xff]
        %v3277 = vadd.f32 %v3276, %v3275
        %3278 = vst [vmem:[#allocation4] sm:$0xff] %v3277
        %v3279 = vpack.c.bf16 %v3275, %v3275
        %3280 = vst [vmem:[#allocation3 + $0x4] sm:$0xf] %v3279
        %v3281 = vld [vmem:[#allocation4] sm:$0xff]
        %v3282 = vpack.c.bf16 %v3281, %v3281
        %v3283 = vld [vmem:[#allocation19] sm:$0xf]
        %v3284 = vld [vmem:[#allocation19 + $0x4] sm:$0xf]
        %v3285 = vld [vmem:[#allocation19 + $0x8] sm:$0xf]
        %v3286 = vld [vmem:[#allocation19 + $0xc] sm:$0xf]
        %v3287 = vld [vmem:[#allocation19 + $0x10] sm:$0xf]
        %v3288 = vld [vmem:[#allocation19 + $0x14] sm:$0xf]
        %v3289 = vld [vmem:[#allocation19 + $0x18] sm:$0xf]
        %v3290 = vld [vmem:[#allocation19 + $0x1c] sm:$0xf]
        %v3291 = vld [vmem:[#allocation19 + $0x20] sm:$0xf]
        %v3292 = vld [vmem:[#allocation19 + $0x24] sm:$0xf]
        %v3293 = vld [vmem:[#allocation19 + $0x28] sm:$0xf]
        %v3294 = vld [vmem:[#allocation19 + $0x2c] sm:$0xf]
        %v3295 = vld [vmem:[#allocation19 + $0x30] sm:$0xf]
        %v3296 = vld [vmem:[#allocation19 + $0x34] sm:$0xf]
        %v3297 = vld [vmem:[#allocation19 + $0x38] sm:$0xf]
        %v3298 = vld [vmem:[#allocation19 + $0x3c] sm:$0xf]
        %v3299 = vld [vmem:[%s16] sm:$0x1]
        %v3301 = vperm.slane %v3299, 0
        %v3319 = vunpack.c.l.b16 %v3283
        %v3320 = vunpack.c.l.b16 %v3284
        %v3321 = vunpack.c.l.b16 %v3285
        %v3322 = vunpack.c.l.b16 %v3286
        %v3323 = vunpack.c.l.b16 %v3287
        %v3324 = vunpack.c.l.b16 %v3288
        %v3325 = vunpack.c.l.b16 %v3289
        %v3326 = vunpack.c.l.b16 %v3290
        %v3327 = vunpack.c.l.b16 %v3291
        %v3328 = vunpack.c.l.b16 %v3292
        %v3329 = vunpack.c.l.b16 %v3293
        %v3330 = vunpack.c.l.b16 %v3294
        %v3331 = vunpack.c.l.b16 %v3295
        %v3332 = vunpack.c.l.b16 %v3296
        %v3333 = vunpack.c.l.b16 %v3297
        %v3334 = vunpack.c.l.b16 %v3298
        %v3335 = vpack.c.b16 %v3320, %v3319
        %v3336 = vpack.c.b16 %v3322, %v3321
        %v3337 = vpack.c.b16 %v3324, %v3323
        %v3338 = vpack.c.b16 %v3326, %v3325
        %v3339 = vpack.c.b16 %v3328, %v3327
        %v3340 = vpack.c.b16 %v3330, %v3329
        %v3341 = vpack.c.b16 %v3332, %v3331
        %v3342 = vpack.c.b16 %v3334, %v3333
        %3351 = vmatpush.bf16.msra.mxu0 %v3342
        %3352 = vmatpush.bf16.msra.mxu0 %v3341
        %3353 = vmatpush.bf16.msra.mxu0 %v3340
        %3354 = vmatpush.bf16.msra.mxu0 %v3339
        %3355 = vmatpush.bf16.msra.mxu0 %v3338
        %3356 = vmatpush.bf16.msra.mxu0 %v3337
        %3357 = vmatpush.bf16.msra.mxu0 %v3336
        %3358 = vmatpush.bf16.msra.mxu0 %v3335
        %3359 = vmatmul.bf16.gmra.mxu0 %v3282
        %v3360 = vpop.f32.mrf.mxu0
        %v3361 = vadd.f32 %v3301, %v3360
        %v3362 = vpop.f32.mrf.mxu0
        %3363 = vdwg.mxu0
        %3364 = vst [vmem:[%s697] sm:$0xff] %v3361
        %s3365 = sand.u32 %s408, 1
        %s3366 = scalar_lea.sflag [#allocation7], %s3365
        %s3367 = sand.u32 %s408, 1
        %s3368 = smul.addr %s3367, 8
        %s3369 = scalar_lea.vmem [#allocation20], %s3368
        // Predicated region
        $region125: #{tpu_custom_call.1} parent=87 // pred_check
          %p3370 = pneg %p418
        $region126: #{tpu_custom_call.1} parent=87 // pred_check_branch
          %3372 = sbr.rel (%p3370) target = $region128
        $region127: #{tpu_custom_call.1} parent=87 // pred_region
          %3374 = vsyncadd %s3366, 0
          %s3375 = smul.addr %s38, 8
          %s3376 = scalar_lea.hbm %s17, %s3375
          %s3378 = sshll.u32 %s3369, 4
          %s3379 = int_to_ptr.vmem [resolvable:$true] %s3378
          %s3380 = sshll.u32 %s3376, 4
          %s3381 = int_to_ptr.hbm [resolvable:$true] %s3380
          %3383 = dma.vmem_to_hbm [thread:$0]  %s3379, 128, %s3381, %s3366
        $region128: #{tpu_custom_call.1} parent=87 // pred_fallthru
          _
      $region88: #{tpu_custom_call.1} parent=5 // pred_fallthru
        _
      %p3384 = scmp.le.s32.totalorder 2, %s33
      // Predicated region
      $region129: #{tpu_custom_call.1} parent=5 // pred_check
        %p3385 = pneg %p3384
      $region130: #{tpu_custom_call.1} parent=5 // pred_check_branch
        %3387 = sbr.rel (%p3385) target = $region132
      $region131: #{tpu_custom_call.1} parent=5 // pred_region
        %s3388 = ssub.s32 %s33, 2
        // Predicated region
        $region133: #{tpu_custom_call.1} parent=131 // pred_check
          %p3389 = pneg %p424
        $region134: #{tpu_custom_call.1} parent=131 // pred_check_branch
          %3391 = sbr.rel (%p3389) target = $region136
        $region135: #{tpu_custom_call.1} parent=131 // pred_region
          %s3392 = sand.u32 %s409, 1
          %s3393 = scalar_lea.sflag [#allocation7], %s3392
          %s3394 = sand.u32 %s409, 1
          %s3395 = smul.addr %s3394, 8
          %s3396 = scalar_lea.vmem [#allocation20], %s3395
          %3398 = dma.done %s3393, 128
        $region136: #{tpu_custom_call.1} parent=131 // pred_fallthru
          _
      $region132: #{tpu_custom_call.1} parent=5 // pred_fallthru
        _
    $region6: #{tpu_custom_call.1} parent=1 // loop_footer
      %s37 = sadd.s32 1, %s33
    $region7: #{tpu_custom_call.1} parent=1 // loop_footer_branch
      %32 = sbr.rel target = $region3
    $region8: #{tpu_custom_call.1} parent=1 // loop_exit
      _
    %3399 = vsyncpa [#allocation6], 1
    %s3400 = scalar_lea.sflag [#allocation6], 1
    %3401 = vsyncpa %s3400, 1
    %3402 = vsyncpa [#allocation9], 1
    %3403 = vsyncpa [#allocation12], 1
    %3404 = vsyncpa [#allocation15], 1
    %3405 = vsyncpa [#allocation18], 1
    %3406 = vsyncpa [#allocation7], 1
    %s3407 = scalar_lea.sflag [#allocation7], 1
    %3408 = vsyncpa %s3407, 1

</llo_original>
